<compile_context>
chip_gen: v5e
topology: v5e:2x2
jax: 0.10.0
libtpu: 0.0.40
codegen_flags: <defaults>
</compile_context>

<pallas_src>
import functools

import jax
import jax.numpy as jnp
from jax.experimental import pallas as pl
from jax.experimental.pallas import tpu as pltpu

N_GROUPS = 32
EPS = 1e-5


# ----------------------------------------------------------------------------
# In-kernel helpers
# ----------------------------------------------------------------------------
def _recip(x):
    # pl.reciprocal(approx=True) uses the EUP slot; fall back to a VPU divide
    # on older JAX versions.
    if hasattr(pl, "reciprocal"):
        return pl.reciprocal(x, approx=True)
    return 1.0 / x


def _gn_sigmoid(a, gamma, beta, red, bcast, inv_count, eps):
    """GroupNorm (centered two-pass variance) + Sigmoid on an (HW, C) tile.

    red:   (C, G) 0/1 matrix summing channels into their group.
    bcast: (G, C) 0/1 matrix broadcasting per-group stats back to channels.
    """
    s = jnp.sum(a, axis=0, keepdims=True)                                 # (1, C)
    mean_g = jnp.dot(s, red, preferred_element_type=jnp.float32) * inv_count
    mean = jnp.dot(mean_g, bcast, preferred_element_type=jnp.float32)     # (1, C)
    ac = a - mean
    ss = jnp.sum(ac * ac, axis=0, keepdims=True)                          # (1, C)
    var_g = jnp.dot(ss, red, preferred_element_type=jnp.float32) * inv_count
    inv_std = jnp.dot(jax.lax.rsqrt(var_g + eps), bcast,
                      preferred_element_type=jnp.float32)                 # (1, C)
    return jax.nn.sigmoid(ac * inv_std * gamma + beta)


# ----------------------------------------------------------------------------
# Fused kernel: ResBlock + AttnBlock for one batch element
# ----------------------------------------------------------------------------
def fused_res_attn_kernel(
        x_ref, temb_ref, mask_l_ref, mask_r_ref,
        g1_ref, be1_ref, red1_ref, bc1_ref, w1_ref, b1_ref,
        g2_ref, be2_ref, red2_ref, bc2_ref, w2_ref, b2_ref,
        wsc_ref, bsc_ref, wqkv_ref, bqkv_ref, wo_ref, bo_ref,
        o_ref, *, H, W, Cin, Cout, pad, inv1, inv2, eps, scale):
    HW = H * W
    x = x_ref[0]                         # (HW, Cin) f32
    mask_l = mask_l_ref[...]             # (HW, 1): 1 where w-1 >= 0
    mask_r = mask_r_ref[...]             # (HW, 1): 1 where w+1 <  W

    def conv3x3(a, w_ref_, c_in):
        # a: (HW, c_in) f32, w_ref_: (9, c_in, Cout) bf16 -> (HW, Cout) f32.
        # 3x3 conv as 9 shifted accumulating matmuls on a zero-padded copy.
        zpad = jnp.zeros((pad, c_in), jnp.float32)
        ap = jnp.concatenate([zpad, a, zpad], axis=0)          # (HW + 2*pad, c_in)
        acc = jnp.zeros((HW, Cout), jnp.float32)
        for kh in range(3):
            for kw in range(3):
                d = (kh - 1) * W + (kw - 1)
                sh = ap[pad + d: pad + d + HW, :]              # row r -> a[r + d]
                if kw == 0:
                    sh = sh * mask_l                           # w-1 out of range
                elif kw == 2:
                    sh = sh * mask_r                           # w+1 out of range
                acc = acc + jnp.dot(sh.astype(jnp.bfloat16),
                                    w_ref_[kh * 3 + kw],
                                    preferred_element_type=jnp.float32)
        return acc

    # ---- ResBlock ----
    h = _gn_sigmoid(x, g1_ref[...], be1_ref[...],
                    red1_ref[...], bc1_ref[...], inv1, eps)             # norm1+act1
    h = conv3x3(h, w1_ref, Cin) + b1_ref[...] + temb_ref[0]             # conv1+temb
    h = _gn_sigmoid(h, g2_ref[...], be2_ref[...],
                    red2_ref[...], bc2_ref[...], inv2, eps)             # norm2+act2
    # TODO(synk): Dropout(p=0.1) == identity (eval mode).
    h = conv3x3(h, w2_ref, Cout) + b2_ref[...]                          # conv2
    sc = jnp.dot(x.astype(jnp.bfloat16), wsc_ref[...],
                 preferred_element_type=jnp.float32) + bsc_ref[...]     # 1x1 shortcut
    res = sc + h                                                        # (HW, Cout)

    # ---- AttnBlock (n_heads=1; its GroupNorm is unused in the forward) ----
    resb = res.astype(jnp.bfloat16)
    qkv = jnp.dot(resb, wqkv_ref[...],
                  preferred_element_type=jnp.float32) + bqkv_ref[...]   # (HW, 3C)
    q = qkv[:, 0:Cout].astype(jnp.bfloat16)
    k = qkv[:, Cout:2 * Cout].astype(jnp.bfloat16)
    v = qkv[:, 2 * Cout:3 * Cout].astype(jnp.bfloat16)
    s = jax.lax.dot_general(q, k, (((1,), (1,)), ((), ())),
                            preferred_element_type=jnp.float32) * scale  # (HW, HW)
    s = s - jnp.max(s, axis=-1, keepdims=True)
    e = jnp.exp(s)
    p = e * _recip(jnp.sum(e, axis=-1, keepdims=True))
    a = jnp.dot(p.astype(jnp.bfloat16), v, preferred_element_type=jnp.float32)
    out = jnp.dot(a.astype(jnp.bfloat16), wo_ref[...],
                  preferred_element_type=jnp.float32) + bo_ref[...]
    o_ref[0] = out + res


# ----------------------------------------------------------------------------
# Wrapper
# ----------------------------------------------------------------------------
def _compiler_params():
    cls = getattr(pltpu, "CompilerParams", None)
    if cls is None:
        cls = getattr(pltpu, "TPUCompilerParams", None)
    if cls is None:
        return None
    try:
        return cls(dimension_semantics=("parallel",))
    except TypeError:
        return None


def res_attn_down_forward(x_nchw, t, params, n_groups=N_GROUPS):
    B, Cin, H, W = x_nchw.shape
    Cout = params["w1"].shape[0]
    HW = H * W
    G = n_groups
    pad = ((W + 1 + 7) // 8) * 8   # zero-pad rows (>= W+1, sublane aligned)

    x_flat = jnp.transpose(x_nchw, (0, 2, 3, 1)).reshape(B, HW, Cin)
    x_flat = x_flat.astype(jnp.float32)

    # Time-embedding Linear is a tiny (B,Tc)@(Tc,Cout): plain XLA, fused as a
    # per-batch bias row inside the kernel.
    temb = (t @ params["wt"].T + params["bt"]).astype(jnp.float32)
    temb = temb.reshape(B, 1, Cout)

    # Conv weights -> (9, Cin, Cout), tap-major (kh, kw), bf16 for the MXU.
    w1 = jnp.transpose(params["w1"], (2, 3, 1, 0)).reshape(9, Cin, Cout)
    w1 = w1.astype(jnp.bfloat16)
    w2 = jnp.transpose(params["w2"], (2, 3, 1, 0)).reshape(9, Cout, Cout)
    w2 = w2.astype(jnp.bfloat16)
    if Cin == Cout:
        # ResBlock uses Identity shortcut when in_channels == out_channels.
        wsc = jnp.eye(Cin, dtype=jnp.bfloat16)
        bsc = jnp.zeros((Cout,), jnp.float32)
    else:
        wsc = params["wsc"][:, :, 0, 0].T.astype(jnp.bfloat16)          # (Cin, Cout)
        bsc = params["bsc"]
    wqkv = params["wp"].T.astype(jnp.bfloat16)                          # (Cout, 3C)
    wo = params["wo"].T.astype(jnp.bfloat16)                            # (Cout, Cout)

    # (C,G) reduce / (G,C) broadcast matrices for GroupNorm statistics.
    def group_mats(C):
        grp = jnp.arange(C) // (C // G)
        red = (grp[:, None] == jnp.arange(G)[None, :]).astype(jnp.float32)
        return red, red.T
    red1, bc1 = group_mats(Cin)
    red2, bc2 = group_mats(Cout)

    # Conv horizontal-boundary masks (valid w-1 / w+1), precomputed once.
    col = (jnp.arange(HW) % W).reshape(HW, 1)
    mask_l = (col >= 1).astype(jnp.float32)
    mask_r = (col <= W - 2).astype(jnp.float32)

    def row2(v):
        return v.reshape(1, -1).astype(jnp.float32)

    def full_spec(shape):
        n = len(shape)
        return pl.BlockSpec(shape, lambda i, n=n: (0,) * n)

    kern = functools.partial(
        fused_res_attn_kernel, H=H, W=W, Cin=Cin, Cout=Cout, pad=pad,
        inv1=1.0 / (HW * (Cin // G)), inv2=1.0 / (HW * (Cout // G)),
        eps=EPS, scale=float(Cout) ** -0.5)

    out = pl.pallas_call(
        kern,
        out_shape=jax.ShapeDtypeStruct((B, HW, Cout), jnp.float32),
        grid=(B,),
        in_specs=[
            pl.BlockSpec((1, HW, Cin), lambda i: (i, 0, 0)),   # x
            pl.BlockSpec((1, 1, Cout), lambda i: (i, 0, 0)),   # temb
            full_spec((HW, 1)), full_spec((HW, 1)),            # mask_l, mask_r
            full_spec((1, Cin)), full_spec((1, Cin)),          # g1, beta1
            full_spec((Cin, G)), full_spec((G, Cin)),          # red1, bc1
            full_spec((9, Cin, Cout)), full_spec((1, Cout)),   # w1, b1
            full_spec((1, Cout)), full_spec((1, Cout)),        # g2, beta2
            full_spec((Cout, G)), full_spec((G, Cout)),        # red2, bc2
            full_spec((9, Cout, Cout)), full_spec((1, Cout)),  # w2, b2
            full_spec((Cin, Cout)), full_spec((1, Cout)),      # wsc, bsc
            full_spec((Cout, 3 * Cout)), full_spec((1, 3 * Cout)),  # wqkv, bqkv
            full_spec((Cout, Cout)), full_spec((1, Cout)),     # wo, bo
        ],
        out_specs=pl.BlockSpec((1, HW, Cout), lambda i: (i, 0, 0)),
        compiler_params=_compiler_params(),
    )(x_flat, temb, mask_l, mask_r,
      row2(params["g1"]), row2(params["beta1"]), red1, bc1, w1, row2(params["b1"]),
      row2(params["g2"]), row2(params["beta2"]), red2, bc2, w2, row2(params["b2"]),
      wsc, row2(bsc),
      wqkv, row2(params["bp"]), wo, row2(params["bo"]))

    return jnp.transpose(out.reshape(B, H, W, Cout), (0, 3, 1, 2))


# ----------------------------------------------------------------------------
# Pure-JAX reference (f32) for correctness check
# ----------------------------------------------------------------------------
def ref_forward(x, t, p):
    def gn(h, gamma, beta, G=N_GROUPS):
        B, C, H, W = h.shape
        hg = h.reshape(B, G, C // G, H * W)
        mean = hg.mean(axis=(2, 3), keepdims=True)
        var = ((hg - mean) ** 2).mean(axis=(2, 3), keepdims=True)
        hn = ((hg - mean) / jnp.sqrt(var + EPS)).reshape(B, C, H, W)
        return hn * gamma[None, :, None, None] + beta[None, :, None, None]

    def conv(h, w, b):
        y = jax.lax.conv_general_dilated(
            h, w, (1, 1), "SAME", dimension_numbers=("NCHW", "OIHW", "NCHW"))
        return y + b[None, :, None, None]

    h = jax.nn.sigmoid(gn(x, p["g1"], p["beta1"]))
    h = conv(h, p["w1"], p["b1"])
    temb = t @ p["wt"].T + p["bt"]
    h = h + temb[:, :, None, None]
    h = jax.nn.sigmoid(gn(h, p["g2"], p["beta2"]))
    h = conv(h, p["w2"], p["b2"])
    h = conv(x, p["wsc"], p["bsc"]) + h

    B, C, H, W = h.shape
    xr = h.reshape(B, C, H * W).transpose(0, 2, 1)
    qkv = xr @ p["wp"].T + p["bp"]
    q, k, v = qkv[..., :C], qkv[..., C:2 * C], qkv[..., 2 * C:]
    s = jnp.einsum("bid,bjd->bij", q, k) * (float(C) ** -0.5)
    pm = jax.nn.softmax(s, axis=2)
    a = jnp.einsum("bij,bjd->bid", pm, v)
    out = a @ p["wo"].T + p["bo"] + xr
    return out.transpose(0, 2, 1).reshape(B, C, H, W)


# ----------------------------------------------------------------------------
# Main
# ----------------------------------------------------------------------------
if __name__ == "__main__":
    B, Cin, Cout, H, W, Tc = 2, 32, 64, 8, 8, 16

    key = jax.random.PRNGKey(0)
    ks = jax.random.split(key, 18)

    def nrm(k, shape, s=0.1):
        return s * jax.random.normal(k, shape, dtype=jnp.float32)

    params = {
        "g1": 1.0 + nrm(ks[0], (Cin,)),
        "beta1": nrm(ks[1], (Cin,)),
        "w1": nrm(ks[2], (Cout, Cin, 3, 3)),
        "b1": nrm(ks[3], (Cout,)),
        "wt": nrm(ks[4], (Cout, Tc)),
        "bt": nrm(ks[5], (Cout,)),
        "g2": 1.0 + nrm(ks[6], (Cout,)),
        "beta2": nrm(ks[7], (Cout,)),
        "w2": nrm(ks[8], (Cout, Cout, 3, 3)),
        "b2": nrm(ks[9], (Cout,)),
        "wsc": nrm(ks[10], (Cout, Cin, 1, 1)),
        "bsc": nrm(ks[11], (Cout,)),
        "wp": nrm(ks[12], (3 * Cout, Cout)),
        "bp": nrm(ks[13], (3 * Cout,)),
        "wo": nrm(ks[14], (Cout, Cout)),
        "bo": nrm(ks[15], (Cout,)),
    }

    x = jax.random.normal(ks[16], (B, Cin, H, W), dtype=jnp.float32)
    t = jax.random.normal(ks[17], (B, Tc), dtype=jnp.float32)

    out = jax.block_until_ready(res_attn_down_forward(x, t, params))
    ref = jax.block_until_ready(ref_forward(x, t, params))

    assert out.shape == (B, Cout, H, W)
    diff = jnp.abs(out - ref)
    max_diff = float(jnp.max(diff))
    mean_diff = float(jnp.mean(diff))
    ref_scale = float(jnp.max(jnp.abs(ref)))
    # bf16 MXU matmuls with f32 accumulation -> looser tolerance than pure f32;
    # structural bugs (wrong conv tap / mask / GN) give O(0.5+) errors.
    assert max_diff < 0.04 * ref_scale + 0.02, \
        f"max diff {max_diff} (ref scale {ref_scale})"
    assert mean_diff < 0.03, f"mean diff {mean_diff}"

    print("KERNEL_OK")
</pallas_src>

<mosaic_0001>
module attributes {stable_mosaic.version = 11 : i64} {
  func.func @fused_res_attn_kernel(%arg0: i32, %arg1: memref<1x64x32xf32, #tpu.memory_space<vmem>>, %arg2: memref<1x1x64xf32, #tpu.memory_space<vmem>>, %arg3: memref<64x1xf32, #tpu.memory_space<vmem>>, %arg4: memref<64x1xf32, #tpu.memory_space<vmem>>, %arg5: memref<1x32xf32, #tpu.memory_space<vmem>>, %arg6: memref<1x32xf32, #tpu.memory_space<vmem>>, %arg7: memref<32x32xf32, #tpu.memory_space<vmem>>, %arg8: memref<32x32xf32, #tpu.memory_space<vmem>>, %arg9: memref<9x32x64xbf16, #tpu.memory_space<vmem>>, %arg10: memref<1x64xf32, #tpu.memory_space<vmem>>, %arg11: memref<1x64xf32, #tpu.memory_space<vmem>>, %arg12: memref<1x64xf32, #tpu.memory_space<vmem>>, %arg13: memref<64x32xf32, #tpu.memory_space<vmem>>, %arg14: memref<32x64xf32, #tpu.memory_space<vmem>>, %arg15: memref<9x64x64xbf16, #tpu.memory_space<vmem>>, %arg16: memref<1x64xf32, #tpu.memory_space<vmem>>, %arg17: memref<32x64xbf16, #tpu.memory_space<vmem>>, %arg18: memref<1x64xf32, #tpu.memory_space<vmem>>, %arg19: memref<64x192xbf16, #tpu.memory_space<vmem>>, %arg20: memref<1x192xf32, #tpu.memory_space<vmem>>, %arg21: memref<64x64xbf16, #tpu.memory_space<vmem>>, %arg22: memref<1x64xf32, #tpu.memory_space<vmem>>, %arg23: memref<1x64x64xf32, #tpu.memory_space<vmem>>) attributes {dimension_semantics = [#tpu.dimension_semantics<parallel>], iteration_bounds = array<i64: 2>, scalar_prefetch = 0 : i64, scratch_operands = 0 : i64, tpu.core_type = #tpu.core_type<tc>, window_params = [{transform_indices = @transform_0, window_bounds = array<i64: 1, 64, 32>}, {transform_indices = @transform_1, window_bounds = array<i64: 1, 1, 64>}, {pipeline_mode = #tpu.pipeline_mode<synchronous>, transform_indices = @transform_2, window_bounds = array<i64: 64, 1>}, {pipeline_mode = #tpu.pipeline_mode<synchronous>, transform_indices = @transform_3, window_bounds = array<i64: 64, 1>}, {pipeline_mode = #tpu.pipeline_mode<synchronous>, transform_indices = @transform_4, window_bounds = array<i64: 1, 32>}, {pipeline_mode = #tpu.pipeline_mode<synchronous>, transform_indices = @transform_5, window_bounds = array<i64: 1, 32>}, {pipeline_mode = #tpu.pipeline_mode<synchronous>, transform_indices = @transform_6, window_bounds = array<i64: 32, 32>}, {pipeline_mode = #tpu.pipeline_mode<synchronous>, transform_indices = @transform_7, window_bounds = array<i64: 32, 32>}, {pipeline_mode = #tpu.pipeline_mode<synchronous>, transform_indices = @transform_8, window_bounds = array<i64: 9, 32, 64>}, {pipeline_mode = #tpu.pipeline_mode<synchronous>, transform_indices = @transform_9, window_bounds = array<i64: 1, 64>}, {pipeline_mode = #tpu.pipeline_mode<synchronous>, transform_indices = @transform_10, window_bounds = array<i64: 1, 64>}, {pipeline_mode = #tpu.pipeline_mode<synchronous>, transform_indices = @transform_11, window_bounds = array<i64: 1, 64>}, {pipeline_mode = #tpu.pipeline_mode<synchronous>, transform_indices = @transform_12, window_bounds = array<i64: 64, 32>}, {pipeline_mode = #tpu.pipeline_mode<synchronous>, transform_indices = @transform_13, window_bounds = array<i64: 32, 64>}, {pipeline_mode = #tpu.pipeline_mode<synchronous>, transform_indices = @transform_14, window_bounds = array<i64: 9, 64, 64>}, {pipeline_mode = #tpu.pipeline_mode<synchronous>, transform_indices = @transform_15, window_bounds = array<i64: 1, 64>}, {pipeline_mode = #tpu.pipeline_mode<synchronous>, transform_indices = @transform_16, window_bounds = array<i64: 32, 64>}, {pipeline_mode = #tpu.pipeline_mode<synchronous>, transform_indices = @transform_17, window_bounds = array<i64: 1, 64>}, {pipeline_mode = #tpu.pipeline_mode<synchronous>, transform_indices = @transform_18, window_bounds = array<i64: 64, 192>}, {pipeline_mode = #tpu.pipeline_mode<synchronous>, transform_indices = @transform_19, window_bounds = array<i64: 1, 192>}, {pipeline_mode = #tpu.pipeline_mode<synchronous>, transform_indices = @transform_20, window_bounds = array<i64: 64, 64>}, {pipeline_mode = #tpu.pipeline_mode<synchronous>, transform_indices = @transform_21, window_bounds = array<i64: 1, 64>}, {transform_indices = @transform_22, window_bounds = array<i64: 1, 64, 64>}]} {
    %c0 = arith.constant 0 : index
    %c0_0 = arith.constant 0 : index
    %c0_1 = arith.constant 0 : index
    %0 = vector.load %arg1[%c0, %c0_0, %c0_1] : memref<1x64x32xf32, #tpu.memory_space<vmem>>, vector<1x64x32xf32>
    %1 = vector.shape_cast %0 : vector<1x64x32xf32> to vector<64x32xf32>
    %c0_2 = arith.constant 0 : index
    %c0_3 = arith.constant 0 : index
    %2 = vector.load %arg3[%c0_2, %c0_3] : memref<64x1xf32, #tpu.memory_space<vmem>>, vector<64x1xf32>
    %c0_4 = arith.constant 0 : index
    %c0_5 = arith.constant 0 : index
    %3 = vector.load %arg4[%c0_4, %c0_5] : memref<64x1xf32, #tpu.memory_space<vmem>>, vector<64x1xf32>
    %c0_6 = arith.constant 0 : index
    %c0_7 = arith.constant 0 : index
    %4 = vector.load %arg5[%c0_6, %c0_7] : memref<1x32xf32, #tpu.memory_space<vmem>>, vector<1x32xf32>
    %c0_8 = arith.constant 0 : index
    %c0_9 = arith.constant 0 : index
    %5 = vector.load %arg6[%c0_8, %c0_9] : memref<1x32xf32, #tpu.memory_space<vmem>>, vector<1x32xf32>
    %c0_10 = arith.constant 0 : index
    %c0_11 = arith.constant 0 : index
    %6 = vector.load %arg7[%c0_10, %c0_11] : memref<32x32xf32, #tpu.memory_space<vmem>>, vector<32x32xf32>
    %c0_12 = arith.constant 0 : index
    %c0_13 = arith.constant 0 : index
    %7 = vector.load %arg8[%c0_12, %c0_13] : memref<32x32xf32, #tpu.memory_space<vmem>>, vector<32x32xf32>
    %cst = arith.constant dense<0.000000e+00> : vector<32xf32>
    %8 = vector.multi_reduction <add>, %1, %cst [0] : vector<64x32xf32> to vector<32xf32>
    %9 = vector.shape_cast %8 : vector<32xf32> to vector<1x32xf32>
    %cst_14 = arith.constant dense<0.000000e+00> : vector<1x32xf32>
    %10 = tpu.matmul %9, %6, %cst_14 {dimension_numbers = #tpu.dot_dimension_numbers<[1], [0], [0], [1], [0, 0, 1, 1], [], []>} : vector<1x32xf32>, vector<32x32xf32>, vector<1x32xf32> -> vector<1x32xf32>
    %cst_15 = arith.constant 1.562500e-02 : f32
    %11 = vector.broadcast %cst_15 : f32 to vector<1x32xf32>
    %12 = arith.mulf %10, %11 : vector<1x32xf32>
    %cst_16 = arith.constant dense<0.000000e+00> : vector<1x32xf32>
    %13 = tpu.matmul %12, %7, %cst_16 {dimension_numbers = #tpu.dot_dimension_numbers<[1], [0], [0], [1], [0, 0, 1, 1], [], []>} : vector<1x32xf32>, vector<32x32xf32>, vector<1x32xf32> -> vector<1x32xf32>
    %14 = vector.broadcast %13 : vector<1x32xf32> to vector<64x32xf32>
    %15 = arith.subf %1, %14 : vector<64x32xf32>
    %16 = arith.mulf %15, %15 : vector<64x32xf32>
    %cst_17 = arith.constant dense<0.000000e+00> : vector<32xf32>
    %17 = vector.multi_reduction <add>, %16, %cst_17 [0] : vector<64x32xf32> to vector<32xf32>
    %18 = vector.shape_cast %17 : vector<32xf32> to vector<1x32xf32>
    %cst_18 = arith.constant dense<0.000000e+00> : vector<1x32xf32>
    %19 = tpu.matmul %18, %6, %cst_18 {dimension_numbers = #tpu.dot_dimension_numbers<[1], [0], [0], [1], [0, 0, 1, 1], [], []>} : vector<1x32xf32>, vector<32x32xf32>, vector<1x32xf32> -> vector<1x32xf32>
    %cst_19 = arith.constant 1.562500e-02 : f32
    %20 = vector.broadcast %cst_19 : f32 to vector<1x32xf32>
    %21 = arith.mulf %19, %20 : vector<1x32xf32>
    %cst_20 = arith.constant 9.99999974E-6 : f32
    %22 = vector.broadcast %cst_20 : f32 to vector<1x32xf32>
    %23 = arith.addf %21, %22 : vector<1x32xf32>
    %24 = math.rsqrt %23 : vector<1x32xf32>
    %cst_21 = arith.constant dense<0.000000e+00> : vector<1x32xf32>
    %25 = tpu.matmul %24, %7, %cst_21 {dimension_numbers = #tpu.dot_dimension_numbers<[1], [0], [0], [1], [0, 0, 1, 1], [], []>} : vector<1x32xf32>, vector<32x32xf32>, vector<1x32xf32> -> vector<1x32xf32>
    %26 = vector.broadcast %25 : vector<1x32xf32> to vector<64x32xf32>
    %27 = arith.mulf %15, %26 : vector<64x32xf32>
    %28 = vector.broadcast %4 : vector<1x32xf32> to vector<64x32xf32>
    %29 = arith.mulf %27, %28 : vector<64x32xf32>
    %30 = vector.broadcast %5 : vector<1x32xf32> to vector<64x32xf32>
    %31 = arith.addf %29, %30 : vector<64x32xf32>
    %32 = arith.negf %31 : vector<64x32xf32>
    %33 = math.exp %32 : vector<64x32xf32>
    %cst_22 = arith.constant 1.000000e+00 : f32
    %34 = vector.broadcast %cst_22 : f32 to vector<64x32xf32>
    %35 = arith.addf %34, %33 : vector<64x32xf32>
    %36 = arith.divf %34, %35 : vector<64x32xf32>
    %cst_23 = arith.constant 0.000000e+00 : f32
    %37 = vector.broadcast %cst_23 : f32 to vector<16x32xf32>
    %38 = tpu.concatenate %37, %36, %37 in 0 : vector<16x32xf32>, vector<64x32xf32>, vector<16x32xf32> -> vector<96x32xf32>
    %cst_24 = arith.constant 0.000000e+00 : f32
    %39 = vector.broadcast %cst_24 : f32 to vector<64x64xf32>
    %40 = vector.extract_strided_slice %38 {offsets = [7, 0], sizes = [64, 32], strides = [1, 1]} : vector<96x32xf32> to vector<64x32xf32>
    %41 = vector.broadcast %2 : vector<64x1xf32> to vector<64x32xf32>
    %42 = arith.mulf %40, %41 : vector<64x32xf32>
    %43 = arith.truncf %42 : vector<64x32xf32> to vector<64x32xbf16>
    %c0_25 = arith.constant 0 : index
    %c0_26 = arith.constant 0 : index
    %c0_27 = arith.constant 0 : index
    %44 = vector.load %arg9[%c0_25, %c0_26, %c0_27] : memref<9x32x64xbf16, #tpu.memory_space<vmem>>, vector<1x32x64xbf16>
    %45 = vector.shape_cast %44 : vector<1x32x64xbf16> to vector<32x64xbf16>
    %cst_28 = arith.constant dense<0.000000e+00> : vector<64x64xf32>
    %46 = tpu.matmul %43, %45, %cst_28 {dimension_numbers = #tpu.dot_dimension_numbers<[1], [0], [0], [1], [0, 0, 1, 1], [], []>} : vector<64x32xbf16>, vector<32x64xbf16>, vector<64x64xf32> -> vector<64x64xf32>
    %47 = arith.addf %39, %46 : vector<64x64xf32>
    %48 = vector.extract_strided_slice %38 {offsets = [8, 0], sizes = [64, 32], strides = [1, 1]} : vector<96x32xf32> to vector<64x32xf32>
    %49 = arith.truncf %48 : vector<64x32xf32> to vector<64x32xbf16>
    %c1 = arith.constant 1 : index
    %c0_29 = arith.constant 0 : index
    %c0_30 = arith.constant 0 : index
    %50 = vector.load %arg9[%c1, %c0_29, %c0_30] : memref<9x32x64xbf16, #tpu.memory_space<vmem>>, vector<1x32x64xbf16>
    %51 = vector.shape_cast %50 : vector<1x32x64xbf16> to vector<32x64xbf16>
    %cst_31 = arith.constant dense<0.000000e+00> : vector<64x64xf32>
    %52 = tpu.matmul %49, %51, %cst_31 {dimension_numbers = #tpu.dot_dimension_numbers<[1], [0], [0], [1], [0, 0, 1, 1], [], []>} : vector<64x32xbf16>, vector<32x64xbf16>, vector<64x64xf32> -> vector<64x64xf32>
    %53 = arith.addf %47, %52 : vector<64x64xf32>
    %54 = vector.extract_strided_slice %38 {offsets = [9, 0], sizes = [64, 32], strides = [1, 1]} : vector<96x32xf32> to vector<64x32xf32>
    %55 = vector.broadcast %3 : vector<64x1xf32> to vector<64x32xf32>
    %56 = arith.mulf %54, %55 : vector<64x32xf32>
    %57 = arith.truncf %56 : vector<64x32xf32> to vector<64x32xbf16>
    %c2 = arith.constant 2 : index
    %c0_32 = arith.constant 0 : index
    %c0_33 = arith.constant 0 : index
    %58 = vector.load %arg9[%c2, %c0_32, %c0_33] : memref<9x32x64xbf16, #tpu.memory_space<vmem>>, vector<1x32x64xbf16>
    %59 = vector.shape_cast %58 : vector<1x32x64xbf16> to vector<32x64xbf16>
    %cst_34 = arith.constant dense<0.000000e+00> : vector<64x64xf32>
    %60 = tpu.matmul %57, %59, %cst_34 {dimension_numbers = #tpu.dot_dimension_numbers<[1], [0], [0], [1], [0, 0, 1, 1], [], []>} : vector<64x32xbf16>, vector<32x64xbf16>, vector<64x64xf32> -> vector<64x64xf32>
    %61 = arith.addf %53, %60 : vector<64x64xf32>
    %62 = vector.extract_strided_slice %38 {offsets = [15, 0], sizes = [64, 32], strides = [1, 1]} : vector<96x32xf32> to vector<64x32xf32>
    %63 = vector.broadcast %2 : vector<64x1xf32> to vector<64x32xf32>
    %64 = arith.mulf %62, %63 : vector<64x32xf32>
    %65 = arith.truncf %64 : vector<64x32xf32> to vector<64x32xbf16>
    %c3 = arith.constant 3 : index
    %c0_35 = arith.constant 0 : index
    %c0_36 = arith.constant 0 : index
    %66 = vector.load %arg9[%c3, %c0_35, %c0_36] : memref<9x32x64xbf16, #tpu.memory_space<vmem>>, vector<1x32x64xbf16>
    %67 = vector.shape_cast %66 : vector<1x32x64xbf16> to vector<32x64xbf16>
    %cst_37 = arith.constant dense<0.000000e+00> : vector<64x64xf32>
    %68 = tpu.matmul %65, %67, %cst_37 {dimension_numbers = #tpu.dot_dimension_numbers<[1], [0], [0], [1], [0, 0, 1, 1], [], []>} : vector<64x32xbf16>, vector<32x64xbf16>, vector<64x64xf32> -> vector<64x64xf32>
    %69 = arith.addf %61, %68 : vector<64x64xf32>
    %70 = vector.extract_strided_slice %38 {offsets = [16, 0], sizes = [64, 32], strides = [1, 1]} : vector<96x32xf32> to vector<64x32xf32>
    %71 = arith.truncf %70 : vector<64x32xf32> to vector<64x32xbf16>
    %c4 = arith.constant 4 : index
    %c0_38 = arith.constant 0 : index
    %c0_39 = arith.constant 0 : index
    %72 = vector.load %arg9[%c4, %c0_38, %c0_39] : memref<9x32x64xbf16, #tpu.memory_space<vmem>>, vector<1x32x64xbf16>
    %73 = vector.shape_cast %72 : vector<1x32x64xbf16> to vector<32x64xbf16>
    %cst_40 = arith.constant dense<0.000000e+00> : vector<64x64xf32>
    %74 = tpu.matmul %71, %73, %cst_40 {dimension_numbers = #tpu.dot_dimension_numbers<[1], [0], [0], [1], [0, 0, 1, 1], [], []>} : vector<64x32xbf16>, vector<32x64xbf16>, vector<64x64xf32> -> vector<64x64xf32>
    %75 = arith.addf %69, %74 : vector<64x64xf32>
    %76 = vector.extract_strided_slice %38 {offsets = [17, 0], sizes = [64, 32], strides = [1, 1]} : vector<96x32xf32> to vector<64x32xf32>
    %77 = vector.broadcast %3 : vector<64x1xf32> to vector<64x32xf32>
    %78 = arith.mulf %76, %77 : vector<64x32xf32>
    %79 = arith.truncf %78 : vector<64x32xf32> to vector<64x32xbf16>
    %c5 = arith.constant 5 : index
    %c0_41 = arith.constant 0 : index
    %c0_42 = arith.constant 0 : index
    %80 = vector.load %arg9[%c5, %c0_41, %c0_42] : memref<9x32x64xbf16, #tpu.memory_space<vmem>>, vector<1x32x64xbf16>
    %81 = vector.shape_cast %80 : vector<1x32x64xbf16> to vector<32x64xbf16>
    %cst_43 = arith.constant dense<0.000000e+00> : vector<64x64xf32>
    %82 = tpu.matmul %79, %81, %cst_43 {dimension_numbers = #tpu.dot_dimension_numbers<[1], [0], [0], [1], [0, 0, 1, 1], [], []>} : vector<64x32xbf16>, vector<32x64xbf16>, vector<64x64xf32> -> vector<64x64xf32>
    %83 = arith.addf %75, %82 : vector<64x64xf32>
    %84 = vector.extract_strided_slice %38 {offsets = [23, 0], sizes = [64, 32], strides = [1, 1]} : vector<96x32xf32> to vector<64x32xf32>
    %85 = vector.broadcast %2 : vector<64x1xf32> to vector<64x32xf32>
    %86 = arith.mulf %84, %85 : vector<64x32xf32>
    %87 = arith.truncf %86 : vector<64x32xf32> to vector<64x32xbf16>
    %c6 = arith.constant 6 : index
    %c0_44 = arith.constant 0 : index
    %c0_45 = arith.constant 0 : index
    %88 = vector.load %arg9[%c6, %c0_44, %c0_45] : memref<9x32x64xbf16, #tpu.memory_space<vmem>>, vector<1x32x64xbf16>
    %89 = vector.shape_cast %88 : vector<1x32x64xbf16> to vector<32x64xbf16>
    %cst_46 = arith.constant dense<0.000000e+00> : vector<64x64xf32>
    %90 = tpu.matmul %87, %89, %cst_46 {dimension_numbers = #tpu.dot_dimension_numbers<[1], [0], [0], [1], [0, 0, 1, 1], [], []>} : vector<64x32xbf16>, vector<32x64xbf16>, vector<64x64xf32> -> vector<64x64xf32>
    %91 = arith.addf %83, %90 : vector<64x64xf32>
    %92 = vector.extract_strided_slice %38 {offsets = [24, 0], sizes = [64, 32], strides = [1, 1]} : vector<96x32xf32> to vector<64x32xf32>
    %93 = arith.truncf %92 : vector<64x32xf32> to vector<64x32xbf16>
    %c7 = arith.constant 7 : index
    %c0_47 = arith.constant 0 : index
    %c0_48 = arith.constant 0 : index
    %94 = vector.load %arg9[%c7, %c0_47, %c0_48] : memref<9x32x64xbf16, #tpu.memory_space<vmem>>, vector<1x32x64xbf16>
    %95 = vector.shape_cast %94 : vector<1x32x64xbf16> to vector<32x64xbf16>
    %cst_49 = arith.constant dense<0.000000e+00> : vector<64x64xf32>
    %96 = tpu.matmul %93, %95, %cst_49 {dimension_numbers = #tpu.dot_dimension_numbers<[1], [0], [0], [1], [0, 0, 1, 1], [], []>} : vector<64x32xbf16>, vector<32x64xbf16>, vector<64x64xf32> -> vector<64x64xf32>
    %97 = arith.addf %91, %96 : vector<64x64xf32>
    %98 = vector.extract_strided_slice %38 {offsets = [25, 0], sizes = [64, 32], strides = [1, 1]} : vector<96x32xf32> to vector<64x32xf32>
    %99 = vector.broadcast %3 : vector<64x1xf32> to vector<64x32xf32>
    %100 = arith.mulf %98, %99 : vector<64x32xf32>
    %101 = arith.truncf %100 : vector<64x32xf32> to vector<64x32xbf16>
    %c8 = arith.constant 8 : index
    %c0_50 = arith.constant 0 : index
    %c0_51 = arith.constant 0 : index
    %102 = vector.load %arg9[%c8, %c0_50, %c0_51] : memref<9x32x64xbf16, #tpu.memory_space<vmem>>, vector<1x32x64xbf16>
    %103 = vector.shape_cast %102 : vector<1x32x64xbf16> to vector<32x64xbf16>
    %cst_52 = arith.constant dense<0.000000e+00> : vector<64x64xf32>
    %104 = tpu.matmul %101, %103, %cst_52 {dimension_numbers = #tpu.dot_dimension_numbers<[1], [0], [0], [1], [0, 0, 1, 1], [], []>} : vector<64x32xbf16>, vector<32x64xbf16>, vector<64x64xf32> -> vector<64x64xf32>
    %105 = arith.addf %97, %104 : vector<64x64xf32>
    %c0_53 = arith.constant 0 : index
    %c0_54 = arith.constant 0 : index
    %106 = vector.load %arg10[%c0_53, %c0_54] : memref<1x64xf32, #tpu.memory_space<vmem>>, vector<1x64xf32>
    %107 = vector.broadcast %106 : vector<1x64xf32> to vector<64x64xf32>
    %108 = arith.addf %105, %107 : vector<64x64xf32>
    %c0_55 = arith.constant 0 : index
    %c0_56 = arith.constant 0 : index
    %c0_57 = arith.constant 0 : index
    %109 = vector.load %arg2[%c0_55, %c0_56, %c0_57] : memref<1x1x64xf32, #tpu.memory_space<vmem>>, vector<1x1x64xf32>
    %110 = vector.shape_cast %109 : vector<1x1x64xf32> to vector<1x64xf32>
    %111 = vector.broadcast %110 : vector<1x64xf32> to vector<64x64xf32>
    %112 = arith.addf %108, %111 : vector<64x64xf32>
    %c0_58 = arith.constant 0 : index
    %c0_59 = arith.constant 0 : index
    %113 = vector.load %arg11[%c0_58, %c0_59] : memref<1x64xf32, #tpu.memory_space<vmem>>, vector<1x64xf32>
    %c0_60 = arith.constant 0 : index
    %c0_61 = arith.constant 0 : index
    %114 = vector.load %arg12[%c0_60, %c0_61] : memref<1x64xf32, #tpu.memory_space<vmem>>, vector<1x64xf32>
    %c0_62 = arith.constant 0 : index
    %c0_63 = arith.constant 0 : index
    %115 = vector.load %arg13[%c0_62, %c0_63] : memref<64x32xf32, #tpu.memory_space<vmem>>, vector<64x32xf32>
    %c0_64 = arith.constant 0 : index
    %c0_65 = arith.constant 0 : index
    %116 = vector.load %arg14[%c0_64, %c0_65] : memref<32x64xf32, #tpu.memory_space<vmem>>, vector<32x64xf32>
    %cst_66 = arith.constant dense<0.000000e+00> : vector<64xf32>
    %117 = vector.multi_reduction <add>, %112, %cst_66 [0] : vector<64x64xf32> to vector<64xf32>
    %118 = vector.shape_cast %117 : vector<64xf32> to vector<1x64xf32>
    %cst_67 = arith.constant dense<0.000000e+00> : vector<1x32xf32>
    %119 = tpu.matmul %118, %115, %cst_67 {dimension_numbers = #tpu.dot_dimension_numbers<[1], [0], [0], [1], [0, 0, 1, 1], [], []>} : vector<1x64xf32>, vector<64x32xf32>, vector<1x32xf32> -> vector<1x32xf32>
    %cst_68 = arith.constant 7.812500e-03 : f32
    %120 = vector.broadcast %cst_68 : f32 to vector<1x32xf32>
    %121 = arith.mulf %119, %120 : vector<1x32xf32>
    %cst_69 = arith.constant dense<0.000000e+00> : vector<1x64xf32>
    %122 = tpu.matmul %121, %116, %cst_69 {dimension_numbers = #tpu.dot_dimension_numbers<[1], [0], [0], [1], [0, 0, 1, 1], [], []>} : vector<1x32xf32>, vector<32x64xf32>, vector<1x64xf32> -> vector<1x64xf32>
    %123 = vector.broadcast %122 : vector<1x64xf32> to vector<64x64xf32>
    %124 = arith.subf %112, %123 : vector<64x64xf32>
    %125 = arith.mulf %124, %124 : vector<64x64xf32>
    %cst_70 = arith.constant dense<0.000000e+00> : vector<64xf32>
    %126 = vector.multi_reduction <add>, %125, %cst_70 [0] : vector<64x64xf32> to vector<64xf32>
    %127 = vector.shape_cast %126 : vector<64xf32> to vector<1x64xf32>
    %cst_71 = arith.constant dense<0.000000e+00> : vector<1x32xf32>
    %128 = tpu.matmul %127, %115, %cst_71 {dimension_numbers = #tpu.dot_dimension_numbers<[1], [0], [0], [1], [0, 0, 1, 1], [], []>} : vector<1x64xf32>, vector<64x32xf32>, vector<1x32xf32> -> vector<1x32xf32>
    %cst_72 = arith.constant 7.812500e-03 : f32
    %129 = vector.broadcast %cst_72 : f32 to vector<1x32xf32>
    %130 = arith.mulf %128, %129 : vector<1x32xf32>
    %cst_73 = arith.constant 9.99999974E-6 : f32
    %131 = vector.broadcast %cst_73 : f32 to vector<1x32xf32>
    %132 = arith.addf %130, %131 : vector<1x32xf32>
    %133 = math.rsqrt %132 : vector<1x32xf32>
    %cst_74 = arith.constant dense<0.000000e+00> : vector<1x64xf32>
    %134 = tpu.matmul %133, %116, %cst_74 {dimension_numbers = #tpu.dot_dimension_numbers<[1], [0], [0], [1], [0, 0, 1, 1], [], []>} : vector<1x32xf32>, vector<32x64xf32>, vector<1x64xf32> -> vector<1x64xf32>
    %135 = vector.broadcast %134 : vector<1x64xf32> to vector<64x64xf32>
    %136 = arith.mulf %124, %135 : vector<64x64xf32>
    %137 = vector.broadcast %113 : vector<1x64xf32> to vector<64x64xf32>
    %138 = arith.mulf %136, %137 : vector<64x64xf32>
    %139 = vector.broadcast %114 : vector<1x64xf32> to vector<64x64xf32>
    %140 = arith.addf %138, %139 : vector<64x64xf32>
    %141 = arith.negf %140 : vector<64x64xf32>
    %142 = math.exp %141 : vector<64x64xf32>
    %cst_75 = arith.constant 1.000000e+00 : f32
    %143 = vector.broadcast %cst_75 : f32 to vector<64x64xf32>
    %144 = arith.addf %143, %142 : vector<64x64xf32>
    %145 = arith.divf %143, %144 : vector<64x64xf32>
    %cst_76 = arith.constant 0.000000e+00 : f32
    %146 = vector.broadcast %cst_76 : f32 to vector<16x64xf32>
    %147 = tpu.concatenate %146, %145, %146 in 0 : vector<16x64xf32>, vector<64x64xf32>, vector<16x64xf32> -> vector<96x64xf32>
    %cst_77 = arith.constant 0.000000e+00 : f32
    %148 = vector.broadcast %cst_77 : f32 to vector<64x64xf32>
    %149 = vector.extract_strided_slice %147 {offsets = [7, 0], sizes = [64, 64], strides = [1, 1]} : vector<96x64xf32> to vector<64x64xf32>
    %150 = vector.broadcast %2 : vector<64x1xf32> to vector<64x64xf32>
    %151 = arith.mulf %149, %150 : vector<64x64xf32>
    %152 = arith.truncf %151 : vector<64x64xf32> to vector<64x64xbf16>
    %c0_78 = arith.constant 0 : index
    %c0_79 = arith.constant 0 : index
    %c0_80 = arith.constant 0 : index
    %153 = vector.load %arg15[%c0_78, %c0_79, %c0_80] : memref<9x64x64xbf16, #tpu.memory_space<vmem>>, vector<1x64x64xbf16>
    %154 = vector.shape_cast %153 : vector<1x64x64xbf16> to vector<64x64xbf16>
    %cst_81 = arith.constant dense<0.000000e+00> : vector<64x64xf32>
    %155 = tpu.matmul %152, %154, %cst_81 {dimension_numbers = #tpu.dot_dimension_numbers<[1], [0], [0], [1], [0, 0, 1, 1], [], []>} : vector<64x64xbf16>, vector<64x64xbf16>, vector<64x64xf32> -> vector<64x64xf32>
    %156 = arith.addf %148, %155 : vector<64x64xf32>
    %157 = vector.extract_strided_slice %147 {offsets = [8, 0], sizes = [64, 64], strides = [1, 1]} : vector<96x64xf32> to vector<64x64xf32>
    %158 = arith.truncf %157 : vector<64x64xf32> to vector<64x64xbf16>
    %c1_82 = arith.constant 1 : index
    %c0_83 = arith.constant 0 : index
    %c0_84 = arith.constant 0 : index
    %159 = vector.load %arg15[%c1_82, %c0_83, %c0_84] : memref<9x64x64xbf16, #tpu.memory_space<vmem>>, vector<1x64x64xbf16>
    %160 = vector.shape_cast %159 : vector<1x64x64xbf16> to vector<64x64xbf16>
    %cst_85 = arith.constant dense<0.000000e+00> : vector<64x64xf32>
    %161 = tpu.matmul %158, %160, %cst_85 {dimension_numbers = #tpu.dot_dimension_numbers<[1], [0], [0], [1], [0, 0, 1, 1], [], []>} : vector<64x64xbf16>, vector<64x64xbf16>, vector<64x64xf32> -> vector<64x64xf32>
    %162 = arith.addf %156, %161 : vector<64x64xf32>
    %163 = vector.extract_strided_slice %147 {offsets = [9, 0], sizes = [64, 64], strides = [1, 1]} : vector<96x64xf32> to vector<64x64xf32>
    %164 = vector.broadcast %3 : vector<64x1xf32> to vector<64x64xf32>
    %165 = arith.mulf %163, %164 : vector<64x64xf32>
    %166 = arith.truncf %165 : vector<64x64xf32> to vector<64x64xbf16>
    %c2_86 = arith.constant 2 : index
    %c0_87 = arith.constant 0 : index
    %c0_88 = arith.constant 0 : index
    %167 = vector.load %arg15[%c2_86, %c0_87, %c0_88] : memref<9x64x64xbf16, #tpu.memory_space<vmem>>, vector<1x64x64xbf16>
    %168 = vector.shape_cast %167 : vector<1x64x64xbf16> to vector<64x64xbf16>
    %cst_89 = arith.constant dense<0.000000e+00> : vector<64x64xf32>
    %169 = tpu.matmul %166, %168, %cst_89 {dimension_numbers = #tpu.dot_dimension_numbers<[1], [0], [0], [1], [0, 0, 1, 1], [], []>} : vector<64x64xbf16>, vector<64x64xbf16>, vector<64x64xf32> -> vector<64x64xf32>
    %170 = arith.addf %162, %169 : vector<64x64xf32>
    %171 = vector.extract_strided_slice %147 {offsets = [15, 0], sizes = [64, 64], strides = [1, 1]} : vector<96x64xf32> to vector<64x64xf32>
    %172 = vector.broadcast %2 : vector<64x1xf32> to vector<64x64xf32>
    %173 = arith.mulf %171, %172 : vector<64x64xf32>
    %174 = arith.truncf %173 : vector<64x64xf32> to vector<64x64xbf16>
    %c3_90 = arith.constant 3 : index
    %c0_91 = arith.constant 0 : index
    %c0_92 = arith.constant 0 : index
    %175 = vector.load %arg15[%c3_90, %c0_91, %c0_92] : memref<9x64x64xbf16, #tpu.memory_space<vmem>>, vector<1x64x64xbf16>
    %176 = vector.shape_cast %175 : vector<1x64x64xbf16> to vector<64x64xbf16>
    %cst_93 = arith.constant dense<0.000000e+00> : vector<64x64xf32>
    %177 = tpu.matmul %174, %176, %cst_93 {dimension_numbers = #tpu.dot_dimension_numbers<[1], [0], [0], [1], [0, 0, 1, 1], [], []>} : vector<64x64xbf16>, vector<64x64xbf16>, vector<64x64xf32> -> vector<64x64xf32>
    %178 = arith.addf %170, %177 : vector<64x64xf32>
    %179 = vector.extract_strided_slice %147 {offsets = [16, 0], sizes = [64, 64], strides = [1, 1]} : vector<96x64xf32> to vector<64x64xf32>
    %180 = arith.truncf %179 : vector<64x64xf32> to vector<64x64xbf16>
    %c4_94 = arith.constant 4 : index
    %c0_95 = arith.constant 0 : index
    %c0_96 = arith.constant 0 : index
    %181 = vector.load %arg15[%c4_94, %c0_95, %c0_96] : memref<9x64x64xbf16, #tpu.memory_space<vmem>>, vector<1x64x64xbf16>
    %182 = vector.shape_cast %181 : vector<1x64x64xbf16> to vector<64x64xbf16>
    %cst_97 = arith.constant dense<0.000000e+00> : vector<64x64xf32>
    %183 = tpu.matmul %180, %182, %cst_97 {dimension_numbers = #tpu.dot_dimension_numbers<[1], [0], [0], [1], [0, 0, 1, 1], [], []>} : vector<64x64xbf16>, vector<64x64xbf16>, vector<64x64xf32> -> vector<64x64xf32>
    %184 = arith.addf %178, %183 : vector<64x64xf32>
    %185 = vector.extract_strided_slice %147 {offsets = [17, 0], sizes = [64, 64], strides = [1, 1]} : vector<96x64xf32> to vector<64x64xf32>
    %186 = vector.broadcast %3 : vector<64x1xf32> to vector<64x64xf32>
    %187 = arith.mulf %185, %186 : vector<64x64xf32>
    %188 = arith.truncf %187 : vector<64x64xf32> to vector<64x64xbf16>
    %c5_98 = arith.constant 5 : index
    %c0_99 = arith.constant 0 : index
    %c0_100 = arith.constant 0 : index
    %189 = vector.load %arg15[%c5_98, %c0_99, %c0_100] : memref<9x64x64xbf16, #tpu.memory_space<vmem>>, vector<1x64x64xbf16>
    %190 = vector.shape_cast %189 : vector<1x64x64xbf16> to vector<64x64xbf16>
    %cst_101 = arith.constant dense<0.000000e+00> : vector<64x64xf32>
    %191 = tpu.matmul %188, %190, %cst_101 {dimension_numbers = #tpu.dot_dimension_numbers<[1], [0], [0], [1], [0, 0, 1, 1], [], []>} : vector<64x64xbf16>, vector<64x64xbf16>, vector<64x64xf32> -> vector<64x64xf32>
    %192 = arith.addf %184, %191 : vector<64x64xf32>
    %193 = vector.extract_strided_slice %147 {offsets = [23, 0], sizes = [64, 64], strides = [1, 1]} : vector<96x64xf32> to vector<64x64xf32>
    %194 = vector.broadcast %2 : vector<64x1xf32> to vector<64x64xf32>
    %195 = arith.mulf %193, %194 : vector<64x64xf32>
    %196 = arith.truncf %195 : vector<64x64xf32> to vector<64x64xbf16>
    %c6_102 = arith.constant 6 : index
    %c0_103 = arith.constant 0 : index
    %c0_104 = arith.constant 0 : index
    %197 = vector.load %arg15[%c6_102, %c0_103, %c0_104] : memref<9x64x64xbf16, #tpu.memory_space<vmem>>, vector<1x64x64xbf16>
    %198 = vector.shape_cast %197 : vector<1x64x64xbf16> to vector<64x64xbf16>
    %cst_105 = arith.constant dense<0.000000e+00> : vector<64x64xf32>
    %199 = tpu.matmul %196, %198, %cst_105 {dimension_numbers = #tpu.dot_dimension_numbers<[1], [0], [0], [1], [0, 0, 1, 1], [], []>} : vector<64x64xbf16>, vector<64x64xbf16>, vector<64x64xf32> -> vector<64x64xf32>
    %200 = arith.addf %192, %199 : vector<64x64xf32>
    %201 = vector.extract_strided_slice %147 {offsets = [24, 0], sizes = [64, 64], strides = [1, 1]} : vector<96x64xf32> to vector<64x64xf32>
    %202 = arith.truncf %201 : vector<64x64xf32> to vector<64x64xbf16>
    %c7_106 = arith.constant 7 : index
    %c0_107 = arith.constant 0 : index
    %c0_108 = arith.constant 0 : index
    %203 = vector.load %arg15[%c7_106, %c0_107, %c0_108] : memref<9x64x64xbf16, #tpu.memory_space<vmem>>, vector<1x64x64xbf16>
    %204 = vector.shape_cast %203 : vector<1x64x64xbf16> to vector<64x64xbf16>
    %cst_109 = arith.constant dense<0.000000e+00> : vector<64x64xf32>
    %205 = tpu.matmul %202, %204, %cst_109 {dimension_numbers = #tpu.dot_dimension_numbers<[1], [0], [0], [1], [0, 0, 1, 1], [], []>} : vector<64x64xbf16>, vector<64x64xbf16>, vector<64x64xf32> -> vector<64x64xf32>
    %206 = arith.addf %200, %205 : vector<64x64xf32>
    %207 = vector.extract_strided_slice %147 {offsets = [25, 0], sizes = [64, 64], strides = [1, 1]} : vector<96x64xf32> to vector<64x64xf32>
    %208 = vector.broadcast %3 : vector<64x1xf32> to vector<64x64xf32>
    %209 = arith.mulf %207, %208 : vector<64x64xf32>
    %210 = arith.truncf %209 : vector<64x64xf32> to vector<64x64xbf16>
    %c8_110 = arith.constant 8 : index
    %c0_111 = arith.constant 0 : index
    %c0_112 = arith.constant 0 : index
    %211 = vector.load %arg15[%c8_110, %c0_111, %c0_112] : memref<9x64x64xbf16, #tpu.memory_space<vmem>>, vector<1x64x64xbf16>
    %212 = vector.shape_cast %211 : vector<1x64x64xbf16> to vector<64x64xbf16>
    %cst_113 = arith.constant dense<0.000000e+00> : vector<64x64xf32>
    %213 = tpu.matmul %210, %212, %cst_113 {dimension_numbers = #tpu.dot_dimension_numbers<[1], [0], [0], [1], [0, 0, 1, 1], [], []>} : vector<64x64xbf16>, vector<64x64xbf16>, vector<64x64xf32> -> vector<64x64xf32>
    %214 = arith.addf %206, %213 : vector<64x64xf32>
    %c0_114 = arith.constant 0 : index
    %c0_115 = arith.constant 0 : index
    %215 = vector.load %arg16[%c0_114, %c0_115] : memref<1x64xf32, #tpu.memory_space<vmem>>, vector<1x64xf32>
    %216 = vector.broadcast %215 : vector<1x64xf32> to vector<64x64xf32>
    %217 = arith.addf %214, %216 : vector<64x64xf32>
    %218 = arith.truncf %1 : vector<64x32xf32> to vector<64x32xbf16>
    %c0_116 = arith.constant 0 : index
    %c0_117 = arith.constant 0 : index
    %219 = vector.load %arg17[%c0_116, %c0_117] : memref<32x64xbf16, #tpu.memory_space<vmem>>, vector<32x64xbf16>
    %cst_118 = arith.constant dense<0.000000e+00> : vector<64x64xf32>
    %220 = tpu.matmul %218, %219, %cst_118 {dimension_numbers = #tpu.dot_dimension_numbers<[1], [0], [0], [1], [0, 0, 1, 1], [], []>} : vector<64x32xbf16>, vector<32x64xbf16>, vector<64x64xf32> -> vector<64x64xf32>
    %c0_119 = arith.constant 0 : index
    %c0_120 = arith.constant 0 : index
    %221 = vector.load %arg18[%c0_119, %c0_120] : memref<1x64xf32, #tpu.memory_space<vmem>>, vector<1x64xf32>
    %222 = vector.broadcast %221 : vector<1x64xf32> to vector<64x64xf32>
    %223 = arith.addf %220, %222 : vector<64x64xf32>
    %224 = arith.addf %223, %217 : vector<64x64xf32>
    %225 = arith.truncf %224 : vector<64x64xf32> to vector<64x64xbf16>
    %c0_121 = arith.constant 0 : index
    %c0_122 = arith.constant 0 : index
    %226 = vector.load %arg19[%c0_121, %c0_122] : memref<64x192xbf16, #tpu.memory_space<vmem>>, vector<64x192xbf16>
    %cst_123 = arith.constant dense<0.000000e+00> : vector<64x192xf32>
    %227 = tpu.matmul %225, %226, %cst_123 {dimension_numbers = #tpu.dot_dimension_numbers<[1], [0], [0], [1], [0, 0, 1, 1], [], []>} : vector<64x64xbf16>, vector<64x192xbf16>, vector<64x192xf32> -> vector<64x192xf32>
    %c0_124 = arith.constant 0 : index
    %c0_125 = arith.constant 0 : index
    %228 = vector.load %arg20[%c0_124, %c0_125] : memref<1x192xf32, #tpu.memory_space<vmem>>, vector<1x192xf32>
    %229 = vector.broadcast %228 : vector<1x192xf32> to vector<64x192xf32>
    %230 = arith.addf %227, %229 : vector<64x192xf32>
    %231 = vector.extract_strided_slice %230 {offsets = [0, 0], sizes = [64, 64], strides = [1, 1]} : vector<64x192xf32> to vector<64x64xf32>
    %232 = arith.truncf %231 : vector<64x64xf32> to vector<64x64xbf16>
    %233 = vector.extract_strided_slice %230 {offsets = [0, 64], sizes = [64, 64], strides = [1, 1]} : vector<64x192xf32> to vector<64x64xf32>
    %234 = arith.truncf %233 : vector<64x64xf32> to vector<64x64xbf16>
    %235 = vector.extract_strided_slice %230 {offsets = [0, 128], sizes = [64, 64], strides = [1, 1]} : vector<64x192xf32> to vector<64x64xf32>
    %236 = arith.truncf %235 : vector<64x64xf32> to vector<64x64xbf16>
    %cst_126 = arith.constant dense<0.000000e+00> : vector<64x64xf32>
    %237 = tpu.matmul %232, %234, %cst_126 {dimension_numbers = #tpu.dot_dimension_numbers<[1], [1], [0], [0], [0, 0, 1, 0], [], []>} : vector<64x64xbf16>, vector<64x64xbf16>, vector<64x64xf32> -> vector<64x64xf32>
    %cst_127 = arith.constant 1.250000e-01 : f32
    %238 = vector.broadcast %cst_127 : f32 to vector<64x64xf32>
    %239 = arith.mulf %237, %238 : vector<64x64xf32>
    %cst_128 = arith.constant dense<0xFF800000> : vector<64xf32>
    %240 = vector.multi_reduction <maximumf>, %239, %cst_128 [1] : vector<64x64xf32> to vector<64xf32>
    %241 = vector.shape_cast %240 : vector<64xf32> to vector<64x1xf32>
    %242 = vector.broadcast %241 : vector<64x1xf32> to vector<64x64xf32>
    %243 = arith.subf %239, %242 : vector<64x64xf32>
    %244 = math.exp %243 : vector<64x64xf32>
    %cst_129 = arith.constant dense<0.000000e+00> : vector<64xf32>
    %245 = vector.multi_reduction <add>, %244, %cst_129 [1] : vector<64x64xf32> to vector<64xf32>
    %246 = vector.shape_cast %245 : vector<64xf32> to vector<64x1xf32>
    %247 = tpu.reciprocal %246 {approx = true} : vector<64x1xf32> -> vector<64x1xf32>
    %248 = vector.broadcast %247 : vector<64x1xf32> to vector<64x64xf32>
    %249 = arith.mulf %244, %248 : vector<64x64xf32>
    %250 = arith.truncf %249 : vector<64x64xf32> to vector<64x64xbf16>
    %cst_130 = arith.constant dense<0.000000e+00> : vector<64x64xf32>
    %251 = tpu.matmul %250, %236, %cst_130 {dimension_numbers = #tpu.dot_dimension_numbers<[1], [0], [0], [1], [0, 0, 1, 1], [], []>} : vector<64x64xbf16>, vector<64x64xbf16>, vector<64x64xf32> -> vector<64x64xf32>
    %252 = arith.truncf %251 : vector<64x64xf32> to vector<64x64xbf16>
    %c0_131 = arith.constant 0 : index
    %c0_132 = arith.constant 0 : index
    %253 = vector.load %arg21[%c0_131, %c0_132] : memref<64x64xbf16, #tpu.memory_space<vmem>>, vector<64x64xbf16>
    %cst_133 = arith.constant dense<0.000000e+00> : vector<64x64xf32>
    %254 = tpu.matmul %252, %253, %cst_133 {dimension_numbers = #tpu.dot_dimension_numbers<[1], [0], [0], [1], [0, 0, 1, 1], [], []>} : vector<64x64xbf16>, vector<64x64xbf16>, vector<64x64xf32> -> vector<64x64xf32>
    %c0_134 = arith.constant 0 : index
    %c0_135 = arith.constant 0 : index
    %255 = vector.load %arg22[%c0_134, %c0_135] : memref<1x64xf32, #tpu.memory_space<vmem>>, vector<1x64xf32>
    %256 = vector.broadcast %255 : vector<1x64xf32> to vector<64x64xf32>
    %257 = arith.addf %254, %256 : vector<64x64xf32>
    %258 = arith.addf %257, %224 : vector<64x64xf32>
    %c0_136 = arith.constant 0 : index
    %c0_137 = arith.constant 0 : index
    %c0_138 = arith.constant 0 : index
    %259 = vector.load %arg23[%c0_136, %c0_137, %c0_138] : memref<1x64x64xf32, #tpu.memory_space<vmem>>, vector<1x64x64xf32>
    %260 = vector.shape_cast %259 : vector<1x64x64xf32> to vector<64x64xf32>
    %261 = vector.shape_cast %258 : vector<64x64xf32> to vector<1x64x64xf32>
    tpu.vector_store %arg23[%c0_136, %c0_137, %c0_138], %261 {strides = array<i32>} : memref<1x64x64xf32, #tpu.memory_space<vmem>>, vector<1x64x64xf32>,
    return
  }
  func.func @transform_0(%arg0: i32) -> (i32, i32, i32) {
    %c0_i32 = arith.constant 0 : i32
    %c0_i32_0 = arith.constant 0 : i32
    %c0_i32_1 = arith.constant 0 : i32
    return %arg0, %c0_i32, %c0_i32_0 : i32, i32, i32
  }
  func.func @transform_1(%arg0: i32) -> (i32, i32, i32) {
    %c0_i32 = arith.constant 0 : i32
    %c0_i32_0 = arith.constant 0 : i32
    %c0_i32_1 = arith.constant 0 : i32
    return %arg0, %c0_i32, %c0_i32_0 : i32, i32, i32
  }
  func.func @transform_2(%arg0: i32) -> (i32, i32) {
    %c0_i32 = arith.constant 0 : i32
    %c0_i32_0 = arith.constant 0 : i32
    %c0_i32_1 = arith.constant 0 : i32
    return %c0_i32, %c0_i32_0 : i32, i32
  }
  func.func @transform_3(%arg0: i32) -> (i32, i32) {
    %c0_i32 = arith.constant 0 : i32
    %c0_i32_0 = arith.constant 0 : i32
    %c0_i32_1 = arith.constant 0 : i32
    return %c0_i32, %c0_i32_0 : i32, i32
  }
  func.func @transform_4(%arg0: i32) -> (i32, i32) {
    %c0_i32 = arith.constant 0 : i32
    %c0_i32_0 = arith.constant 0 : i32
    %c0_i32_1 = arith.constant 0 : i32
    return %c0_i32, %c0_i32_0 : i32, i32
  }
  func.func @transform_5(%arg0: i32) -> (i32, i32) {
    %c0_i32 = arith.constant 0 : i32
    %c0_i32_0 = arith.constant 0 : i32
    %c0_i32_1 = arith.constant 0 : i32
    return %c0_i32, %c0_i32_0 : i32, i32
  }
  func.func @transform_6(%arg0: i32) -> (i32, i32) {
    %c0_i32 = arith.constant 0 : i32
    %c0_i32_0 = arith.constant 0 : i32
    %c0_i32_1 = arith.constant 0 : i32
    return %c0_i32, %c0_i32_0 : i32, i32
  }
  func.func @transform_7(%arg0: i32) -> (i32, i32) {
    %c0_i32 = arith.constant 0 : i32
    %c0_i32_0 = arith.constant 0 : i32
    %c0_i32_1 = arith.constant 0 : i32
    return %c0_i32, %c0_i32_0 : i32, i32
  }
  func.func @transform_8(%arg0: i32) -> (i32, i32, i32) {
    %c0_i32 = arith.constant 0 : i32
    %c0_i32_0 = arith.constant 0 : i32
    %c0_i32_1 = arith.constant 0 : i32
    %c0_i32_2 = arith.constant 0 : i32
    return %c0_i32, %c0_i32_0, %c0_i32_1 : i32, i32, i32
  }
  func.func @transform_9(%arg0: i32) -> (i32, i32) {
    %c0_i32 = arith.constant 0 : i32
    %c0_i32_0 = arith.constant 0 : i32
    %c0_i32_1 = arith.constant 0 : i32
    return %c0_i32, %c0_i32_0 : i32, i32
  }
  func.func @transform_10(%arg0: i32) -> (i32, i32) {
    %c0_i32 = arith.constant 0 : i32
    %c0_i32_0 = arith.constant 0 : i32
    %c0_i32_1 = arith.constant 0 : i32
    return %c0_i32, %c0_i32_0 : i32, i32
  }
  func.func @transform_11(%arg0: i32) -> (i32, i32) {
    %c0_i32 = arith.constant 0 : i32
    %c0_i32_0 = arith.constant 0 : i32
    %c0_i32_1 = arith.constant 0 : i32
    return %c0_i32, %c0_i32_0 : i32, i32
  }
  func.func @transform_12(%arg0: i32) -> (i32, i32) {
    %c0_i32 = arith.constant 0 : i32
    %c0_i32_0 = arith.constant 0 : i32
    %c0_i32_1 = arith.constant 0 : i32
    return %c0_i32, %c0_i32_0 : i32, i32
  }
  func.func @transform_13(%arg0: i32) -> (i32, i32) {
    %c0_i32 = arith.constant 0 : i32
    %c0_i32_0 = arith.constant 0 : i32
    %c0_i32_1 = arith.constant 0 : i32
    return %c0_i32, %c0_i32_0 : i32, i32
  }
  func.func @transform_14(%arg0: i32) -> (i32, i32, i32) {
    %c0_i32 = arith.constant 0 : i32
    %c0_i32_0 = arith.constant 0 : i32
    %c0_i32_1 = arith.constant 0 : i32
    %c0_i32_2 = arith.constant 0 : i32
    return %c0_i32, %c0_i32_0, %c0_i32_1 : i32, i32, i32
  }
  func.func @transform_15(%arg0: i32) -> (i32, i32) {
    %c0_i32 = arith.constant 0 : i32
    %c0_i32_0 = arith.constant 0 : i32
    %c0_i32_1 = arith.constant 0 : i32
    return %c0_i32, %c0_i32_0 : i32, i32
  }
  func.func @transform_16(%arg0: i32) -> (i32, i32) {
    %c0_i32 = arith.constant 0 : i32
    %c0_i32_0 = arith.constant 0 : i32
    %c0_i32_1 = arith.constant 0 : i32
    return %c0_i32, %c0_i32_0 : i32, i32
  }
  func.func @transform_17(%arg0: i32) -> (i32, i32) {
    %c0_i32 = arith.constant 0 : i32
    %c0_i32_0 = arith.constant 0 : i32
    %c0_i32_1 = arith.constant 0 : i32
    return %c0_i32, %c0_i32_0 : i32, i32
  }
  func.func @transform_18(%arg0: i32) -> (i32, i32) {
    %c0_i32 = arith.constant 0 : i32
    %c0_i32_0 = arith.constant 0 : i32
    %c0_i32_1 = arith.constant 0 : i32
    return %c0_i32, %c0_i32_0 : i32, i32
  }
  func.func @transform_19(%arg0: i32) -> (i32, i32) {
    %c0_i32 = arith.constant 0 : i32
    %c0_i32_0 = arith.constant 0 : i32
    %c0_i32_1 = arith.constant 0 : i32
    return %c0_i32, %c0_i32_0 : i32, i32
  }
  func.func @transform_20(%arg0: i32) -> (i32, i32) {
    %c0_i32 = arith.constant 0 : i32
    %c0_i32_0 = arith.constant 0 : i32
    %c0_i32_1 = arith.constant 0 : i32
    return %c0_i32, %c0_i32_0 : i32, i32
  }
  func.func @transform_21(%arg0: i32) -> (i32, i32) {
    %c0_i32 = arith.constant 0 : i32
    %c0_i32_0 = arith.constant 0 : i32
    %c0_i32_1 = arith.constant 0 : i32
    return %c0_i32, %c0_i32_0 : i32, i32
  }
  func.func @transform_22(%arg0: i32) -> (i32, i32, i32) {
    %c0_i32 = arith.constant 0 : i32
    %c0_i32_0 = arith.constant 0 : i32
    %c0_i32_1 = arith.constant 0 : i32
    return %arg0, %c0_i32, %c0_i32_0 : i32, i32, i32
  }
}

</mosaic_0001>

<llo_original>
// kernel: tpu_custom_call.1
$region0: #{tpu_custom_call.1}
  #allocation0 [shape = 'u32[]', space=smem, size = 0x4, offset = 0x4, fixed_abs, tag = 'smem constant byte address 0x4 - core index']
  #allocation1 [shape = 'u32[72,128]{1,0:T(1,128)}', space=vmem, size = 0x9000, scoped, tag = 'internal scratch']
  %s0 = inlined_call_operand.vmem [shape: f32[2,64,32], index: 0, kind: input, shape index: {}]
  %s1 = inlined_call_operand.hbm [shape: f32[2,1,64], index: 1, kind: input, shape index: {}]
  %s2 = inlined_call_operand.vmem [shape: f32[64,1], index: 2, kind: input, shape index: {}]
  %s3 = inlined_call_operand.vmem [shape: f32[64,1], index: 3, kind: input, shape index: {}]
  %s4 = inlined_call_operand.vmem [shape: f32[1,32], index: 4, kind: input, shape index: {}]
  %s5 = inlined_call_operand.vmem [shape: f32[1,32], index: 5, kind: input, shape index: {}]
  %s6 = inlined_call_operand.vmem [shape: f32[32,32], index: 6, kind: input, shape index: {}]
  %s7 = inlined_call_operand.vmem [shape: f32[32,32], index: 7, kind: input, shape index: {}]
  %s8 = inlined_call_operand.vmem [shape: bf16[9,32,64], index: 8, kind: input, shape index: {}]
  %s9 = inlined_call_operand.hbm [shape: f32[1,64], index: 9, kind: input, shape index: {}]
  %s10 = inlined_call_operand.vmem [shape: f32[1,64], index: 10, kind: input, shape index: {}]
  %s11 = inlined_call_operand.vmem [shape: f32[1,64], index: 11, kind: input, shape index: {}]
  %s12 = inlined_call_operand.vmem [shape: f32[64,32], index: 12, kind: input, shape index: {}]
  %s13 = inlined_call_operand.vmem [shape: f32[32,64], index: 13, kind: input, shape index: {}]
  %s14 = inlined_call_operand.hbm [shape: bf16[9,64,64], index: 14, kind: input, shape index: {}]
  %s15 = inlined_call_operand.vmem [shape: f32[1,64], index: 15, kind: input, shape index: {}]
  %s16 = inlined_call_operand.vmem [shape: bf16[32,64], index: 16, kind: input, shape index: {}]
  %s17 = inlined_call_operand.vmem [shape: f32[1,64], index: 17, kind: input, shape index: {}]
  %s18 = inlined_call_operand.vmem [shape: bf16[64,192], index: 18, kind: input, shape index: {}]
  %s19 = inlined_call_operand.vmem [shape: f32[1,192], index: 19, kind: input, shape index: {}]
  %s20 = inlined_call_operand.hbm [shape: bf16[64,64], index: 20, kind: input, shape index: {}]
  %s21 = inlined_call_operand.vmem [shape: f32[1,64], index: 21, kind: input, shape index: {}]
  %s22 = inlined_call_operand.hbm [shape: f32[2,64,64], index: 22, kind: output, shape index: {}]
  %s23 = sld [smem:[#allocation0]]
  $region137: #{tpu_custom_call.1} parent=0
    _
  %s25 = ssub.s32 1, %s23
  %s26 = scalar_select 0, %s25, %s23
  $region1: #{tpu_custom_call.1} parent=0
    #allocation2 [shape = 'u8[1024]{0}', space=vmem, size = 0x400, scoped, tag = 'input window, operand 1']
    #allocation3 [shape = 's32[2]{0}', space=sflag, size = 0x8, scoped, tag = 'scoped memory for tpu_custom_call.1']
    #allocation4 [shape = 's32[2]{0}', space=sflag, size = 0x8, scoped, tag = 'scoped memory for tpu_custom_call.1']
    #allocation5 [shape = 'u8[512]{0}', space=vmem, size = 0x400, scoped, tag = 'input window, operand 9, single buffered']
    #allocation6 [shape = 's32[1]{0}', space=sflag, size = 0x4, scoped, tag = 'scoped memory for tpu_custom_call.1']
    #allocation7 [shape = 'u8[147456]{0}', space=vmem, size = 0x24000, scoped, tag = 'input window, operand 14, single buffered']
    #allocation8 [shape = 'u8[16384]{0}', space=vmem, size = 0x4000, scoped, tag = 'input window, operand 20, single buffered']
    #allocation9 [shape = 's32[1]{0}', space=sflag, size = 0x4, scoped, tag = 'scoped memory for tpu_custom_call.1']
    #allocation10 [shape = 'u8[65536]{0}', space=vmem, size = 0x10000, scoped, tag = 'output window, operand 0']
    %27 = vsyncpa [#allocation3], 0
    %s28 = scalar_lea.sflag [#allocation3], 1
    %29 = vsyncpa %s28, 0
    %30 = vsyncpa [#allocation6], 0
    %31 = vsyncpa [#allocation9], 0
    %32 = vsyncpa [#allocation4], 0
    %s33 = scalar_lea.sflag [#allocation4], 1
    %34 = vsyncpa %s33, 0
    loop: start=0, step=1, limit=4
    $region2: #{tpu_custom_call.1} parent=1 // loop_pre_header
      _
    $region3: #{tpu_custom_call.1} parent=1 // loop_header
      %s36 = sphi 0, %s40
      %p37 = scmp.ge.s32.totalorder %s36, 4
      %s46 = sphi 0, %s48
      %s49 = sphi 0, %s46
      %s50 = sphi 0, %s49
      %s66 = sphi 0, %s50
      %s72 = sphi 0, %s74
      %s75 = sphi 0, %s72
      %s76 = sphi 0, %s75
      %s92 = sphi 0, %s76
      %s96 = sphi 0, %s96
      %s98 = sphi 0, %s96
      %s99 = sphi 0, %s98
      %s113 = sphi 0, %s99
      %s117 = sphi 0, %s117
      %s119 = sphi 0, %s117
      %s120 = sphi 0, %s119
      %s134 = sphi 0, %s120
      %s138 = sphi 0, %s138
      %s140 = sphi 0, %s138
      %s141 = sphi 0, %s140
      %s155 = sphi 0, %s141
      %s159 = sphi 0, %s159
      %s161 = sphi 0, %s159
      %s162 = sphi 0, %s161
      %s176 = sphi 0, %s162
      %s180 = sphi 0, %s180
      %s182 = sphi 0, %s180
      %s183 = sphi 0, %s182
      %s197 = sphi 0, %s183
      %s201 = sphi 0, %s201
      %s203 = sphi 0, %s201
      %s204 = sphi 0, %s203
      %s218 = sphi 0, %s204
      %s222 = sphi 0, %s222
      %s224 = sphi 0, %s222
      %s225 = sphi 0, %s224
      %s239 = sphi 0, %s225
      %s243 = sphi 0, %s243
      %s245 = sphi 0, %s243
      %s246 = sphi 0, %s245
      %s260 = sphi 0, %s246
      %s264 = sphi 0, %s264
      %s266 = sphi 0, %s264
      %s267 = sphi 0, %s266
      %s281 = sphi 0, %s267
      %s285 = sphi 0, %s285
      %s287 = sphi 0, %s285
      %s288 = sphi 0, %s287
      %s302 = sphi 0, %s288
      %s306 = sphi 0, %s306
      %s308 = sphi 0, %s306
      %s309 = sphi 0, %s308
      %s323 = sphi 0, %s309
      %s327 = sphi 0, %s327
      %s329 = sphi 0, %s327
      %s330 = sphi 0, %s329
      %s344 = sphi 0, %s330
      %s348 = sphi 0, %s348
      %s350 = sphi 0, %s348
      %s351 = sphi 0, %s350
      %s365 = sphi 0, %s351
      %s369 = sphi 0, %s369
      %s371 = sphi 0, %s369
      %s372 = sphi 0, %s371
      %s386 = sphi 0, %s372
      %s390 = sphi 0, %s390
      %s392 = sphi 0, %s390
      %s393 = sphi 0, %s392
      %s407 = sphi 0, %s393
      %s411 = sphi 0, %s411
      %s413 = sphi 0, %s411
      %s414 = sphi 0, %s413
      %s428 = sphi 0, %s414
      %s432 = sphi 0, %s432
      %s434 = sphi 0, %s432
      %s435 = sphi 0, %s434
      %s449 = sphi 0, %s435
      %s453 = sphi 0, %s453
      %s455 = sphi 0, %s453
      %s456 = sphi 0, %s455
      %s470 = sphi 0, %s456
      %s474 = sphi 0, %s474
      %s476 = sphi 0, %s474
      %s477 = sphi 0, %s476
      %s491 = sphi 0, %s477
      %s495 = sphi 0, %s495
      %s497 = sphi 0, %s495
      %s498 = sphi 0, %s497
      %s512 = sphi 0, %s498
      %s518 = sphi 0, %s520
      %s521 = sphi 0, %s518
      %s522 = sphi 0, %s521
      %s538 = sphi 0, %s522
    $region4: #{tpu_custom_call.1} parent=1 // loop_header_branch
      %39 = sbr.rel (%p37) target = $region8
    $region5: #{tpu_custom_call.1} parent=1 // loop_body
      %s41 = ssub.s32 %s36, 1
      %s42 = ssub.s32 %s36, 2
      %s43 = sadd.s32 %s36, 1
      %s44 = ssub.s32 %s36, %s43
      %p45 = scmp.eq.s32.totalorder %s44, 0
      %s47 = sadd.s32 %s46, 1
      %s48 = scalar_select %p45, %s46, %s47
      %p51 = pneg %p45
      %p52 = scmp.eq.s32.totalorder %s36, 1
      %p53 = por %p51, %p52
      %p54 = scmp.ne.s32.totalorder %s46, %s49
      %p55 = scmp.eq.s32.totalorder %s36, 0
      %p56 = por %p54, %p55
      %p57 = scmp.ne.s32.totalorder %s46, %s49
      %p58 = scmp.eq.s32.totalorder %s41, 1
      %p59 = por %p57, %p58
      %p60 = scmp.ne.s32.totalorder %s49, %s50
      %p61 = scmp.eq.s32.totalorder %s41, 0
      %p62 = por %p60, %p61
      %p63 = scmp.ne.s32.totalorder %s49, %s50
      %p64 = scmp.eq.s32.totalorder %s42, 1
      %p65 = por %p63, %p64
      %p67 = scmp.ne.s32.totalorder %s50, %s66
      %p68 = scmp.eq.s32.totalorder %s42, 0
      %p69 = por %p67, %p68
      %s70 = ssub.s32 %s36, %s43
      %p71 = scmp.eq.s32.totalorder %s70, 0
      %s73 = sadd.s32 %s72, 1
      %s74 = scalar_select %p71, %s72, %s73
      %p77 = pneg %p71
      %p78 = scmp.eq.s32.totalorder %s36, 1
      %p79 = por %p77, %p78
      %p80 = scmp.ne.s32.totalorder %s72, %s75
      %p81 = scmp.eq.s32.totalorder %s36, 0
      %p82 = por %p80, %p81
      %p83 = scmp.ne.s32.totalorder %s72, %s75
      %p84 = scmp.eq.s32.totalorder %s41, 1
      %p85 = por %p83, %p84
      %p86 = scmp.ne.s32.totalorder %s75, %s76
      %p87 = scmp.eq.s32.totalorder %s41, 0
      %p88 = por %p86, %p87
      %p89 = scmp.ne.s32.totalorder %s75, %s76
      %p90 = scmp.eq.s32.totalorder %s42, 1
      %p91 = por %p89, %p90
      %p93 = scmp.ne.s32.totalorder %s76, %s92
      %p94 = scmp.eq.s32.totalorder %s42, 0
      %p95 = por %p93, %p94
      %s97 = sadd.s32 %s96, 1
      %p100 = scmp.eq.s32.totalorder %s36, 1
      %p101 = scmp.ne.s32.totalorder %s96, %s98
      %p102 = scmp.eq.s32.totalorder %s36, 0
      %p103 = por %p101, %p102
      %p104 = scmp.ne.s32.totalorder %s96, %s98
      %p105 = scmp.eq.s32.totalorder %s41, 1
      %p106 = por %p104, %p105
      %p107 = scmp.ne.s32.totalorder %s98, %s99
      %p108 = scmp.eq.s32.totalorder %s41, 0
      %p109 = por %p107, %p108
      %p110 = scmp.ne.s32.totalorder %s98, %s99
      %p111 = scmp.eq.s32.totalorder %s42, 1
      %p112 = por %p110, %p111
      %p114 = scmp.ne.s32.totalorder %s99, %s113
      %p115 = scmp.eq.s32.totalorder %s42, 0
      %p116 = por %p114, %p115
      %s118 = sadd.s32 %s117, 1
      %p121 = scmp.eq.s32.totalorder %s36, 1
      %p122 = scmp.ne.s32.totalorder %s117, %s119
      %p123 = scmp.eq.s32.totalorder %s36, 0
      %p124 = por %p122, %p123
      %p125 = scmp.ne.s32.totalorder %s117, %s119
      %p126 = scmp.eq.s32.totalorder %s41, 1
      %p127 = por %p125, %p126
      %p128 = scmp.ne.s32.totalorder %s119, %s120
      %p129 = scmp.eq.s32.totalorder %s41, 0
      %p130 = por %p128, %p129
      %p131 = scmp.ne.s32.totalorder %s119, %s120
      %p132 = scmp.eq.s32.totalorder %s42, 1
      %p133 = por %p131, %p132
      %p135 = scmp.ne.s32.totalorder %s120, %s134
      %p136 = scmp.eq.s32.totalorder %s42, 0
      %p137 = por %p135, %p136
      %s139 = sadd.s32 %s138, 1
      %p142 = scmp.eq.s32.totalorder %s36, 1
      %p143 = scmp.ne.s32.totalorder %s138, %s140
      %p144 = scmp.eq.s32.totalorder %s36, 0
      %p145 = por %p143, %p144
      %p146 = scmp.ne.s32.totalorder %s138, %s140
      %p147 = scmp.eq.s32.totalorder %s41, 1
      %p148 = por %p146, %p147
      %p149 = scmp.ne.s32.totalorder %s140, %s141
      %p150 = scmp.eq.s32.totalorder %s41, 0
      %p151 = por %p149, %p150
      %p152 = scmp.ne.s32.totalorder %s140, %s141
      %p153 = scmp.eq.s32.totalorder %s42, 1
      %p154 = por %p152, %p153
      %p156 = scmp.ne.s32.totalorder %s141, %s155
      %p157 = scmp.eq.s32.totalorder %s42, 0
      %p158 = por %p156, %p157
      %s160 = sadd.s32 %s159, 1
      %p163 = scmp.eq.s32.totalorder %s36, 1
      %p164 = scmp.ne.s32.totalorder %s159, %s161
      %p165 = scmp.eq.s32.totalorder %s36, 0
      %p166 = por %p164, %p165
      %p167 = scmp.ne.s32.totalorder %s159, %s161
      %p168 = scmp.eq.s32.totalorder %s41, 1
      %p169 = por %p167, %p168
      %p170 = scmp.ne.s32.totalorder %s161, %s162
      %p171 = scmp.eq.s32.totalorder %s41, 0
      %p172 = por %p170, %p171
      %p173 = scmp.ne.s32.totalorder %s161, %s162
      %p174 = scmp.eq.s32.totalorder %s42, 1
      %p175 = por %p173, %p174
      %p177 = scmp.ne.s32.totalorder %s162, %s176
      %p178 = scmp.eq.s32.totalorder %s42, 0
      %p179 = por %p177, %p178
      %s181 = sadd.s32 %s180, 1
      %p184 = scmp.eq.s32.totalorder %s36, 1
      %p185 = scmp.ne.s32.totalorder %s180, %s182
      %p186 = scmp.eq.s32.totalorder %s36, 0
      %p187 = por %p185, %p186
      %p188 = scmp.ne.s32.totalorder %s180, %s182
      %p189 = scmp.eq.s32.totalorder %s41, 1
      %p190 = por %p188, %p189
      %p191 = scmp.ne.s32.totalorder %s182, %s183
      %p192 = scmp.eq.s32.totalorder %s41, 0
      %p193 = por %p191, %p192
      %p194 = scmp.ne.s32.totalorder %s182, %s183
      %p195 = scmp.eq.s32.totalorder %s42, 1
      %p196 = por %p194, %p195
      %p198 = scmp.ne.s32.totalorder %s183, %s197
      %p199 = scmp.eq.s32.totalorder %s42, 0
      %p200 = por %p198, %p199
      %s202 = sadd.s32 %s201, 1
      %p205 = scmp.eq.s32.totalorder %s36, 1
      %p206 = scmp.ne.s32.totalorder %s201, %s203
      %p207 = scmp.eq.s32.totalorder %s36, 0
      %p208 = por %p206, %p207
      %p209 = scmp.ne.s32.totalorder %s201, %s203
      %p210 = scmp.eq.s32.totalorder %s41, 1
      %p211 = por %p209, %p210
      %p212 = scmp.ne.s32.totalorder %s203, %s204
      %p213 = scmp.eq.s32.totalorder %s41, 0
      %p214 = por %p212, %p213
      %p215 = scmp.ne.s32.totalorder %s203, %s204
      %p216 = scmp.eq.s32.totalorder %s42, 1
      %p217 = por %p215, %p216
      %p219 = scmp.ne.s32.totalorder %s204, %s218
      %p220 = scmp.eq.s32.totalorder %s42, 0
      %p221 = por %p219, %p220
      %s223 = sadd.s32 %s222, 1
      %p226 = scmp.eq.s32.totalorder %s36, 1
      %p227 = scmp.ne.s32.totalorder %s222, %s224
      %p228 = scmp.eq.s32.totalorder %s36, 0
      %p229 = por %p227, %p228
      %p230 = scmp.ne.s32.totalorder %s222, %s224
      %p231 = scmp.eq.s32.totalorder %s41, 1
      %p232 = por %p230, %p231
      %p233 = scmp.ne.s32.totalorder %s224, %s225
      %p234 = scmp.eq.s32.totalorder %s41, 0
      %p235 = por %p233, %p234
      %p236 = scmp.ne.s32.totalorder %s224, %s225
      %p237 = scmp.eq.s32.totalorder %s42, 1
      %p238 = por %p236, %p237
      %p240 = scmp.ne.s32.totalorder %s225, %s239
      %p241 = scmp.eq.s32.totalorder %s42, 0
      %p242 = por %p240, %p241
      %s244 = sadd.s32 %s243, 1
      %p247 = scmp.eq.s32.totalorder %s36, 1
      %p248 = scmp.ne.s32.totalorder %s243, %s245
      %p249 = scmp.eq.s32.totalorder %s36, 0
      %p250 = por %p248, %p249
      %p251 = scmp.ne.s32.totalorder %s243, %s245
      %p252 = scmp.eq.s32.totalorder %s41, 1
      %p253 = por %p251, %p252
      %p254 = scmp.ne.s32.totalorder %s245, %s246
      %p255 = scmp.eq.s32.totalorder %s41, 0
      %p256 = por %p254, %p255
      %p257 = scmp.ne.s32.totalorder %s245, %s246
      %p258 = scmp.eq.s32.totalorder %s42, 1
      %p259 = por %p257, %p258
      %p261 = scmp.ne.s32.totalorder %s246, %s260
      %p262 = scmp.eq.s32.totalorder %s42, 0
      %p263 = por %p261, %p262
      %s265 = sadd.s32 %s264, 1
      %p268 = scmp.eq.s32.totalorder %s36, 1
      %p269 = scmp.ne.s32.totalorder %s264, %s266
      %p270 = scmp.eq.s32.totalorder %s36, 0
      %p271 = por %p269, %p270
      %p272 = scmp.ne.s32.totalorder %s264, %s266
      %p273 = scmp.eq.s32.totalorder %s41, 1
      %p274 = por %p272, %p273
      %p275 = scmp.ne.s32.totalorder %s266, %s267
      %p276 = scmp.eq.s32.totalorder %s41, 0
      %p277 = por %p275, %p276
      %p278 = scmp.ne.s32.totalorder %s266, %s267
      %p279 = scmp.eq.s32.totalorder %s42, 1
      %p280 = por %p278, %p279
      %p282 = scmp.ne.s32.totalorder %s267, %s281
      %p283 = scmp.eq.s32.totalorder %s42, 0
      %p284 = por %p282, %p283
      %s286 = sadd.s32 %s285, 1
      %p289 = scmp.eq.s32.totalorder %s36, 1
      %p290 = scmp.ne.s32.totalorder %s285, %s287
      %p291 = scmp.eq.s32.totalorder %s36, 0
      %p292 = por %p290, %p291
      %p293 = scmp.ne.s32.totalorder %s285, %s287
      %p294 = scmp.eq.s32.totalorder %s41, 1
      %p295 = por %p293, %p294
      %p296 = scmp.ne.s32.totalorder %s287, %s288
      %p297 = scmp.eq.s32.totalorder %s41, 0
      %p298 = por %p296, %p297
      %p299 = scmp.ne.s32.totalorder %s287, %s288
      %p300 = scmp.eq.s32.totalorder %s42, 1
      %p301 = por %p299, %p300
      %p303 = scmp.ne.s32.totalorder %s288, %s302
      %p304 = scmp.eq.s32.totalorder %s42, 0
      %p305 = por %p303, %p304
      %s307 = sadd.s32 %s306, 1
      %p310 = scmp.eq.s32.totalorder %s36, 1
      %p311 = scmp.ne.s32.totalorder %s306, %s308
      %p312 = scmp.eq.s32.totalorder %s36, 0
      %p313 = por %p311, %p312
      %p314 = scmp.ne.s32.totalorder %s306, %s308
      %p315 = scmp.eq.s32.totalorder %s41, 1
      %p316 = por %p314, %p315
      %p317 = scmp.ne.s32.totalorder %s308, %s309
      %p318 = scmp.eq.s32.totalorder %s41, 0
      %p319 = por %p317, %p318
      %p320 = scmp.ne.s32.totalorder %s308, %s309
      %p321 = scmp.eq.s32.totalorder %s42, 1
      %p322 = por %p320, %p321
      %p324 = scmp.ne.s32.totalorder %s309, %s323
      %p325 = scmp.eq.s32.totalorder %s42, 0
      %p326 = por %p324, %p325
      %s328 = sadd.s32 %s327, 1
      %p331 = scmp.eq.s32.totalorder %s36, 1
      %p332 = scmp.ne.s32.totalorder %s327, %s329
      %p333 = scmp.eq.s32.totalorder %s36, 0
      %p334 = por %p332, %p333
      %p335 = scmp.ne.s32.totalorder %s327, %s329
      %p336 = scmp.eq.s32.totalorder %s41, 1
      %p337 = por %p335, %p336
      %p338 = scmp.ne.s32.totalorder %s329, %s330
      %p339 = scmp.eq.s32.totalorder %s41, 0
      %p340 = por %p338, %p339
      %p341 = scmp.ne.s32.totalorder %s329, %s330
      %p342 = scmp.eq.s32.totalorder %s42, 1
      %p343 = por %p341, %p342
      %p345 = scmp.ne.s32.totalorder %s330, %s344
      %p346 = scmp.eq.s32.totalorder %s42, 0
      %p347 = por %p345, %p346
      %s349 = sadd.s32 %s348, 1
      %p352 = scmp.eq.s32.totalorder %s36, 1
      %p353 = scmp.ne.s32.totalorder %s348, %s350
      %p354 = scmp.eq.s32.totalorder %s36, 0
      %p355 = por %p353, %p354
      %p356 = scmp.ne.s32.totalorder %s348, %s350
      %p357 = scmp.eq.s32.totalorder %s41, 1
      %p358 = por %p356, %p357
      %p359 = scmp.ne.s32.totalorder %s350, %s351
      %p360 = scmp.eq.s32.totalorder %s41, 0
      %p361 = por %p359, %p360
      %p362 = scmp.ne.s32.totalorder %s350, %s351
      %p363 = scmp.eq.s32.totalorder %s42, 1
      %p364 = por %p362, %p363
      %p366 = scmp.ne.s32.totalorder %s351, %s365
      %p367 = scmp.eq.s32.totalorder %s42, 0
      %p368 = por %p366, %p367
      %s370 = sadd.s32 %s369, 1
      %p373 = scmp.eq.s32.totalorder %s36, 1
      %p374 = scmp.ne.s32.totalorder %s369, %s371
      %p375 = scmp.eq.s32.totalorder %s36, 0
      %p376 = por %p374, %p375
      %p377 = scmp.ne.s32.totalorder %s369, %s371
      %p378 = scmp.eq.s32.totalorder %s41, 1
      %p379 = por %p377, %p378
      %p380 = scmp.ne.s32.totalorder %s371, %s372
      %p381 = scmp.eq.s32.totalorder %s41, 0
      %p382 = por %p380, %p381
      %p383 = scmp.ne.s32.totalorder %s371, %s372
      %p384 = scmp.eq.s32.totalorder %s42, 1
      %p385 = por %p383, %p384
      %p387 = scmp.ne.s32.totalorder %s372, %s386
      %p388 = scmp.eq.s32.totalorder %s42, 0
      %p389 = por %p387, %p388
      %s391 = sadd.s32 %s390, 1
      %p394 = scmp.eq.s32.totalorder %s36, 1
      %p395 = scmp.ne.s32.totalorder %s390, %s392
      %p396 = scmp.eq.s32.totalorder %s36, 0
      %p397 = por %p395, %p396
      %p398 = scmp.ne.s32.totalorder %s390, %s392
      %p399 = scmp.eq.s32.totalorder %s41, 1
      %p400 = por %p398, %p399
      %p401 = scmp.ne.s32.totalorder %s392, %s393
      %p402 = scmp.eq.s32.totalorder %s41, 0
      %p403 = por %p401, %p402
      %p404 = scmp.ne.s32.totalorder %s392, %s393
      %p405 = scmp.eq.s32.totalorder %s42, 1
      %p406 = por %p404, %p405
      %p408 = scmp.ne.s32.totalorder %s393, %s407
      %p409 = scmp.eq.s32.totalorder %s42, 0
      %p410 = por %p408, %p409
      %s412 = sadd.s32 %s411, 1
      %p415 = scmp.eq.s32.totalorder %s36, 1
      %p416 = scmp.ne.s32.totalorder %s411, %s413
      %p417 = scmp.eq.s32.totalorder %s36, 0
      %p418 = por %p416, %p417
      %p419 = scmp.ne.s32.totalorder %s411, %s413
      %p420 = scmp.eq.s32.totalorder %s41, 1
      %p421 = por %p419, %p420
      %p422 = scmp.ne.s32.totalorder %s413, %s414
      %p423 = scmp.eq.s32.totalorder %s41, 0
      %p424 = por %p422, %p423
      %p425 = scmp.ne.s32.totalorder %s413, %s414
      %p426 = scmp.eq.s32.totalorder %s42, 1
      %p427 = por %p425, %p426
      %p429 = scmp.ne.s32.totalorder %s414, %s428
      %p430 = scmp.eq.s32.totalorder %s42, 0
      %p431 = por %p429, %p430
      %s433 = sadd.s32 %s432, 1
      %p436 = scmp.eq.s32.totalorder %s36, 1
      %p437 = scmp.ne.s32.totalorder %s432, %s434
      %p438 = scmp.eq.s32.totalorder %s36, 0
      %p439 = por %p437, %p438
      %p440 = scmp.ne.s32.totalorder %s432, %s434
      %p441 = scmp.eq.s32.totalorder %s41, 1
      %p442 = por %p440, %p441
      %p443 = scmp.ne.s32.totalorder %s434, %s435
      %p444 = scmp.eq.s32.totalorder %s41, 0
      %p445 = por %p443, %p444
      %p446 = scmp.ne.s32.totalorder %s434, %s435
      %p447 = scmp.eq.s32.totalorder %s42, 1
      %p448 = por %p446, %p447
      %p450 = scmp.ne.s32.totalorder %s435, %s449
      %p451 = scmp.eq.s32.totalorder %s42, 0
      %p452 = por %p450, %p451
      %s454 = sadd.s32 %s453, 1
      %p457 = scmp.eq.s32.totalorder %s36, 1
      %p458 = scmp.ne.s32.totalorder %s453, %s455
      %p459 = scmp.eq.s32.totalorder %s36, 0
      %p460 = por %p458, %p459
      %p461 = scmp.ne.s32.totalorder %s453, %s455
      %p462 = scmp.eq.s32.totalorder %s41, 1
      %p463 = por %p461, %p462
      %p464 = scmp.ne.s32.totalorder %s455, %s456
      %p465 = scmp.eq.s32.totalorder %s41, 0
      %p466 = por %p464, %p465
      %p467 = scmp.ne.s32.totalorder %s455, %s456
      %p468 = scmp.eq.s32.totalorder %s42, 1
      %p469 = por %p467, %p468
      %p471 = scmp.ne.s32.totalorder %s456, %s470
      %p472 = scmp.eq.s32.totalorder %s42, 0
      %p473 = por %p471, %p472
      %s475 = sadd.s32 %s474, 1
      %p478 = scmp.eq.s32.totalorder %s36, 1
      %p479 = scmp.ne.s32.totalorder %s474, %s476
      %p480 = scmp.eq.s32.totalorder %s36, 0
      %p481 = por %p479, %p480
      %p482 = scmp.ne.s32.totalorder %s474, %s476
      %p483 = scmp.eq.s32.totalorder %s41, 1
      %p484 = por %p482, %p483
      %p485 = scmp.ne.s32.totalorder %s476, %s477
      %p486 = scmp.eq.s32.totalorder %s41, 0
      %p487 = por %p485, %p486
      %p488 = scmp.ne.s32.totalorder %s476, %s477
      %p489 = scmp.eq.s32.totalorder %s42, 1
      %p490 = por %p488, %p489
      %p492 = scmp.ne.s32.totalorder %s477, %s491
      %p493 = scmp.eq.s32.totalorder %s42, 0
      %p494 = por %p492, %p493
      %s496 = sadd.s32 %s495, 1
      %p499 = scmp.eq.s32.totalorder %s36, 1
      %p500 = scmp.ne.s32.totalorder %s495, %s497
      %p501 = scmp.eq.s32.totalorder %s36, 0
      %p502 = por %p500, %p501
      %p503 = scmp.ne.s32.totalorder %s495, %s497
      %p504 = scmp.eq.s32.totalorder %s41, 1
      %p505 = por %p503, %p504
      %p506 = scmp.ne.s32.totalorder %s497, %s498
      %p507 = scmp.eq.s32.totalorder %s41, 0
      %p508 = por %p506, %p507
      %p509 = scmp.ne.s32.totalorder %s497, %s498
      %p510 = scmp.eq.s32.totalorder %s42, 1
      %p511 = por %p509, %p510
      %p513 = scmp.ne.s32.totalorder %s498, %s512
      %p514 = scmp.eq.s32.totalorder %s42, 0
      %p515 = por %p513, %p514
      %s516 = ssub.s32 %s36, %s43
      %p517 = scmp.eq.s32.totalorder %s516, 0
      %s519 = sadd.s32 %s518, 1
      %s520 = scalar_select %p517, %s518, %s519
      %p523 = pneg %p517
      %p524 = scmp.eq.s32.totalorder %s36, 1
      %p525 = por %p523, %p524
      %p526 = scmp.ne.s32.totalorder %s518, %s521
      %p527 = scmp.eq.s32.totalorder %s36, 0
      %p528 = por %p526, %p527
      %p529 = scmp.ne.s32.totalorder %s518, %s521
      %p530 = scmp.eq.s32.totalorder %s41, 1
      %p531 = por %p529, %p530
      %p532 = scmp.ne.s32.totalorder %s521, %s522
      %p533 = scmp.eq.s32.totalorder %s41, 0
      %p534 = por %p532, %p533
      %p535 = scmp.ne.s32.totalorder %s521, %s522
      %p536 = scmp.eq.s32.totalorder %s42, 1
      %p537 = por %p535, %p536
      %p539 = scmp.ne.s32.totalorder %s522, %s538
      %p540 = scmp.eq.s32.totalorder %s42, 0
      %p541 = por %p539, %p540
      %p542 = scmp.le.s32.totalorder 1, %s36
      %p543 = scmp.lt.s32.totalorder %s36, 3
      %p544 = pnand %p542, %p543
      %p545 = pneg %p544
      // Predicated region
      $region9: #{tpu_custom_call.1} parent=5 // pred_check
        _
      $region10: #{tpu_custom_call.1} parent=5 // pred_check_branch
        %547 = sbr.rel (%p544) target = $region12
      $region11: #{tpu_custom_call.1} parent=5 // pred_region
        %s548 = ssub.s32 %s36, 1
        // Predicated region
        $region13: #{tpu_custom_call.1} parent=11 // pred_check
          %p549 = pneg %p109
        $region14: #{tpu_custom_call.1} parent=11 // pred_check_branch
          %551 = sbr.rel (%p549) target = $region16
        $region15: #{tpu_custom_call.1} parent=11 // pred_region
          _
        $region16: #{tpu_custom_call.1} parent=11 // pred_fallthru
          _
        // Predicated region
        $region17: #{tpu_custom_call.1} parent=11 // pred_check
          %p552 = pneg %p130
        $region18: #{tpu_custom_call.1} parent=11 // pred_check_branch
          %554 = sbr.rel (%p552) target = $region20
        $region19: #{tpu_custom_call.1} parent=11 // pred_region
          _
        $region20: #{tpu_custom_call.1} parent=11 // pred_fallthru
          _
        // Predicated region
        $region21: #{tpu_custom_call.1} parent=11 // pred_check
          %p555 = pneg %p151
        $region22: #{tpu_custom_call.1} parent=11 // pred_check_branch
          %557 = sbr.rel (%p555) target = $region24
        $region23: #{tpu_custom_call.1} parent=11 // pred_region
          _
        $region24: #{tpu_custom_call.1} parent=11 // pred_fallthru
          _
        // Predicated region
        $region25: #{tpu_custom_call.1} parent=11 // pred_check
          %p558 = pneg %p172
        $region26: #{tpu_custom_call.1} parent=11 // pred_check_branch
          %560 = sbr.rel (%p558) target = $region28
        $region27: #{tpu_custom_call.1} parent=11 // pred_region
          _
        $region28: #{tpu_custom_call.1} parent=11 // pred_fallthru
          _
        // Predicated region
        $region29: #{tpu_custom_call.1} parent=11 // pred_check
          %p561 = pneg %p193
        $region30: #{tpu_custom_call.1} parent=11 // pred_check_branch
          %563 = sbr.rel (%p561) target = $region32
        $region31: #{tpu_custom_call.1} parent=11 // pred_region
          _
        $region32: #{tpu_custom_call.1} parent=11 // pred_fallthru
          _
        // Predicated region
        $region33: #{tpu_custom_call.1} parent=11 // pred_check
          %p564 = pneg %p214
        $region34: #{tpu_custom_call.1} parent=11 // pred_check_branch
          %566 = sbr.rel (%p564) target = $region36
        $region35: #{tpu_custom_call.1} parent=11 // pred_region
          _
        $region36: #{tpu_custom_call.1} parent=11 // pred_fallthru
          _
        // Predicated region
        $region37: #{tpu_custom_call.1} parent=11 // pred_check
          %p567 = pneg %p235
        $region38: #{tpu_custom_call.1} parent=11 // pred_check_branch
          %569 = sbr.rel (%p567) target = $region40
        $region39: #{tpu_custom_call.1} parent=11 // pred_region
          _
        $region40: #{tpu_custom_call.1} parent=11 // pred_fallthru
          _
        // Predicated region
        $region41: #{tpu_custom_call.1} parent=11 // pred_check
          %p570 = pneg %p256
        $region42: #{tpu_custom_call.1} parent=11 // pred_check_branch
          %572 = sbr.rel (%p570) target = $region44
        $region43: #{tpu_custom_call.1} parent=11 // pred_region
          %574 = vsyncadd [#allocation6], 0
          %s576 = sshll.u32 %s9, 4
          %s577 = int_to_ptr.hbm [resolvable:$true] %s576
          %s578 = sshll.u32 [#allocation5], 4
          %s579 = int_to_ptr.vmem [resolvable:$true] %s578
          %581 = dma.hbm_to_vmem [thread:$0]  %s577, 16, %s579, [#allocation6]
        $region44: #{tpu_custom_call.1} parent=11 // pred_fallthru
          _
        // Predicated region
        $region45: #{tpu_custom_call.1} parent=11 // pred_check
          %p582 = pneg %p277
        $region46: #{tpu_custom_call.1} parent=11 // pred_check_branch
          %584 = sbr.rel (%p582) target = $region48
        $region47: #{tpu_custom_call.1} parent=11 // pred_region
          _
        $region48: #{tpu_custom_call.1} parent=11 // pred_fallthru
          _
        // Predicated region
        $region49: #{tpu_custom_call.1} parent=11 // pred_check
          %p585 = pneg %p298
        $region50: #{tpu_custom_call.1} parent=11 // pred_check_branch
          %587 = sbr.rel (%p585) target = $region52
        $region51: #{tpu_custom_call.1} parent=11 // pred_region
          _
        $region52: #{tpu_custom_call.1} parent=11 // pred_fallthru
          _
        // Predicated region
        $region53: #{tpu_custom_call.1} parent=11 // pred_check
          %p588 = pneg %p319
        $region54: #{tpu_custom_call.1} parent=11 // pred_check_branch
          %590 = sbr.rel (%p588) target = $region56
        $region55: #{tpu_custom_call.1} parent=11 // pred_region
          _
        $region56: #{tpu_custom_call.1} parent=11 // pred_fallthru
          _
        // Predicated region
        $region57: #{tpu_custom_call.1} parent=11 // pred_check
          %p591 = pneg %p340
        $region58: #{tpu_custom_call.1} parent=11 // pred_check_branch
          %593 = sbr.rel (%p591) target = $region60
        $region59: #{tpu_custom_call.1} parent=11 // pred_region
          _
        $region60: #{tpu_custom_call.1} parent=11 // pred_fallthru
          _
        // Predicated region
        $region61: #{tpu_custom_call.1} parent=11 // pred_check
          %p594 = pneg %p361
        $region62: #{tpu_custom_call.1} parent=11 // pred_check_branch
          %596 = sbr.rel (%p594) target = $region64
        $region63: #{tpu_custom_call.1} parent=11 // pred_region
          %598 = vsyncadd [#allocation6], 0
          %s599 = sshll.u32 %s14, 4
          %s600 = int_to_ptr.hbm [resolvable:$true] %s599
          %s601 = sshll.u32 [#allocation7], 4
          %s602 = int_to_ptr.vmem [resolvable:$true] %s601
          %607 = dma.hbm_to_vmem [thread:$0]  %s600, 4608, %s602, [#allocation6], 64, 64, 4
        $region64: #{tpu_custom_call.1} parent=11 // pred_fallthru
          _
        // Predicated region
        $region65: #{tpu_custom_call.1} parent=11 // pred_check
          %p608 = pneg %p382
        $region66: #{tpu_custom_call.1} parent=11 // pred_check_branch
          %610 = sbr.rel (%p608) target = $region68
        $region67: #{tpu_custom_call.1} parent=11 // pred_region
          _
        $region68: #{tpu_custom_call.1} parent=11 // pred_fallthru
          _
        // Predicated region
        $region69: #{tpu_custom_call.1} parent=11 // pred_check
          %p611 = pneg %p403
        $region70: #{tpu_custom_call.1} parent=11 // pred_check_branch
          %613 = sbr.rel (%p611) target = $region72
        $region71: #{tpu_custom_call.1} parent=11 // pred_region
          _
        $region72: #{tpu_custom_call.1} parent=11 // pred_fallthru
          _
        // Predicated region
        $region73: #{tpu_custom_call.1} parent=11 // pred_check
          %p614 = pneg %p424
        $region74: #{tpu_custom_call.1} parent=11 // pred_check_branch
          %616 = sbr.rel (%p614) target = $region76
        $region75: #{tpu_custom_call.1} parent=11 // pred_region
          _
        $region76: #{tpu_custom_call.1} parent=11 // pred_fallthru
          _
        // Predicated region
        $region77: #{tpu_custom_call.1} parent=11 // pred_check
          %p617 = pneg %p445
        $region78: #{tpu_custom_call.1} parent=11 // pred_check_branch
          %619 = sbr.rel (%p617) target = $region80
        $region79: #{tpu_custom_call.1} parent=11 // pred_region
          _
        $region80: #{tpu_custom_call.1} parent=11 // pred_fallthru
          _
        // Predicated region
        $region81: #{tpu_custom_call.1} parent=11 // pred_check
          %p620 = pneg %p466
        $region82: #{tpu_custom_call.1} parent=11 // pred_check_branch
          %622 = sbr.rel (%p620) target = $region84
        $region83: #{tpu_custom_call.1} parent=11 // pred_region
          _
        $region84: #{tpu_custom_call.1} parent=11 // pred_fallthru
          _
        // Predicated region
        $region85: #{tpu_custom_call.1} parent=11 // pred_check
          %p623 = pneg %p487
        $region86: #{tpu_custom_call.1} parent=11 // pred_check_branch
          %625 = sbr.rel (%p623) target = $region88
        $region87: #{tpu_custom_call.1} parent=11 // pred_region
          %627 = vsyncadd [#allocation9], 0
          %s628 = sshll.u32 %s20, 4
          %s629 = int_to_ptr.hbm [resolvable:$true] %s628
          %s630 = sshll.u32 [#allocation8], 4
          %s631 = int_to_ptr.vmem [resolvable:$true] %s630
          %636 = dma.hbm_to_vmem [thread:$0]  %s629, 512, %s631, [#allocation9], 64, 64, 4
        $region88: #{tpu_custom_call.1} parent=11 // pred_fallthru
          _
        // Predicated region
        $region89: #{tpu_custom_call.1} parent=11 // pred_check
          %p637 = pneg %p508
        $region90: #{tpu_custom_call.1} parent=11 // pred_check_branch
          %639 = sbr.rel (%p637) target = $region92
        $region91: #{tpu_custom_call.1} parent=11 // pred_region
          _
        $region92: #{tpu_custom_call.1} parent=11 // pred_fallthru
          _
      $region12: #{tpu_custom_call.1} parent=5 // pred_fallthru
        _
      %p640 = scmp.lt.s32.totalorder %s36, 2
      // Predicated region
      $region93: #{tpu_custom_call.1} parent=5 // pred_check
        %p641 = pneg %p640
      $region94: #{tpu_custom_call.1} parent=5 // pred_check_branch
        %643 = sbr.rel (%p641) target = $region96
      $region95: #{tpu_custom_call.1} parent=5 // pred_region
        // Predicated region
        $region97: #{tpu_custom_call.1} parent=95 // pred_check
          %p644 = pneg %p56
        $region98: #{tpu_custom_call.1} parent=95 // pred_check_branch
          %646 = sbr.rel (%p644) target = $region100
        $region99: #{tpu_custom_call.1} parent=95 // pred_region
          %p647 = scmp.lt.s32.totalorder %s36, 1
          %s648 = scalar_select %p647, %s36, 1
          %s649 = smul.addr %s648, 8
          %s650 = smul.addr %s649, 8
          %s651 = scalar_lea.vmem %s0, %s650
        $region100: #{tpu_custom_call.1} parent=95 // pred_fallthru
          _
        // Predicated region
        $region101: #{tpu_custom_call.1} parent=95 // pred_check
          %p652 = pneg %p82
        $region102: #{tpu_custom_call.1} parent=95 // pred_check_branch
          %654 = sbr.rel (%p652) target = $region104
        $region103: #{tpu_custom_call.1} parent=95 // pred_region
          %s655 = sand.u32 %s72, 1
          %s656 = scalar_lea.sflag [#allocation3], %s655
          %s657 = sand.u32 %s72, 1
          %s658 = scalar_lea.vmem [#allocation2], %s657
          %660 = vsyncadd %s656, 0
          %s661 = scalar_lea.hbm %s1, %s36
          %s663 = sshll.u32 %s661, 4
          %s664 = int_to_ptr.hbm [resolvable:$true] %s663
          %s665 = sshll.u32 %s658, 4
          %s666 = int_to_ptr.vmem [resolvable:$true] %s665
          %668 = dma.hbm_to_vmem [thread:$0]  %s664, 16, %s666, %s656
        $region104: #{tpu_custom_call.1} parent=95 // pred_fallthru
          _
      $region96: #{tpu_custom_call.1} parent=5 // pred_fallthru
        _
      %p669 = scmp.le.s32.totalorder 1, %s36
      %p670 = scmp.lt.s32.totalorder %s36, 3
      %p671 = pnand %p669, %p670
      %p672 = pneg %p671
      // Predicated region
      $region105: #{tpu_custom_call.1} parent=5 // pred_check
        _
      $region106: #{tpu_custom_call.1} parent=5 // pred_check_branch
        %674 = sbr.rel (%p671) target = $region108
      $region107: #{tpu_custom_call.1} parent=5 // pred_region
        %s675 = ssub.s32 %s36, 1
        %s676 = sand.u32 %s75, 1
        %s677 = scalar_lea.sflag [#allocation3], %s676
        %s678 = sand.u32 %s75, 1
        %s679 = scalar_lea.vmem [#allocation2], %s678
        // Predicated region
        $region109: #{tpu_custom_call.1} parent=107 // pred_check
          %p680 = pneg %p88
        $region110: #{tpu_custom_call.1} parent=107 // pred_check_branch
          %682 = sbr.rel (%p680) target = $region112
        $region111: #{tpu_custom_call.1} parent=107 // pred_region
          %684 = dma.done %s677, 16
        $region112: #{tpu_custom_call.1} parent=107 // pred_fallthru
          _
        // Predicated region
        $region113: #{tpu_custom_call.1} parent=107 // pred_check
          %p685 = pneg %p256
        $region114: #{tpu_custom_call.1} parent=107 // pred_check_branch
          %687 = sbr.rel (%p685) target = $region116
        $region115: #{tpu_custom_call.1} parent=107 // pred_region
          %689 = dma.done [#allocation6], 16
        $region116: #{tpu_custom_call.1} parent=107 // pred_fallthru
          _
        // Predicated region
        $region117: #{tpu_custom_call.1} parent=107 // pred_check
          %p690 = pneg %p361
        $region118: #{tpu_custom_call.1} parent=107 // pred_check_branch
          %692 = sbr.rel (%p690) target = $region120
        $region119: #{tpu_custom_call.1} parent=107 // pred_region
          %694 = dma.done [#allocation6], 4608
        $region120: #{tpu_custom_call.1} parent=107 // pred_fallthru
          _
        // Predicated region
        $region121: #{tpu_custom_call.1} parent=107 // pred_check
          %p695 = pneg %p487
        $region122: #{tpu_custom_call.1} parent=107 // pred_check_branch
          %697 = sbr.rel (%p695) target = $region124
        $region123: #{tpu_custom_call.1} parent=107 // pred_region
          %699 = dma.done [#allocation9], 512
        $region124: #{tpu_custom_call.1} parent=107 // pred_fallthru
          _
        %p700 = scmp.lt.s32.totalorder %s41, 1
        %s701 = scalar_select %p700, %s41, 1
        %s702 = smul.addr %s701, 8
        %s703 = smul.addr %s702, 8
        %s704 = scalar_lea.vmem %s0, %s703
        %p705 = pneg %p62
        %p706 = pneg %p59
        %s707 = sand.u32 %s75, 1
        %s708 = scalar_lea.sflag [#allocation3], %s707
        %s709 = sand.u32 %s75, 1
        %s710 = scalar_lea.vmem [#allocation2], %s709
        %p711 = pneg %p88
        %p712 = pneg %p85
        %p713 = pneg %p109
        %p714 = pneg %p106
        %p715 = pneg %p130
        %p716 = pneg %p127
        %p717 = pneg %p151
        %p718 = pneg %p148
        %p719 = pneg %p172
        %p720 = pneg %p169
        %p721 = pneg %p193
        %p722 = pneg %p190
        %p723 = pneg %p214
        %p724 = pneg %p211
        %p725 = pneg %p235
        %p726 = pneg %p232
        %p727 = pneg %p256
        %p728 = pneg %p253
        %p729 = pneg %p277
        %p730 = pneg %p274
        %p731 = pneg %p298
        %p732 = pneg %p295
        %p733 = pneg %p319
        %p734 = pneg %p316
        %p735 = pneg %p340
        %p736 = pneg %p337
        %p737 = pneg %p361
        %p738 = pneg %p358
        %p739 = pneg %p382
        %p740 = pneg %p379
        %p741 = pneg %p403
        %p742 = pneg %p400
        %p743 = pneg %p424
        %p744 = pneg %p421
        %p745 = pneg %p445
        %p746 = pneg %p442
        %p747 = pneg %p466
        %p748 = pneg %p463
        %p749 = pneg %p487
        %p750 = pneg %p484
        %p751 = pneg %p508
        %p752 = pneg %p505
        %p753 = pneg %p534
        %p754 = pneg %p531
        %s755 = sand.u32 %s521, 1
        %s756 = scalar_lea.sflag [#allocation4], %s755
        %s757 = sand.u32 %s521, 1
        %s758 = smul.addr %s757, 64
        %s759 = scalar_lea.vmem [#allocation10], %s758
        %p760 = scmp.lt.s32.totalorder %s41, 1
        %s761 = scalar_select %p760, %s41, 1
        %s762 = smul.addr %s761, 8
        %s763 = smul.addr %s762, 8
        %s764 = scalar_lea.vmem %s0, %s763
        %v766 = vld [vmem:[%s764] sm:$0xff]
        %v767 = vld [vmem:[%s764 + $0x8] sm:$0xff]
        %v768 = vld [vmem:[%s764 + $0x10] sm:$0xff]
        %v769 = vld [vmem:[%s764 + $0x18] sm:$0xff]
        %v770 = vld [vmem:[%s764 + $0x20] sm:$0xff]
        %v771 = vld [vmem:[%s764 + $0x28] sm:$0xff]
        %v772 = vld [vmem:[%s764 + $0x30] sm:$0xff]
        %v773 = vld [vmem:[%s764 + $0x38] sm:$0xff]
        %v774 = vld [vmem:[%s2] sm:$0xff]
        %v775 = vld [vmem:[%s2 + $0x8] sm:$0xff]
        %v776 = vld [vmem:[%s2 + $0x10] sm:$0xff]
        %v777 = vld [vmem:[%s2 + $0x18] sm:$0xff]
        %v778 = vld [vmem:[%s2 + $0x20] sm:$0xff]
        %v779 = vld [vmem:[%s2 + $0x28] sm:$0xff]
        %v780 = vld [vmem:[%s2 + $0x30] sm:$0xff]
        %v781 = vld [vmem:[%s2 + $0x38] sm:$0xff]
        %v782 = vld [vmem:[%s3] sm:$0xff]
        %v783 = vld [vmem:[%s3 + $0x8] sm:$0xff]
        %v784 = vld [vmem:[%s3 + $0x10] sm:$0xff]
        %v785 = vld [vmem:[%s3 + $0x18] sm:$0xff]
        %v786 = vld [vmem:[%s3 + $0x20] sm:$0xff]
        %v787 = vld [vmem:[%s3 + $0x28] sm:$0xff]
        %v788 = vld [vmem:[%s3 + $0x30] sm:$0xff]
        %v789 = vld [vmem:[%s3 + $0x38] sm:$0xff]
        %v790 = vld [vmem:[%s4] sm:$0x1]
        %v791 = vld [vmem:[%s5] sm:$0x1]
        %v792 = vld [vmem:[%s6] sm:$0xff]
        %v793 = vld [vmem:[%s6 + $0x8] sm:$0xff]
        %v794 = vld [vmem:[%s6 + $0x10] sm:$0xff]
        %v795 = vld [vmem:[%s6 + $0x18] sm:$0xff]
        %v796 = vld [vmem:[%s7] sm:$0xff]
        %v797 = vld [vmem:[%s7 + $0x8] sm:$0xff]
        %v798 = vld [vmem:[%s7 + $0x10] sm:$0xff]
        %v799 = vld [vmem:[%s7 + $0x18] sm:$0xff]
        %vm800 = vcmask 261120
        %v801 = vsel %vm800, %v766, 0.0
        %v802 = vsel %vm800, %v767, 0.0
        %v803 = vadd.f32 %v801, %v802
        %v804 = vsel %vm800, %v768, 0.0
        %v805 = vadd.f32 %v803, %v804
        %v806 = vsel %vm800, %v769, 0.0
        %v807 = vadd.f32 %v805, %v806
        %v808 = vsel %vm800, %v770, 0.0
        %v809 = vadd.f32 %v807, %v808
        %v810 = vsel %vm800, %v771, 0.0
        %v811 = vadd.f32 %v809, %v810
        %v812 = vsel %vm800, %v772, 0.0
        %v813 = vadd.f32 %v811, %v812
        %v814 = vsel %vm800, %v773, 0.0
        %v815 = vadd.f32 %v813, %v814
        %v816 = vrot.slane %v815, 4
        %v817 = vadd.f32 %v815, %v816
        %v818 = vrot.slane %v817, 2
        %v819 = vadd.f32 %v817, %v818
        %v820 = vrot.slane %v819, 1
        %v821 = vadd.f32 %v819, %v820
        %v823 = vsel %vm800, %v821, 0
        %825 = vmatpush.msra.mxu0 0.0
        %826 = vmatpush.msra.mxu0 0.0
        %827 = vmatpush.msra.mxu0 0.0
        %828 = vmatpush.msra.mxu0 0.0
        %829 = vmatpush.msra.mxu0 0.0
        %830 = vmatpush.msra.mxu0 0.0
        %831 = vmatpush.msra.mxu0 0.0
        %832 = vmatpush.msra.mxu0 0.0
        %833 = vmatpush.msra.mxu0 0.0
        %834 = vmatpush.msra.mxu0 0.0
        %835 = vmatpush.msra.mxu0 0.0
        %836 = vmatpush.msra.mxu0 0.0
        %837 = vmatpush.msra.mxu0 %v795
        %838 = vmatpush.msra.mxu0 %v794
        %839 = vmatpush.msra.mxu0 %v793
        %840 = vmatpush.msra.mxu0 %v792
        %841 = vmatmul.f32.gmra.mxu0 %v823
        %v842 = vpop.f32.mrf.mxu0
        %v843 = vadd.f32 0.0, %v842
        %844 = vdwg.mxu0
        %v845 = vmul.f32 %v843, 0.015625
        %v847 = vsel %vm800, %v845, 0
        %849 = vmatpush.msra.mxu0 0.0
        %850 = vmatpush.msra.mxu0 0.0
        %851 = vmatpush.msra.mxu0 0.0
        %852 = vmatpush.msra.mxu0 0.0
        %853 = vmatpush.msra.mxu0 0.0
        %854 = vmatpush.msra.mxu0 0.0
        %855 = vmatpush.msra.mxu0 0.0
        %856 = vmatpush.msra.mxu0 0.0
        %857 = vmatpush.msra.mxu0 0.0
        %858 = vmatpush.msra.mxu0 0.0
        %859 = vmatpush.msra.mxu0 0.0
        %860 = vmatpush.msra.mxu0 0.0
        %861 = vmatpush.msra.mxu0 %v799
        %862 = vmatpush.msra.mxu0 %v798
        %863 = vmatpush.msra.mxu0 %v797
        %864 = vmatpush.msra.mxu0 %v796
        %865 = vmatmul.f32.gmra.mxu0 %v847
        %v866 = vpop.f32.mrf.mxu0
        %v867 = vadd.f32 0.0, %v866
        %868 = vdwg.mxu0
        %v869 = vperm.slane %v867, 0
        %v870 = vsub.f32 %v766, %v869
        %v871 = vsub.f32 %v767, %v869
        %v872 = vsub.f32 %v768, %v869
        %v873 = vsub.f32 %v769, %v869
        %v874 = vsub.f32 %v770, %v869
        %v875 = vsub.f32 %v771, %v869
        %v876 = vsub.f32 %v772, %v869
        %v877 = vsub.f32 %v773, %v869
        %v878 = vmul.f32 %v870, %v870
        %v879 = vmul.f32 %v871, %v871
        %v880 = vmul.f32 %v872, %v872
        %v881 = vmul.f32 %v873, %v873
        %v882 = vmul.f32 %v874, %v874
        %v883 = vmul.f32 %v875, %v875
        %v884 = vmul.f32 %v876, %v876
        %v885 = vmul.f32 %v877, %v877
        %v886 = vsel %vm800, %v878, 0.0
        %v887 = vsel %vm800, %v879, 0.0
        %v888 = vadd.f32 %v886, %v887
        %v889 = vsel %vm800, %v880, 0.0
        %v890 = vadd.f32 %v888, %v889
        %v891 = vsel %vm800, %v881, 0.0
        %v892 = vadd.f32 %v890, %v891
        %v893 = vsel %vm800, %v882, 0.0
        %v894 = vadd.f32 %v892, %v893
        %v895 = vsel %vm800, %v883, 0.0
        %v896 = vadd.f32 %v894, %v895
        %v897 = vsel %vm800, %v884, 0.0
        %v898 = vadd.f32 %v896, %v897
        %v899 = vsel %vm800, %v885, 0.0
        %v900 = vadd.f32 %v898, %v899
        %v901 = vrot.slane %v900, 4
        %v902 = vadd.f32 %v900, %v901
        %v903 = vrot.slane %v902, 2
        %v904 = vadd.f32 %v902, %v903
        %v905 = vrot.slane %v904, 1
        %v906 = vadd.f32 %v904, %v905
        %v908 = vsel %vm800, %v906, 0
        %910 = vmatpush.msra.mxu0 0.0
        %911 = vmatpush.msra.mxu0 0.0
        %912 = vmatpush.msra.mxu0 0.0
        %913 = vmatpush.msra.mxu0 0.0
        %914 = vmatpush.msra.mxu0 0.0
        %915 = vmatpush.msra.mxu0 0.0
        %916 = vmatpush.msra.mxu0 0.0
        %917 = vmatpush.msra.mxu0 0.0
        %918 = vmatpush.msra.mxu0 0.0
        %919 = vmatpush.msra.mxu0 0.0
        %920 = vmatpush.msra.mxu0 0.0
        %921 = vmatpush.msra.mxu0 0.0
        %922 = vmatpush.msra.mxu0 %v795
        %923 = vmatpush.msra.mxu0 %v794
        %924 = vmatpush.msra.mxu0 %v793
        %925 = vmatpush.msra.mxu0 %v792
        %926 = vmatmul.f32.gmra.mxu0 %v908
        %v927 = vpop.f32.mrf.mxu0
        %v928 = vadd.f32 0.0, %v927
        %929 = vdwg.mxu0
        %v930 = vmul.f32 %v928, 0.015625
        %v931 = vadd.f32 %v930, 1e-05
        %v932 = vrsqrt.pop %v931
        %v933 = vmul.f32 %v932, %v931
        %v934 = vmul.f32 %v933, %v932
        %v935 = vmul.f32 0.5, %v934
        %v936 = vsub.f32 1.5, %v935
        %v937 = vmul.f32 %v932, %v936
        %vm938 = vweird.f32 %v931
        %vm939 = vweird.f32 %v932
        %vm940 = vmor %vm938, %vm939
        %v941 = vsel %vm940, %v932, %v937
        %v943 = vsel %vm800, %v941, 0
        %945 = vmatpush.msra.mxu0 0.0
        %946 = vmatpush.msra.mxu0 0.0
        %947 = vmatpush.msra.mxu0 0.0
        %948 = vmatpush.msra.mxu0 0.0
        %949 = vmatpush.msra.mxu0 0.0
        %950 = vmatpush.msra.mxu0 0.0
        %951 = vmatpush.msra.mxu0 0.0
        %952 = vmatpush.msra.mxu0 0.0
        %953 = vmatpush.msra.mxu0 0.0
        %954 = vmatpush.msra.mxu0 0.0
        %955 = vmatpush.msra.mxu0 0.0
        %956 = vmatpush.msra.mxu0 0.0
        %957 = vmatpush.msra.mxu0 %v799
        %958 = vmatpush.msra.mxu0 %v798
        %959 = vmatpush.msra.mxu0 %v797
        %960 = vmatpush.msra.mxu0 %v796
        %961 = vmatmul.f32.gmra.mxu0 %v943
        %v962 = vpop.f32.mrf.mxu0
        %v963 = vadd.f32 0.0, %v962
        %964 = vdwg.mxu0
        %v965 = vperm.slane %v963, 0
        %v966 = vmul.f32 %v870, %v965
        %v967 = vmul.f32 %v871, %v965
        %v968 = vmul.f32 %v872, %v965
        %v969 = vmul.f32 %v873, %v965
        %v970 = vmul.f32 %v874, %v965
        %v971 = vmul.f32 %v875, %v965
        %v972 = vmul.f32 %v876, %v965
        %v973 = vmul.f32 %v877, %v965
        %v975 = vperm.slane %v790, 0
        %v977 = vmul.f32 %v966, %v975
        %v978 = vmul.f32 %v967, %v975
        %v979 = vmul.f32 %v968, %v975
        %v980 = vmul.f32 %v969, %v975
        %v981 = vmul.f32 %v970, %v975
        %v982 = vmul.f32 %v971, %v975
        %v983 = vmul.f32 %v972, %v975
        %v984 = vmul.f32 %v973, %v975
        %v986 = vperm.slane %v791, 0
        %v988 = vadd.f32 %v977, %v986
        %v989 = vadd.f32 %v978, %v986
        %v990 = vadd.f32 %v979, %v986
        %v991 = vadd.f32 %v980, %v986
        %v992 = vadd.f32 %v981, %v986
        %v993 = vadd.f32 %v982, %v986
        %v994 = vadd.f32 %v983, %v986
        %v995 = vadd.f32 %v984, %v986
        %v996 = vxor.u32 %v988, 2147483648
        %v997 = vxor.u32 %v989, 2147483648
        %v998 = vxor.u32 %v990, 2147483648
        %v999 = vxor.u32 %v991, 2147483648
        %v1000 = vxor.u32 %v992, 2147483648
        %v1001 = vxor.u32 %v993, 2147483648
        %v1002 = vxor.u32 %v994, 2147483648
        %v1003 = vxor.u32 %v995, 2147483648
        %v1004 = vmul.f32 %v996, 1.442695
        %v1005 = vpow.pop %v1004
        %v1006 = vmul.f32 %v997, 1.442695
        %v1007 = vpow.pop %v1006
        %v1008 = vmul.f32 %v998, 1.442695
        %v1009 = vpow.pop %v1008
        %v1010 = vmul.f32 %v999, 1.442695
        %v1011 = vpow.pop %v1010
        %v1012 = vmul.f32 %v1000, 1.442695
        %v1013 = vpow.pop %v1012
        %v1014 = vmul.f32 %v1001, 1.442695
        %v1015 = vpow.pop %v1014
        %v1016 = vmul.f32 %v1002, 1.442695
        %v1017 = vpow.pop %v1016
        %v1018 = vmul.f32 %v1003, 1.442695
        %v1019 = vpow.pop %v1018
        %v1020 = vadd.f32 %v1005, 1.0
        %v1021 = vadd.f32 %v1007, 1.0
        %v1022 = vadd.f32 %v1009, 1.0
        %v1023 = vadd.f32 %v1011, 1.0
        %v1024 = vadd.f32 %v1013, 1.0
        %v1025 = vadd.f32 %v1015, 1.0
        %v1026 = vadd.f32 %v1017, 1.0
        %v1027 = vadd.f32 %v1019, 1.0
        %v1028 = vrcp.pop %v1020
        %v1029 = vmul.f32 %v1020, %v1028
        %v1030 = vsub.f32 1.0, %v1029
        %v1031 = vmul.f32 %v1028, %v1030
        %v1032 = vadd.f32 %v1028, %v1031
        %vm1033 = vweird.f32 %v1020
        %vm1034 = vweird.f32 %v1028
        %vm1035 = vmor %vm1033, %vm1034
        %v1036 = vsel %vm1035, %v1028, %v1032
        %v1037 = vand.u32 2147483647, %v1020
        %vm1038 = vcmp.eq.f32.partialorder %v1037, 8.507059e+37
        %v1039 = vand.u32 %v1020, 2147483648
        %v1040 = vor.u32 1.1754944e-38, %v1039
        %v1041 = vsel %vm1038, %v1040, %v1036
        %v1042 = vmul.f32 1.0, %v1041
        %v1043 = vrcp.pop %v1021
        %v1044 = vmul.f32 %v1021, %v1043
        %v1045 = vsub.f32 1.0, %v1044
        %v1046 = vmul.f32 %v1043, %v1045
        %v1047 = vadd.f32 %v1043, %v1046
        %vm1048 = vweird.f32 %v1021
        %vm1049 = vweird.f32 %v1043
        %vm1050 = vmor %vm1048, %vm1049
        %v1051 = vsel %vm1050, %v1043, %v1047
        %v1052 = vand.u32 2147483647, %v1021
        %vm1053 = vcmp.eq.f32.partialorder %v1052, 8.507059e+37
        %v1054 = vand.u32 %v1021, 2147483648
        %v1055 = vor.u32 1.1754944e-38, %v1054
        %v1056 = vsel %vm1053, %v1055, %v1051
        %v1057 = vmul.f32 1.0, %v1056
        %v1058 = vrcp.pop %v1022
        %v1059 = vmul.f32 %v1022, %v1058
        %v1060 = vsub.f32 1.0, %v1059
        %v1061 = vmul.f32 %v1058, %v1060
        %v1062 = vadd.f32 %v1058, %v1061
        %vm1063 = vweird.f32 %v1022
        %vm1064 = vweird.f32 %v1058
        %vm1065 = vmor %vm1063, %vm1064
        %v1066 = vsel %vm1065, %v1058, %v1062
        %v1067 = vand.u32 2147483647, %v1022
        %vm1068 = vcmp.eq.f32.partialorder %v1067, 8.507059e+37
        %v1069 = vand.u32 %v1022, 2147483648
        %v1070 = vor.u32 1.1754944e-38, %v1069
        %v1071 = vsel %vm1068, %v1070, %v1066
        %v1072 = vmul.f32 1.0, %v1071
        %v1073 = vrcp.pop %v1023
        %v1074 = vmul.f32 %v1023, %v1073
        %v1075 = vsub.f32 1.0, %v1074
        %v1076 = vmul.f32 %v1073, %v1075
        %v1077 = vadd.f32 %v1073, %v1076
        %vm1078 = vweird.f32 %v1023
        %vm1079 = vweird.f32 %v1073
        %vm1080 = vmor %vm1078, %vm1079
        %v1081 = vsel %vm1080, %v1073, %v1077
        %v1082 = vand.u32 2147483647, %v1023
        %vm1083 = vcmp.eq.f32.partialorder %v1082, 8.507059e+37
        %v1084 = vand.u32 %v1023, 2147483648
        %v1085 = vor.u32 1.1754944e-38, %v1084
        %v1086 = vsel %vm1083, %v1085, %v1081
        %v1087 = vmul.f32 1.0, %v1086
        %v1088 = vrcp.pop %v1024
        %v1089 = vmul.f32 %v1024, %v1088
        %v1090 = vsub.f32 1.0, %v1089
        %v1091 = vmul.f32 %v1088, %v1090
        %v1092 = vadd.f32 %v1088, %v1091
        %vm1093 = vweird.f32 %v1024
        %vm1094 = vweird.f32 %v1088
        %vm1095 = vmor %vm1093, %vm1094
        %v1096 = vsel %vm1095, %v1088, %v1092
        %v1097 = vand.u32 2147483647, %v1024
        %vm1098 = vcmp.eq.f32.partialorder %v1097, 8.507059e+37
        %v1099 = vand.u32 %v1024, 2147483648
        %v1100 = vor.u32 1.1754944e-38, %v1099
        %v1101 = vsel %vm1098, %v1100, %v1096
        %v1102 = vmul.f32 1.0, %v1101
        %v1103 = vrcp.pop %v1025
        %v1104 = vmul.f32 %v1025, %v1103
        %v1105 = vsub.f32 1.0, %v1104
        %v1106 = vmul.f32 %v1103, %v1105
        %v1107 = vadd.f32 %v1103, %v1106
        %vm1108 = vweird.f32 %v1025
        %vm1109 = vweird.f32 %v1103
        %vm1110 = vmor %vm1108, %vm1109
        %v1111 = vsel %vm1110, %v1103, %v1107
        %v1112 = vand.u32 2147483647, %v1025
        %vm1113 = vcmp.eq.f32.partialorder %v1112, 8.507059e+37
        %v1114 = vand.u32 %v1025, 2147483648
        %v1115 = vor.u32 1.1754944e-38, %v1114
        %v1116 = vsel %vm1113, %v1115, %v1111
        %v1117 = vmul.f32 1.0, %v1116
        %v1118 = vrcp.pop %v1026
        %v1119 = vmul.f32 %v1026, %v1118
        %v1120 = vsub.f32 1.0, %v1119
        %v1121 = vmul.f32 %v1118, %v1120
        %v1122 = vadd.f32 %v1118, %v1121
        %vm1123 = vweird.f32 %v1026
        %vm1124 = vweird.f32 %v1118
        %vm1125 = vmor %vm1123, %vm1124
        %v1126 = vsel %vm1125, %v1118, %v1122
        %v1127 = vand.u32 2147483647, %v1026
        %vm1128 = vcmp.eq.f32.partialorder %v1127, 8.507059e+37
        %v1129 = vand.u32 %v1026, 2147483648
        %v1130 = vor.u32 1.1754944e-38, %v1129
        %v1131 = vsel %vm1128, %v1130, %v1126
        %v1132 = vmul.f32 1.0, %v1131
        %v1133 = vrcp.pop %v1027
        %v1134 = vmul.f32 %v1027, %v1133
        %v1135 = vsub.f32 1.0, %v1134
        %v1136 = vmul.f32 %v1133, %v1135
        %v1137 = vadd.f32 %v1133, %v1136
        %vm1138 = vweird.f32 %v1027
        %vm1139 = vweird.f32 %v1133
        %vm1140 = vmor %vm1138, %vm1139
        %v1141 = vsel %vm1140, %v1133, %v1137
        %v1142 = vand.u32 2147483647, %v1027
        %vm1143 = vcmp.eq.f32.partialorder %v1142, 8.507059e+37
        %v1144 = vand.u32 %v1027, 2147483648
        %v1145 = vor.u32 1.1754944e-38, %v1144
        %v1146 = vsel %vm1143, %v1145, %v1141
        %v1147 = vmul.f32 1.0, %v1146
        %1149 = vset.pattern.permute.xlu0 0
        %1150 = vperm.xlu0 %1149, %v774
        %v1151 = vpop.permute.xlu0 %1150
        %1153 = vset.pattern.permute.xlu0 0
        %1154 = vperm.xlu0 %1153, %v775
        %v1155 = vpop.permute.xlu0 %1154
        %1157 = vset.pattern.permute.xlu0 0
        %1158 = vperm.xlu0 %1157, %v776
        %v1159 = vpop.permute.xlu0 %1158
        %1161 = vset.pattern.permute.xlu0 0
        %1162 = vperm.xlu0 %1161, %v777
        %v1163 = vpop.permute.xlu0 %1162
        %1165 = vset.pattern.permute.xlu0 0
        %1166 = vperm.xlu0 %1165, %v778
        %v1167 = vpop.permute.xlu0 %1166
        %1169 = vset.pattern.permute.xlu0 0
        %1170 = vperm.xlu0 %1169, %v779
        %v1171 = vpop.permute.xlu0 %1170
        %1173 = vset.pattern.permute.xlu0 0
        %1174 = vperm.xlu0 %1173, %v780
        %v1175 = vpop.permute.xlu0 %1174
        %1177 = vset.pattern.permute.xlu0 0
        %1178 = vperm.xlu0 %1177, %v781
        %v1179 = vpop.permute.xlu0 %1178
        %vm1180 = vcmask 1046528
        %v1181 = vrot.slane %v1151, 1
        %v1182 = vrot.slane %v1155, 1
        %v1183 = vsel %vm1180, %v1181, %v1182
        %v1184 = vrot.slane %v1159, 1
        %v1185 = vsel %vm1180, %v1182, %v1184
        %v1186 = vrot.slane %v1163, 1
        %v1187 = vsel %vm1180, %v1184, %v1186
        %v1188 = vrot.slane %v1167, 1
        %v1189 = vsel %vm1180, %v1186, %v1188
        %v1190 = vrot.slane %v1171, 1
        %v1191 = vsel %vm1180, %v1188, %v1190
        %v1192 = vrot.slane %v1175, 1
        %v1193 = vsel %vm1180, %v1190, %v1192
        %v1194 = vrot.slane %v1179, 1
        %v1195 = vsel %vm1180, %v1192, %v1194
        %v1205 = vmul.f32 %v1181, 0.0
        %v1206 = vmul.f32 %v1183, 0.0
        %v1207 = vmul.f32 %v1042, %v1185
        %v1208 = vmul.f32 %v1057, %v1187
        %v1209 = vmul.f32 %v1072, %v1189
        %v1210 = vmul.f32 %v1087, %v1191
        %v1211 = vmul.f32 %v1102, %v1193
        %v1212 = vmul.f32 %v1117, %v1195
        %v1213 = vmul.f32 %v1132, %v1194
        %v1214 = vpack.c.bf16 %v1206, %v1205
        %v1215 = vpack.c.bf16 %v1208, %v1207
        %v1216 = vpack.c.bf16 %v1210, %v1209
        %v1217 = vpack.c.bf16 %v1212, %v1211
        %v1218 = vpack.c.bf16 %v1213, %v1213
        %v1219 = vld [vmem:[%s8] sm:$0xf]
        %v1220 = vld [vmem:[%s8 + $0x4] sm:$0xf]
        %v1221 = vld [vmem:[%s8 + $0x8] sm:$0xf]
        %v1222 = vld [vmem:[%s8 + $0xc] sm:$0xf]
        %v1223 = vpack.c.bf16 %v1042, 0.0
        %v1224 = vpack.c.bf16 %v1072, %v1057
        %v1225 = vpack.c.bf16 %v1102, %v1087
        %v1226 = vpack.c.bf16 %v1132, %v1117
        %s1227 = scalar_lea.vmem %s8, 16
        %v1228 = vld [vmem:[%s1227] sm:$0xf]
        %v1229 = vld [vmem:[%s1227 + $0x4] sm:$0xf]
        %v1230 = vld [vmem:[%s1227 + $0x8] sm:$0xf]
        %v1231 = vld [vmem:[%s1227 + $0xc] sm:$0xf]
        %v1236 = vunpack.c.l.b16 %v1228
        %v1237 = vunpack.c.l.b16 %v1229
        %v1238 = vunpack.c.l.b16 %v1230
        %v1239 = vunpack.c.l.b16 %v1231
        %v1240 = vpack.c.b16 %v1237, %v1236
        %v1241 = vpack.c.b16 %v1239, %v1238
        %v1245 = vsel %vm800, %v1223, 0
        %v1248 = vsel %vm800, %v1224, 0
        %v1251 = vsel %vm800, %v1225, 0
        %v1254 = vsel %vm800, %v1226, 0
        %1256 = vmatpush.bf16.msra.mxu0 0
        %1257 = vmatpush.bf16.msra.mxu0 0
        %1258 = vmatpush.bf16.msra.mxu0 0
        %1259 = vmatpush.bf16.msra.mxu0 0
        %1260 = vmatpush.bf16.msra.mxu0 0
        %1261 = vmatpush.bf16.msra.mxu0 0
        %1262 = vmatpush.bf16.msra.mxu0 %v1241
        %1263 = vmatpush.bf16.msra.mxu0 %v1240
        %1264 = vmatmul.bf16.gmra.mxu0 %v1245
        %v1265 = vpop.f32.mrf.mxu0
        %v1266 = vadd.f32 0.0, %v1265
        %v1267 = vpop.f32.mrf.mxu0
        %v1268 = vadd.f32 0.0, %v1267
        %1269 = vmatmul.bf16.gmra.mxu0 %v1248
        %v1270 = vpop.f32.mrf.mxu0
        %v1271 = vadd.f32 0.0, %v1270
        %v1272 = vpop.f32.mrf.mxu0
        %v1273 = vadd.f32 0.0, %v1272
        %1274 = vmatmul.bf16.gmra.mxu0 %v1251
        %v1275 = vpop.f32.mrf.mxu0
        %v1276 = vadd.f32 0.0, %v1275
        %v1277 = vpop.f32.mrf.mxu0
        %v1278 = vadd.f32 0.0, %v1277
        %1279 = vmatmul.bf16.gmra.mxu0 %v1254
        %v1280 = vpop.f32.mrf.mxu0
        %v1281 = vadd.f32 0.0, %v1280
        %v1282 = vpop.f32.mrf.mxu0
        %v1283 = vadd.f32 0.0, %v1282
        %1284 = vdwg.mxu0
        %vm1285 = vsmask.f32 4352
        %v1287 = vshrl.u32 %v1214, 16
        %v1289 = vrot.slane %v1287, 3
        %v1290 = vshll.u32 %v1214, 16
        %v1292 = vrot.slane %v1290, 4
        %v1293 = vor.u32 %v1289, %v1292
        %v1295 = vshrl.u32 %v1215, 16
        %v1297 = vrot.slane %v1295, 3
        %v1298 = vshll.u32 %v1215, 16
        %v1300 = vrot.slane %v1298, 4
        %v1301 = vor.u32 %v1297, %v1300
        %v1302 = vsel %vm1285, %v1293, %v1301
        %v1304 = vshrl.u32 %v1216, 16
        %v1306 = vrot.slane %v1304, 3
        %v1307 = vshll.u32 %v1216, 16
        %v1309 = vrot.slane %v1307, 4
        %v1310 = vor.u32 %v1306, %v1309
        %v1311 = vsel %vm1285, %v1301, %v1310
        %v1313 = vshrl.u32 %v1217, 16
        %v1315 = vrot.slane %v1313, 3
        %v1316 = vshll.u32 %v1217, 16
        %v1318 = vrot.slane %v1316, 4
        %v1319 = vor.u32 %v1315, %v1318
        %v1320 = vsel %vm1285, %v1310, %v1319
        %v1322 = vshrl.u32 %v1218, 16
        %v1324 = vrot.slane %v1322, 3
        %v1325 = vshll.u32 %v1218, 16
        %v1327 = vrot.slane %v1325, 4
        %v1328 = vor.u32 %v1324, %v1327
        %v1329 = vsel %vm1285, %v1319, %v1328
        %v1334 = vunpack.c.l.b16 %v1219
        %v1335 = vunpack.c.l.b16 %v1220
        %v1336 = vunpack.c.l.b16 %v1221
        %v1337 = vunpack.c.l.b16 %v1222
        %v1338 = vpack.c.b16 %v1335, %v1334
        %v1339 = vpack.c.b16 %v1337, %v1336
        %v1343 = vsel %vm800, %v1302, 0
        %v1346 = vsel %vm800, %v1311, 0
        %v1349 = vsel %vm800, %v1320, 0
        %v1352 = vsel %vm800, %v1329, 0
        %1354 = vmatpush.bf16.msra.mxu0 0
        %1355 = vmatpush.bf16.msra.mxu0 0
        %1356 = vmatpush.bf16.msra.mxu0 0
        %1357 = vmatpush.bf16.msra.mxu0 0
        %1358 = vmatpush.bf16.msra.mxu0 0
        %1359 = vmatpush.bf16.msra.mxu0 0
        %1360 = vmatpush.bf16.msra.mxu0 %v1339
        %1361 = vmatpush.bf16.msra.mxu0 %v1338
        %1362 = vmatmul.bf16.gmra.mxu0 %v1343
        %v1363 = vpop.f32.mrf.mxu0
        %v1364 = vadd.f32 %v1266, %v1363
        %v1365 = vpop.f32.mrf.mxu0
        %v1366 = vadd.f32 %v1268, %v1365
        %1367 = vmatmul.bf16.gmra.mxu0 %v1346
        %v1368 = vpop.f32.mrf.mxu0
        %v1369 = vadd.f32 %v1271, %v1368
        %v1370 = vpop.f32.mrf.mxu0
        %v1371 = vadd.f32 %v1273, %v1370
        %1372 = vmatmul.bf16.gmra.mxu0 %v1349
        %v1373 = vpop.f32.mrf.mxu0
        %v1374 = vadd.f32 %v1276, %v1373
        %v1375 = vpop.f32.mrf.mxu0
        %v1376 = vadd.f32 %v1278, %v1375
        %1377 = vmatmul.bf16.gmra.mxu0 %v1352
        %v1378 = vpop.f32.mrf.mxu0
        %v1379 = vadd.f32 %v1281, %v1378
        %v1380 = vpop.f32.mrf.mxu0
        %v1381 = vadd.f32 %v1283, %v1380
        %1382 = vdwg.mxu0
        %1384 = vset.pattern.permute.xlu0 0
        %1385 = vperm.xlu0 %1384, %v782
        %v1386 = vpop.permute.xlu0 %1385
        %1388 = vset.pattern.permute.xlu0 0
        %1389 = vperm.xlu0 %1388, %v783
        %v1390 = vpop.permute.xlu0 %1389
        %1392 = vset.pattern.permute.xlu0 0
        %1393 = vperm.xlu0 %1392, %v784
        %v1394 = vpop.permute.xlu0 %1393
        %1396 = vset.pattern.permute.xlu0 0
        %1397 = vperm.xlu0 %1396, %v785
        %v1398 = vpop.permute.xlu0 %1397
        %1400 = vset.pattern.permute.xlu0 0
        %1401 = vperm.xlu0 %1400, %v786
        %v1402 = vpop.permute.xlu0 %1401
        %1404 = vset.pattern.permute.xlu0 0
        %1405 = vperm.xlu0 %1404, %v787
        %v1406 = vpop.permute.xlu0 %1405
        %1408 = vset.pattern.permute.xlu0 0
        %1409 = vperm.xlu0 %1408, %v788
        %v1410 = vpop.permute.xlu0 %1409
        %1412 = vset.pattern.permute.xlu0 0
        %1413 = vperm.xlu0 %1412, %v789
        %v1414 = vpop.permute.xlu0 %1413
        %vm1415 = vcmask 1040384
        %v1416 = vrot.slane %v1386, 7
        %v1417 = vrot.slane %v1390, 7
        %v1418 = vsel %vm1415, %v1416, %v1417
        %v1419 = vrot.slane %v1394, 7
        %v1420 = vsel %vm1415, %v1417, %v1419
        %v1421 = vrot.slane %v1398, 7
        %v1422 = vsel %vm1415, %v1419, %v1421
        %v1423 = vrot.slane %v1402, 7
        %v1424 = vsel %vm1415, %v1421, %v1423
        %v1425 = vrot.slane %v1406, 7
        %v1426 = vsel %vm1415, %v1423, %v1425
        %v1427 = vrot.slane %v1410, 7
        %v1428 = vsel %vm1415, %v1425, %v1427
        %v1429 = vrot.slane %v1414, 7
        %v1430 = vsel %vm1415, %v1427, %v1429
        %v1440 = vmul.f32 %v1416, 0.0
        %v1441 = vmul.f32 %v1042, %v1418
        %v1442 = vmul.f32 %v1057, %v1420
        %v1443 = vmul.f32 %v1072, %v1422
        %v1444 = vmul.f32 %v1087, %v1424
        %v1445 = vmul.f32 %v1102, %v1426
        %v1446 = vmul.f32 %v1117, %v1428
        %v1447 = vmul.f32 %v1132, %v1430
        %v1448 = vmul.f32 %v1147, %v1429
        %v1449 = vpack.c.bf16 %v1441, %v1440
        %v1450 = vpack.c.bf16 %v1443, %v1442
        %v1451 = vpack.c.bf16 %v1445, %v1444
        %v1452 = vpack.c.bf16 %v1447, %v1446
        %v1453 = vpack.c.bf16 %v1448, %v1448
        %s1454 = scalar_lea.vmem %s8, 32
        %v1455 = vld [vmem:[%s1454] sm:$0xf]
        %v1456 = vld [vmem:[%s1454 + $0x4] sm:$0xf]
        %v1457 = vld [vmem:[%s1454 + $0x8] sm:$0xf]
        %v1458 = vld [vmem:[%s1454 + $0xc] sm:$0xf]
        %vm1459 = vsmask.f32 7424
        %v1461 = vshrl.u32 %v1449, 16
        %v1463 = vshll.u32 %v1449, 16
        %v1465 = vrot.slane %v1463, 1
        %v1466 = vor.u32 %v1461, %v1465
        %v1468 = vshll.u32 %v1450, 16
        %v1470 = vrot.slane %v1468, 1
        %v1471 = vsel %vm1459, %v1466, %v1470
        %v1472 = vshrl.u32 %v1450, 16
        %v1474 = vor.u32 %v1472, %v1470
        %v1476 = vshll.u32 %v1451, 16
        %v1478 = vrot.slane %v1476, 1
        %v1479 = vsel %vm1459, %v1474, %v1478
        %v1480 = vshrl.u32 %v1451, 16
        %v1482 = vor.u32 %v1480, %v1478
        %v1484 = vshll.u32 %v1452, 16
        %v1486 = vrot.slane %v1484, 1
        %v1487 = vsel %vm1459, %v1482, %v1486
        %v1488 = vshrl.u32 %v1452, 16
        %v1490 = vor.u32 %v1488, %v1486
        %v1492 = vshll.u32 %v1453, 16
        %v1494 = vrot.slane %v1492, 1
        %v1495 = vsel %vm1459, %v1490, %v1494
        %v1500 = vunpack.c.l.b16 %v1455
        %v1501 = vunpack.c.l.b16 %v1456
        %v1502 = vunpack.c.l.b16 %v1457
        %v1503 = vunpack.c.l.b16 %v1458
        %v1504 = vpack.c.b16 %v1501, %v1500
        %v1505 = vpack.c.b16 %v1503, %v1502
        %v1509 = vsel %vm800, %v1471, 0
        %v1512 = vsel %vm800, %v1479, 0
        %v1515 = vsel %vm800, %v1487, 0
        %v1518 = vsel %vm800, %v1495, 0
        %1520 = vmatpush.bf16.msra.mxu0 0
        %1521 = vmatpush.bf16.msra.mxu0 0
        %1522 = vmatpush.bf16.msra.mxu0 0
        %1523 = vmatpush.bf16.msra.mxu0 0
        %1524 = vmatpush.bf16.msra.mxu0 0
        %1525 = vmatpush.bf16.msra.mxu0 0
        %1526 = vmatpush.bf16.msra.mxu0 %v1505
        %1527 = vmatpush.bf16.msra.mxu0 %v1504
        %1528 = vmatmul.bf16.gmra.mxu0 %v1509
        %v1529 = vpop.f32.mrf.mxu0
        %v1530 = vadd.f32 0.0, %v1529
        %v1531 = vpop.f32.mrf.mxu0
        %v1532 = vadd.f32 0.0, %v1531
        %1533 = vmatmul.bf16.gmra.mxu0 %v1512
        %v1534 = vpop.f32.mrf.mxu0
        %v1535 = vadd.f32 0.0, %v1534
        %v1536 = vpop.f32.mrf.mxu0
        %v1537 = vadd.f32 0.0, %v1536
        %1538 = vmatmul.bf16.gmra.mxu0 %v1515
        %v1539 = vpop.f32.mrf.mxu0
        %v1540 = vadd.f32 0.0, %v1539
        %v1541 = vpop.f32.mrf.mxu0
        %v1542 = vadd.f32 0.0, %v1541
        %1543 = vmatmul.bf16.gmra.mxu0 %v1518
        %v1544 = vpop.f32.mrf.mxu0
        %v1545 = vadd.f32 0.0, %v1544
        %v1546 = vpop.f32.mrf.mxu0
        %v1547 = vadd.f32 0.0, %v1546
        %1548 = vdwg.mxu0
        %v1549 = vadd.f32 %v1364, %v1530
        %v1550 = vadd.f32 %v1366, %v1532
        %v1551 = vadd.f32 %v1369, %v1535
        %v1552 = vadd.f32 %v1371, %v1537
        %v1553 = vadd.f32 %v1374, %v1540
        %v1554 = vadd.f32 %v1376, %v1542
        %v1555 = vadd.f32 %v1379, %v1545
        %v1556 = vadd.f32 %v1381, %v1547
        %v1557 = vmul.f32 %v1042, %v1183
        %v1558 = vmul.f32 %v1057, %v1185
        %v1559 = vmul.f32 %v1072, %v1187
        %v1560 = vmul.f32 %v1087, %v1189
        %v1561 = vmul.f32 %v1102, %v1191
        %v1562 = vmul.f32 %v1117, %v1193
        %v1563 = vmul.f32 %v1132, %v1195
        %v1564 = vmul.f32 %v1147, %v1194
        %v1565 = vpack.c.bf16 %v1557, %v1205
        %v1566 = vpack.c.bf16 %v1559, %v1558
        %v1567 = vpack.c.bf16 %v1561, %v1560
        %v1568 = vpack.c.bf16 %v1563, %v1562
        %v1569 = vpack.c.bf16 %v1564, %v1564
        %s1570 = scalar_lea.vmem %s8, 48
        %v1571 = vld [vmem:[%s1570] sm:$0xf]
        %v1572 = vld [vmem:[%s1570 + $0x4] sm:$0xf]
        %v1573 = vld [vmem:[%s1570 + $0x8] sm:$0xf]
        %v1574 = vld [vmem:[%s1570 + $0xc] sm:$0xf]
        %v1576 = vshrl.u32 %v1565, 16
        %v1578 = vrot.slane %v1576, 3
        %v1579 = vshll.u32 %v1565, 16
        %v1581 = vrot.slane %v1579, 4
        %v1582 = vor.u32 %v1578, %v1581
        %v1584 = vshrl.u32 %v1566, 16
        %v1586 = vrot.slane %v1584, 3
        %v1587 = vshll.u32 %v1566, 16
        %v1589 = vrot.slane %v1587, 4
        %v1590 = vor.u32 %v1586, %v1589
        %v1591 = vsel %vm1285, %v1582, %v1590
        %v1593 = vshrl.u32 %v1567, 16
        %v1595 = vrot.slane %v1593, 3
        %v1596 = vshll.u32 %v1567, 16
        %v1598 = vrot.slane %v1596, 4
        %v1599 = vor.u32 %v1595, %v1598
        %v1600 = vsel %vm1285, %v1590, %v1599
        %v1602 = vshrl.u32 %v1568, 16
        %v1604 = vrot.slane %v1602, 3
        %v1605 = vshll.u32 %v1568, 16
        %v1607 = vrot.slane %v1605, 4
        %v1608 = vor.u32 %v1604, %v1607
        %v1609 = vsel %vm1285, %v1599, %v1608
        %v1611 = vshrl.u32 %v1569, 16
        %v1613 = vrot.slane %v1611, 3
        %v1614 = vshll.u32 %v1569, 16
        %v1616 = vrot.slane %v1614, 4
        %v1617 = vor.u32 %v1613, %v1616
        %v1618 = vsel %vm1285, %v1608, %v1617
        %v1623 = vunpack.c.l.b16 %v1571
        %v1624 = vunpack.c.l.b16 %v1572
        %v1625 = vunpack.c.l.b16 %v1573
        %v1626 = vunpack.c.l.b16 %v1574
        %v1627 = vpack.c.b16 %v1624, %v1623
        %v1628 = vpack.c.b16 %v1626, %v1625
        %v1632 = vsel %vm800, %v1591, 0
        %v1635 = vsel %vm800, %v1600, 0
        %v1638 = vsel %vm800, %v1609, 0
        %v1641 = vsel %vm800, %v1618, 0
        %1643 = vmatpush.bf16.msra.mxu0 0
        %1644 = vmatpush.bf16.msra.mxu0 0
        %1645 = vmatpush.bf16.msra.mxu0 0
        %1646 = vmatpush.bf16.msra.mxu0 0
        %1647 = vmatpush.bf16.msra.mxu0 0
        %1648 = vmatpush.bf16.msra.mxu0 0
        %1649 = vmatpush.bf16.msra.mxu0 %v1628
        %1650 = vmatpush.bf16.msra.mxu0 %v1627
        %1651 = vmatmul.bf16.gmra.mxu0 %v1632
        %v1652 = vpop.f32.mrf.mxu0
        %v1653 = vadd.f32 0.0, %v1652
        %v1654 = vpop.f32.mrf.mxu0
        %v1655 = vadd.f32 0.0, %v1654
        %1656 = vmatmul.bf16.gmra.mxu0 %v1635
        %v1657 = vpop.f32.mrf.mxu0
        %v1658 = vadd.f32 0.0, %v1657
        %v1659 = vpop.f32.mrf.mxu0
        %v1660 = vadd.f32 0.0, %v1659
        %1661 = vmatmul.bf16.gmra.mxu0 %v1638
        %v1662 = vpop.f32.mrf.mxu0
        %v1663 = vadd.f32 0.0, %v1662
        %v1664 = vpop.f32.mrf.mxu0
        %v1665 = vadd.f32 0.0, %v1664
        %1666 = vmatmul.bf16.gmra.mxu0 %v1641
        %v1667 = vpop.f32.mrf.mxu0
        %v1668 = vadd.f32 0.0, %v1667
        %v1669 = vpop.f32.mrf.mxu0
        %v1670 = vadd.f32 0.0, %v1669
        %1671 = vdwg.mxu0
        %v1672 = vadd.f32 %v1549, %v1653
        %v1673 = vadd.f32 %v1550, %v1655
        %v1674 = vadd.f32 %v1551, %v1658
        %v1675 = vadd.f32 %v1552, %v1660
        %v1676 = vadd.f32 %v1553, %v1663
        %v1677 = vadd.f32 %v1554, %v1665
        %v1678 = vadd.f32 %v1555, %v1668
        %v1679 = vadd.f32 %v1556, %v1670
        %v1680 = vpack.c.bf16 %v1057, %v1042
        %v1681 = vpack.c.bf16 %v1087, %v1072
        %v1682 = vpack.c.bf16 %v1117, %v1102
        %v1683 = vpack.c.bf16 %v1147, %v1132
        %s1684 = scalar_lea.vmem %s8, 64
        %v1685 = vld [vmem:[%s1684] sm:$0xf]
        %v1686 = vld [vmem:[%s1684 + $0x4] sm:$0xf]
        %v1687 = vld [vmem:[%s1684 + $0x8] sm:$0xf]
        %v1688 = vld [vmem:[%s1684 + $0xc] sm:$0xf]
        %v1693 = vunpack.c.l.b16 %v1685
        %v1694 = vunpack.c.l.b16 %v1686
        %v1695 = vunpack.c.l.b16 %v1687
        %v1696 = vunpack.c.l.b16 %v1688
        %v1697 = vpack.c.b16 %v1694, %v1693
        %v1698 = vpack.c.b16 %v1696, %v1695
        %v1702 = vsel %vm800, %v1680, 0
        %v1705 = vsel %vm800, %v1681, 0
        %v1708 = vsel %vm800, %v1682, 0
        %v1711 = vsel %vm800, %v1683, 0
        %1713 = vmatpush.bf16.msra.mxu0 0
        %1714 = vmatpush.bf16.msra.mxu0 0
        %1715 = vmatpush.bf16.msra.mxu0 0
        %1716 = vmatpush.bf16.msra.mxu0 0
        %1717 = vmatpush.bf16.msra.mxu0 0
        %1718 = vmatpush.bf16.msra.mxu0 0
        %1719 = vmatpush.bf16.msra.mxu0 %v1698
        %1720 = vmatpush.bf16.msra.mxu0 %v1697
        %1721 = vmatmul.bf16.gmra.mxu0 %v1702
        %v1722 = vpop.f32.mrf.mxu0
        %v1723 = vadd.f32 0.0, %v1722
        %v1724 = vpop.f32.mrf.mxu0
        %v1725 = vadd.f32 0.0, %v1724
        %1726 = vmatmul.bf16.gmra.mxu0 %v1705
        %v1727 = vpop.f32.mrf.mxu0
        %v1728 = vadd.f32 0.0, %v1727
        %v1729 = vpop.f32.mrf.mxu0
        %v1730 = vadd.f32 0.0, %v1729
        %1731 = vmatmul.bf16.gmra.mxu0 %v1708
        %v1732 = vpop.f32.mrf.mxu0
        %v1733 = vadd.f32 0.0, %v1732
        %v1734 = vpop.f32.mrf.mxu0
        %v1735 = vadd.f32 0.0, %v1734
        %1736 = vmatmul.bf16.gmra.mxu0 %v1711
        %v1737 = vpop.f32.mrf.mxu0
        %v1738 = vadd.f32 0.0, %v1737
        %v1739 = vpop.f32.mrf.mxu0
        %v1740 = vadd.f32 0.0, %v1739
        %1741 = vdwg.mxu0
        %v1742 = vadd.f32 %v1672, %v1723
        %v1743 = vadd.f32 %v1673, %v1725
        %v1744 = vadd.f32 %v1674, %v1728
        %v1745 = vadd.f32 %v1675, %v1730
        %v1746 = vadd.f32 %v1676, %v1733
        %v1747 = vadd.f32 %v1677, %v1735
        %v1748 = vadd.f32 %v1678, %v1738
        %v1749 = vadd.f32 %v1679, %v1740
        %v1750 = vmul.f32 %v1042, %v1416
        %v1751 = vmul.f32 %v1057, %v1418
        %v1752 = vmul.f32 %v1072, %v1420
        %v1753 = vmul.f32 %v1087, %v1422
        %v1754 = vmul.f32 %v1102, %v1424
        %v1755 = vmul.f32 %v1117, %v1426
        %v1756 = vmul.f32 %v1132, %v1428
        %v1757 = vmul.f32 %v1147, %v1430
        %v1758 = vmul.f32 %v1429, 0.0
        %v1759 = vpack.c.bf16 %v1751, %v1750
        %v1760 = vpack.c.bf16 %v1753, %v1752
        %v1761 = vpack.c.bf16 %v1755, %v1754
        %v1762 = vpack.c.bf16 %v1757, %v1756
        %v1763 = vpack.c.bf16 %v1758, %v1758
        %s1764 = scalar_lea.vmem %s8, 80
        %v1765 = vld [vmem:[%s1764] sm:$0xf]
        %v1766 = vld [vmem:[%s1764 + $0x4] sm:$0xf]
        %v1767 = vld [vmem:[%s1764 + $0x8] sm:$0xf]
        %v1768 = vld [vmem:[%s1764 + $0xc] sm:$0xf]
        %v1770 = vshrl.u32 %v1759, 16
        %v1772 = vshll.u32 %v1759, 16
        %v1774 = vrot.slane %v1772, 1
        %v1775 = vor.u32 %v1770, %v1774
        %v1777 = vshll.u32 %v1760, 16
        %v1779 = vrot.slane %v1777, 1
        %v1780 = vsel %vm1459, %v1775, %v1779
        %v1781 = vshrl.u32 %v1760, 16
        %v1783 = vor.u32 %v1781, %v1779
        %v1785 = vshll.u32 %v1761, 16
        %v1787 = vrot.slane %v1785, 1
        %v1788 = vsel %vm1459, %v1783, %v1787
        %v1789 = vshrl.u32 %v1761, 16
        %v1791 = vor.u32 %v1789, %v1787
        %v1793 = vshll.u32 %v1762, 16
        %v1795 = vrot.slane %v1793, 1
        %v1796 = vsel %vm1459, %v1791, %v1795
        %v1797 = vshrl.u32 %v1762, 16
        %v1799 = vor.u32 %v1797, %v1795
        %v1801 = vshll.u32 %v1763, 16
        %v1803 = vrot.slane %v1801, 1
        %v1804 = vsel %vm1459, %v1799, %v1803
        %v1809 = vunpack.c.l.b16 %v1765
        %v1810 = vunpack.c.l.b16 %v1766
        %v1811 = vunpack.c.l.b16 %v1767
        %v1812 = vunpack.c.l.b16 %v1768
        %v1813 = vpack.c.b16 %v1810, %v1809
        %v1814 = vpack.c.b16 %v1812, %v1811
        %v1818 = vsel %vm800, %v1780, 0
        %v1821 = vsel %vm800, %v1788, 0
        %v1824 = vsel %vm800, %v1796, 0
        %v1827 = vsel %vm800, %v1804, 0
        %1829 = vmatpush.bf16.msra.mxu0 0
        %1830 = vmatpush.bf16.msra.mxu0 0
        %1831 = vmatpush.bf16.msra.mxu0 0
        %1832 = vmatpush.bf16.msra.mxu0 0
        %1833 = vmatpush.bf16.msra.mxu0 0
        %1834 = vmatpush.bf16.msra.mxu0 0
        %1835 = vmatpush.bf16.msra.mxu0 %v1814
        %1836 = vmatpush.bf16.msra.mxu0 %v1813
        %1837 = vmatmul.bf16.gmra.mxu0 %v1818
        %v1838 = vpop.f32.mrf.mxu0
        %v1839 = vadd.f32 0.0, %v1838
        %v1840 = vpop.f32.mrf.mxu0
        %v1841 = vadd.f32 0.0, %v1840
        %1842 = vmatmul.bf16.gmra.mxu0 %v1821
        %v1843 = vpop.f32.mrf.mxu0
        %v1844 = vadd.f32 0.0, %v1843
        %v1845 = vpop.f32.mrf.mxu0
        %v1846 = vadd.f32 0.0, %v1845
        %1847 = vmatmul.bf16.gmra.mxu0 %v1824
        %v1848 = vpop.f32.mrf.mxu0
        %v1849 = vadd.f32 0.0, %v1848
        %v1850 = vpop.f32.mrf.mxu0
        %v1851 = vadd.f32 0.0, %v1850
        %1852 = vmatmul.bf16.gmra.mxu0 %v1827
        %v1853 = vpop.f32.mrf.mxu0
        %v1854 = vadd.f32 0.0, %v1853
        %v1855 = vpop.f32.mrf.mxu0
        %v1856 = vadd.f32 0.0, %v1855
        %1857 = vdwg.mxu0
        %v1858 = vadd.f32 %v1742, %v1839
        %v1859 = vadd.f32 %v1743, %v1841
        %v1860 = vadd.f32 %v1744, %v1844
        %v1861 = vadd.f32 %v1745, %v1846
        %v1862 = vadd.f32 %v1746, %v1849
        %v1863 = vadd.f32 %v1747, %v1851
        %v1864 = vadd.f32 %v1748, %v1854
        %v1865 = vadd.f32 %v1749, %v1856
        %v1866 = vmul.f32 %v1042, %v1181
        %v1867 = vmul.f32 %v1057, %v1183
        %v1868 = vmul.f32 %v1072, %v1185
        %v1869 = vmul.f32 %v1087, %v1187
        %v1870 = vmul.f32 %v1102, %v1189
        %v1871 = vmul.f32 %v1117, %v1191
        %v1872 = vmul.f32 %v1132, %v1193
        %v1873 = vmul.f32 %v1147, %v1195
        %v1874 = vmul.f32 %v1194, 0.0
        %v1875 = vpack.c.bf16 %v1867, %v1866
        %v1876 = vpack.c.bf16 %v1869, %v1868
        %v1877 = vpack.c.bf16 %v1871, %v1870
        %v1878 = vpack.c.bf16 %v1873, %v1872
        %v1879 = vpack.c.bf16 %v1874, %v1874
        %s1880 = scalar_lea.vmem %s8, 96
        %v1881 = vld [vmem:[%s1880] sm:$0xf]
        %v1882 = vld [vmem:[%s1880 + $0x4] sm:$0xf]
        %v1883 = vld [vmem:[%s1880 + $0x8] sm:$0xf]
        %v1884 = vld [vmem:[%s1880 + $0xc] sm:$0xf]
        %v1886 = vshrl.u32 %v1875, 16
        %v1888 = vrot.slane %v1886, 3
        %v1889 = vshll.u32 %v1875, 16
        %v1891 = vrot.slane %v1889, 4
        %v1892 = vor.u32 %v1888, %v1891
        %v1894 = vshrl.u32 %v1876, 16
        %v1896 = vrot.slane %v1894, 3
        %v1897 = vshll.u32 %v1876, 16
        %v1899 = vrot.slane %v1897, 4
        %v1900 = vor.u32 %v1896, %v1899
        %v1901 = vsel %vm1285, %v1892, %v1900
        %v1903 = vshrl.u32 %v1877, 16
        %v1905 = vrot.slane %v1903, 3
        %v1906 = vshll.u32 %v1877, 16
        %v1908 = vrot.slane %v1906, 4
        %v1909 = vor.u32 %v1905, %v1908
        %v1910 = vsel %vm1285, %v1900, %v1909
        %v1912 = vshrl.u32 %v1878, 16
        %v1914 = vrot.slane %v1912, 3
        %v1915 = vshll.u32 %v1878, 16
        %v1917 = vrot.slane %v1915, 4
        %v1918 = vor.u32 %v1914, %v1917
        %v1919 = vsel %vm1285, %v1909, %v1918
        %v1921 = vshrl.u32 %v1879, 16
        %v1923 = vrot.slane %v1921, 3
        %v1924 = vshll.u32 %v1879, 16
        %v1926 = vrot.slane %v1924, 4
        %v1927 = vor.u32 %v1923, %v1926
        %v1928 = vsel %vm1285, %v1918, %v1927
        %v1933 = vunpack.c.l.b16 %v1881
        %v1934 = vunpack.c.l.b16 %v1882
        %v1935 = vunpack.c.l.b16 %v1883
        %v1936 = vunpack.c.l.b16 %v1884
        %v1937 = vpack.c.b16 %v1934, %v1933
        %v1938 = vpack.c.b16 %v1936, %v1935
        %v1942 = vsel %vm800, %v1901, 0
        %v1945 = vsel %vm800, %v1910, 0
        %v1948 = vsel %vm800, %v1919, 0
        %v1951 = vsel %vm800, %v1928, 0
        %1953 = vmatpush.bf16.msra.mxu0 0
        %1954 = vmatpush.bf16.msra.mxu0 0
        %1955 = vmatpush.bf16.msra.mxu0 0
        %1956 = vmatpush.bf16.msra.mxu0 0
        %1957 = vmatpush.bf16.msra.mxu0 0
        %1958 = vmatpush.bf16.msra.mxu0 0
        %1959 = vmatpush.bf16.msra.mxu0 %v1938
        %1960 = vmatpush.bf16.msra.mxu0 %v1937
        %1961 = vmatmul.bf16.gmra.mxu0 %v1942
        %v1962 = vpop.f32.mrf.mxu0
        %v1963 = vadd.f32 0.0, %v1962
        %v1964 = vpop.f32.mrf.mxu0
        %v1965 = vadd.f32 0.0, %v1964
        %1966 = vmatmul.bf16.gmra.mxu0 %v1945
        %v1967 = vpop.f32.mrf.mxu0
        %v1968 = vadd.f32 0.0, %v1967
        %v1969 = vpop.f32.mrf.mxu0
        %v1970 = vadd.f32 0.0, %v1969
        %1971 = vmatmul.bf16.gmra.mxu0 %v1948
        %v1972 = vpop.f32.mrf.mxu0
        %v1973 = vadd.f32 0.0, %v1972
        %v1974 = vpop.f32.mrf.mxu0
        %v1975 = vadd.f32 0.0, %v1974
        %1976 = vmatmul.bf16.gmra.mxu0 %v1951
        %v1977 = vpop.f32.mrf.mxu0
        %v1978 = vadd.f32 0.0, %v1977
        %v1979 = vpop.f32.mrf.mxu0
        %v1980 = vadd.f32 0.0, %v1979
        %1981 = vdwg.mxu0
        %v1982 = vadd.f32 %v1858, %v1963
        %v1983 = vadd.f32 %v1859, %v1965
        %v1984 = vadd.f32 %v1860, %v1968
        %v1985 = vadd.f32 %v1861, %v1970
        %v1986 = vadd.f32 %v1862, %v1973
        %v1987 = vadd.f32 %v1863, %v1975
        %v1988 = vadd.f32 %v1864, %v1978
        %v1989 = vadd.f32 %v1865, %v1980
        %v1990 = vpack.c.bf16 0.0, %v1147
        %s1991 = scalar_lea.vmem %s8, 112
        %v1992 = vld [vmem:[%s1991] sm:$0xf]
        %v1993 = vld [vmem:[%s1991 + $0x4] sm:$0xf]
        %v1994 = vld [vmem:[%s1991 + $0x8] sm:$0xf]
        %v1995 = vld [vmem:[%s1991 + $0xc] sm:$0xf]
        %v2000 = vunpack.c.l.b16 %v1992
        %v2001 = vunpack.c.l.b16 %v1993
        %v2002 = vunpack.c.l.b16 %v1994
        %v2003 = vunpack.c.l.b16 %v1995
        %v2004 = vpack.c.b16 %v2001, %v2000
        %v2005 = vpack.c.b16 %v2003, %v2002
        %v2009 = vsel %vm800, %v1990, 0
        %2011 = vmatpush.bf16.msra.mxu0 0
        %2012 = vmatpush.bf16.msra.mxu0 0
        %2013 = vmatpush.bf16.msra.mxu0 0
        %2014 = vmatpush.bf16.msra.mxu0 0
        %2015 = vmatpush.bf16.msra.mxu0 0
        %2016 = vmatpush.bf16.msra.mxu0 0
        %2017 = vmatpush.bf16.msra.mxu0 %v2005
        %2018 = vmatpush.bf16.msra.mxu0 %v2004
        %2019 = vmatmul.bf16.gmra.mxu0 %v1248
        %v2020 = vpop.f32.mrf.mxu0
        %v2021 = vadd.f32 0.0, %v2020
        %v2022 = vpop.f32.mrf.mxu0
        %v2023 = vadd.f32 0.0, %v2022
        %2024 = vmatmul.bf16.gmra.mxu0 %v1251
        %v2025 = vpop.f32.mrf.mxu0
        %v2026 = vadd.f32 0.0, %v2025
        %v2027 = vpop.f32.mrf.mxu0
        %v2028 = vadd.f32 0.0, %v2027
        %2029 = vmatmul.bf16.gmra.mxu0 %v1254
        %v2030 = vpop.f32.mrf.mxu0
        %v2031 = vadd.f32 0.0, %v2030
        %v2032 = vpop.f32.mrf.mxu0
        %v2033 = vadd.f32 0.0, %v2032
        %2034 = vmatmul.bf16.gmra.mxu0 %v2009
        %v2035 = vpop.f32.mrf.mxu0
        %v2036 = vadd.f32 0.0, %v2035
        %v2037 = vpop.f32.mrf.mxu0
        %v2038 = vadd.f32 0.0, %v2037
        %2039 = vdwg.mxu0
        %v2040 = vadd.f32 %v1982, %v2021
        %v2041 = vadd.f32 %v1983, %v2023
        %v2042 = vadd.f32 %v1984, %v2026
        %v2043 = vadd.f32 %v1985, %v2028
        %v2044 = vadd.f32 %v1986, %v2031
        %v2045 = vadd.f32 %v1987, %v2033
        %v2046 = vadd.f32 %v1988, %v2036
        %v2047 = vadd.f32 %v1989, %v2038
        %v2048 = vmul.f32 %v1057, %v1416
        %v2049 = vmul.f32 %v1072, %v1418
        %v2050 = vmul.f32 %v1087, %v1420
        %v2051 = vmul.f32 %v1102, %v1422
        %v2052 = vmul.f32 %v1117, %v1424
        %v2053 = vmul.f32 %v1132, %v1426
        %v2054 = vmul.f32 %v1147, %v1428
        %v2055 = vmul.f32 %v1430, 0.0
        %v2056 = vpack.c.bf16 %v2049, %v2048
        %v2057 = vpack.c.bf16 %v2051, %v2050
        %v2058 = vpack.c.bf16 %v2053, %v2052
        %v2059 = vpack.c.bf16 %v2055, %v2054
        %s2060 = scalar_lea.vmem %s8, 128
        %v2061 = vld [vmem:[%s2060] sm:$0xf]
        %v2062 = vld [vmem:[%s2060 + $0x4] sm:$0xf]
        %v2063 = vld [vmem:[%s2060 + $0x8] sm:$0xf]
        %v2064 = vld [vmem:[%s2060 + $0xc] sm:$0xf]
        %v2066 = vshrl.u32 %v2056, 16
        %v2068 = vshll.u32 %v2056, 16
        %v2070 = vrot.slane %v2068, 1
        %v2071 = vor.u32 %v2066, %v2070
        %v2073 = vshll.u32 %v2057, 16
        %v2075 = vrot.slane %v2073, 1
        %v2076 = vsel %vm1459, %v2071, %v2075
        %v2077 = vshrl.u32 %v2057, 16
        %v2079 = vor.u32 %v2077, %v2075
        %v2081 = vshll.u32 %v2058, 16
        %v2083 = vrot.slane %v2081, 1
        %v2084 = vsel %vm1459, %v2079, %v2083
        %v2085 = vshrl.u32 %v2058, 16
        %v2087 = vor.u32 %v2085, %v2083
        %v2089 = vshll.u32 %v2059, 16
        %v2091 = vrot.slane %v2089, 1
        %v2092 = vsel %vm1459, %v2087, %v2091
        %v2093 = vshrl.u32 %v2059, 16
        %v2095 = vor.u32 %v2093, %v2091
        %v2096 = vsel %vm1459, %v2095, %v1803
        %v2101 = vunpack.c.l.b16 %v2061
        %v2102 = vunpack.c.l.b16 %v2062
        %v2103 = vunpack.c.l.b16 %v2063
        %v2104 = vunpack.c.l.b16 %v2064
        %v2105 = vpack.c.b16 %v2102, %v2101
        %v2106 = vpack.c.b16 %v2104, %v2103
        %v2110 = vsel %vm800, %v2076, 0
        %v2113 = vsel %vm800, %v2084, 0
        %v2116 = vsel %vm800, %v2092, 0
        %v2119 = vsel %vm800, %v2096, 0
        %2121 = vmatpush.bf16.msra.mxu0 0
        %2122 = vmatpush.bf16.msra.mxu0 0
        %2123 = vmatpush.bf16.msra.mxu0 0
        %2124 = vmatpush.bf16.msra.mxu0 0
        %2125 = vmatpush.bf16.msra.mxu0 0
        %2126 = vmatpush.bf16.msra.mxu0 0
        %2127 = vmatpush.bf16.msra.mxu0 %v2106
        %2128 = vmatpush.bf16.msra.mxu0 %v2105
        %2129 = vmatmul.bf16.gmra.mxu0 %v2110
        %v2130 = vpop.f32.mrf.mxu0
        %v2131 = vadd.f32 0.0, %v2130
        %v2132 = vpop.f32.mrf.mxu0
        %v2133 = vadd.f32 0.0, %v2132
        %2134 = vmatmul.bf16.gmra.mxu0 %v2113
        %v2135 = vpop.f32.mrf.mxu0
        %v2136 = vadd.f32 0.0, %v2135
        %v2137 = vpop.f32.mrf.mxu0
        %v2138 = vadd.f32 0.0, %v2137
        %2139 = vmatmul.bf16.gmra.mxu0 %v2116
        %v2140 = vpop.f32.mrf.mxu0
        %v2141 = vadd.f32 0.0, %v2140
        %v2142 = vpop.f32.mrf.mxu0
        %v2143 = vadd.f32 0.0, %v2142
        %2144 = vmatmul.bf16.gmra.mxu0 %v2119
        %v2145 = vpop.f32.mrf.mxu0
        %v2146 = vadd.f32 0.0, %v2145
        %v2147 = vpop.f32.mrf.mxu0
        %v2148 = vadd.f32 0.0, %v2147
        %2149 = vdwg.mxu0
        %v2150 = vadd.f32 %v2040, %v2131
        %v2151 = vadd.f32 %v2041, %v2133
        %v2152 = vadd.f32 %v2042, %v2136
        %v2153 = vadd.f32 %v2043, %v2138
        %v2154 = vadd.f32 %v2044, %v2141
        %v2155 = vadd.f32 %v2045, %v2143
        %v2156 = vadd.f32 %v2046, %v2146
        %v2157 = vadd.f32 %v2047, %v2148
        %v2158 = vld [vmem:[#allocation5] sm:$0x1]
        %v2160 = vperm.slane %v2158, 0
        %v2162 = vadd.f32 %v2150, %v2160
        %v2163 = vadd.f32 %v2151, %v2160
        %v2164 = vadd.f32 %v2152, %v2160
        %v2165 = vadd.f32 %v2153, %v2160
        %v2166 = vadd.f32 %v2154, %v2160
        %v2167 = vadd.f32 %v2155, %v2160
        %v2168 = vadd.f32 %v2156, %v2160
        %v2169 = vadd.f32 %v2157, %v2160
        %v2170 = vld [vmem:[%s679] sm:$0x1]
        %v2172 = vperm.slane %v2170, 0
        %v2174 = vadd.f32 %v2162, %v2172
        %v2175 = vadd.f32 %v2163, %v2172
        %v2176 = vadd.f32 %v2164, %v2172
        %v2177 = vadd.f32 %v2165, %v2172
        %v2178 = vadd.f32 %v2166, %v2172
        %v2179 = vadd.f32 %v2167, %v2172
        %v2180 = vadd.f32 %v2168, %v2172
        %v2181 = vadd.f32 %v2169, %v2172
        %v2182 = vld [vmem:[%s10] sm:$0x1]
        %v2183 = vld [vmem:[%s11] sm:$0x1]
        %v2184 = vld [vmem:[%s12] sm:$0xff]
        %v2185 = vld [vmem:[%s12 + $0x8] sm:$0xff]
        %v2186 = vld [vmem:[%s12 + $0x10] sm:$0xff]
        %v2187 = vld [vmem:[%s12 + $0x18] sm:$0xff]
        %v2188 = vld [vmem:[%s12 + $0x20] sm:$0xff]
        %v2189 = vld [vmem:[%s12 + $0x28] sm:$0xff]
        %v2190 = vld [vmem:[%s12 + $0x30] sm:$0xff]
        %v2191 = vld [vmem:[%s12 + $0x38] sm:$0xff]
        %v2192 = vld [vmem:[%s13] sm:$0xff]
        %v2193 = vld [vmem:[%s13 + $0x8] sm:$0xff]
        %v2194 = vld [vmem:[%s13 + $0x10] sm:$0xff]
        %v2195 = vld [vmem:[%s13 + $0x18] sm:$0xff]
        %vm2196 = vcmask 523264
        %v2197 = vsel %vm2196, %v2174, 0.0
        %v2198 = vsel %vm2196, %v2175, 0.0
        %v2199 = vadd.f32 %v2197, %v2198
        %v2200 = vsel %vm2196, %v2176, 0.0
        %v2201 = vadd.f32 %v2199, %v2200
        %v2202 = vsel %vm2196, %v2177, 0.0
        %v2203 = vadd.f32 %v2201, %v2202
        %v2204 = vsel %vm2196, %v2178, 0.0
        %v2205 = vadd.f32 %v2203, %v2204
        %v2206 = vsel %vm2196, %v2179, 0.0
        %v2207 = vadd.f32 %v2205, %v2206
        %v2208 = vsel %vm2196, %v2180, 0.0
        %v2209 = vadd.f32 %v2207, %v2208
        %v2210 = vsel %vm2196, %v2181, 0.0
        %v2211 = vadd.f32 %v2209, %v2210
        %v2212 = vrot.slane %v2211, 4
        %v2213 = vadd.f32 %v2211, %v2212
        %v2214 = vrot.slane %v2213, 2
        %v2215 = vadd.f32 %v2213, %v2214
        %v2216 = vrot.slane %v2215, 1
        %v2217 = vadd.f32 %v2215, %v2216
        %v2219 = vsel %vm2196, %v2217, 0
        %2221 = vmatpush.msra.mxu0 0.0
        %2222 = vmatpush.msra.mxu0 0.0
        %2223 = vmatpush.msra.mxu0 0.0
        %2224 = vmatpush.msra.mxu0 0.0
        %2225 = vmatpush.msra.mxu0 0.0
        %2226 = vmatpush.msra.mxu0 0.0
        %2227 = vmatpush.msra.mxu0 0.0
        %2228 = vmatpush.msra.mxu0 0.0
        %2229 = vmatpush.msra.mxu0 %v2191
        %2230 = vmatpush.msra.mxu0 %v2190
        %2231 = vmatpush.msra.mxu0 %v2189
        %2232 = vmatpush.msra.mxu0 %v2188
        %2233 = vmatpush.msra.mxu0 %v2187
        %2234 = vmatpush.msra.mxu0 %v2186
        %2235 = vmatpush.msra.mxu0 %v2185
        %2236 = vmatpush.msra.mxu0 %v2184
        %2237 = vmatmul.f32.gmra.mxu0 %v2219
        %v2238 = vpop.f32.mrf.mxu0
        %v2239 = vadd.f32 0.0, %v2238
        %2240 = vdwg.mxu0
        %v2241 = vmul.f32 %v2239, 0.0078125
        %v2243 = vsel %vm800, %v2241, 0
        %2245 = vmatpush.msra.mxu0 0.0
        %2246 = vmatpush.msra.mxu0 0.0
        %2247 = vmatpush.msra.mxu0 0.0
        %2248 = vmatpush.msra.mxu0 0.0
        %2249 = vmatpush.msra.mxu0 0.0
        %2250 = vmatpush.msra.mxu0 0.0
        %2251 = vmatpush.msra.mxu0 0.0
        %2252 = vmatpush.msra.mxu0 0.0
        %2253 = vmatpush.msra.mxu0 0.0
        %2254 = vmatpush.msra.mxu0 0.0
        %2255 = vmatpush.msra.mxu0 0.0
        %2256 = vmatpush.msra.mxu0 0.0
        %2257 = vmatpush.msra.mxu0 %v2195
        %2258 = vmatpush.msra.mxu0 %v2194
        %2259 = vmatpush.msra.mxu0 %v2193
        %2260 = vmatpush.msra.mxu0 %v2192
        %2261 = vmatmul.f32.gmra.mxu0 %v2243
        %v2262 = vpop.f32.mrf.mxu0
        %v2263 = vadd.f32 0.0, %v2262
        %2264 = vdwg.mxu0
        %v2265 = vperm.slane %v2263, 0
        %v2266 = vsub.f32 %v2174, %v2265
        %v2267 = vsub.f32 %v2175, %v2265
        %v2268 = vsub.f32 %v2176, %v2265
        %v2269 = vsub.f32 %v2177, %v2265
        %v2270 = vsub.f32 %v2178, %v2265
        %v2271 = vsub.f32 %v2179, %v2265
        %v2272 = vsub.f32 %v2180, %v2265
        %v2273 = vsub.f32 %v2181, %v2265
        %v2274 = vmul.f32 %v2266, %v2266
        %v2275 = vmul.f32 %v2267, %v2267
        %v2276 = vmul.f32 %v2268, %v2268
        %v2277 = vmul.f32 %v2269, %v2269
        %v2278 = vmul.f32 %v2270, %v2270
        %v2279 = vmul.f32 %v2271, %v2271
        %v2280 = vmul.f32 %v2272, %v2272
        %v2281 = vmul.f32 %v2273, %v2273
        %v2282 = vsel %vm2196, %v2274, 0.0
        %v2283 = vsel %vm2196, %v2275, 0.0
        %v2284 = vadd.f32 %v2282, %v2283
        %v2285 = vsel %vm2196, %v2276, 0.0
        %v2286 = vadd.f32 %v2284, %v2285
        %v2287 = vsel %vm2196, %v2277, 0.0
        %v2288 = vadd.f32 %v2286, %v2287
        %v2289 = vsel %vm2196, %v2278, 0.0
        %v2290 = vadd.f32 %v2288, %v2289
        %v2291 = vsel %vm2196, %v2279, 0.0
        %v2292 = vadd.f32 %v2290, %v2291
        %v2293 = vsel %vm2196, %v2280, 0.0
        %v2294 = vadd.f32 %v2292, %v2293
        %v2295 = vsel %vm2196, %v2281, 0.0
        %v2296 = vadd.f32 %v2294, %v2295
        %v2297 = vrot.slane %v2296, 4
        %v2298 = vadd.f32 %v2296, %v2297
        %v2299 = vrot.slane %v2298, 2
        %v2300 = vadd.f32 %v2298, %v2299
        %v2301 = vrot.slane %v2300, 1
        %v2302 = vadd.f32 %v2300, %v2301
        %v2304 = vsel %vm2196, %v2302, 0
        %2306 = vmatpush.msra.mxu0 0.0
        %2307 = vmatpush.msra.mxu0 0.0
        %2308 = vmatpush.msra.mxu0 0.0
        %2309 = vmatpush.msra.mxu0 0.0
        %2310 = vmatpush.msra.mxu0 0.0
        %2311 = vmatpush.msra.mxu0 0.0
        %2312 = vmatpush.msra.mxu0 0.0
        %2313 = vmatpush.msra.mxu0 0.0
        %2314 = vmatpush.msra.mxu0 %v2191
        %2315 = vmatpush.msra.mxu0 %v2190
        %2316 = vmatpush.msra.mxu0 %v2189
        %2317 = vmatpush.msra.mxu0 %v2188
        %2318 = vmatpush.msra.mxu0 %v2187
        %2319 = vmatpush.msra.mxu0 %v2186
        %2320 = vmatpush.msra.mxu0 %v2185
        %2321 = vmatpush.msra.mxu0 %v2184
        %2322 = vmatmul.f32.gmra.mxu0 %v2304
        %v2323 = vpop.f32.mrf.mxu0
        %v2324 = vadd.f32 0.0, %v2323
        %2325 = vdwg.mxu0
        %v2326 = vmul.f32 %v2324, 0.0078125
        %v2327 = vadd.f32 %v2326, 1e-05
        %v2328 = vrsqrt.pop %v2327
        %v2329 = vmul.f32 %v2328, %v2327
        %v2330 = vmul.f32 %v2329, %v2328
        %v2331 = vmul.f32 0.5, %v2330
        %v2332 = vsub.f32 1.5, %v2331
        %v2333 = vmul.f32 %v2328, %v2332
        %vm2334 = vweird.f32 %v2327
        %vm2335 = vweird.f32 %v2328
        %vm2336 = vmor %vm2334, %vm2335
        %v2337 = vsel %vm2336, %v2328, %v2333
        %v2339 = vsel %vm800, %v2337, 0
        %2341 = vmatpush.msra.mxu0 0.0
        %2342 = vmatpush.msra.mxu0 0.0
        %2343 = vmatpush.msra.mxu0 0.0
        %2344 = vmatpush.msra.mxu0 0.0
        %2345 = vmatpush.msra.mxu0 0.0
        %2346 = vmatpush.msra.mxu0 0.0
        %2347 = vmatpush.msra.mxu0 0.0
        %2348 = vmatpush.msra.mxu0 0.0
        %2349 = vmatpush.msra.mxu0 0.0
        %2350 = vmatpush.msra.mxu0 0.0
        %2351 = vmatpush.msra.mxu0 0.0
        %2352 = vmatpush.msra.mxu0 0.0
        %2353 = vmatpush.msra.mxu0 %v2195
        %2354 = vmatpush.msra.mxu0 %v2194
        %2355 = vmatpush.msra.mxu0 %v2193
        %2356 = vmatpush.msra.mxu0 %v2192
        %2357 = vmatmul.f32.gmra.mxu0 %v2339
        %v2358 = vpop.f32.mrf.mxu0
        %v2359 = vadd.f32 0.0, %v2358
        %2360 = vdwg.mxu0
        %v2361 = vperm.slane %v2359, 0
        %v2362 = vmul.f32 %v2266, %v2361
        %v2363 = vmul.f32 %v2267, %v2361
        %v2364 = vmul.f32 %v2268, %v2361
        %v2365 = vmul.f32 %v2269, %v2361
        %v2366 = vmul.f32 %v2270, %v2361
        %v2367 = vmul.f32 %v2271, %v2361
        %v2368 = vmul.f32 %v2272, %v2361
        %v2369 = vmul.f32 %v2273, %v2361
        %v2371 = vperm.slane %v2182, 0
        %v2373 = vmul.f32 %v2362, %v2371
        %v2374 = vmul.f32 %v2363, %v2371
        %v2375 = vmul.f32 %v2364, %v2371
        %v2376 = vmul.f32 %v2365, %v2371
        %v2377 = vmul.f32 %v2366, %v2371
        %v2378 = vmul.f32 %v2367, %v2371
        %v2379 = vmul.f32 %v2368, %v2371
        %v2380 = vmul.f32 %v2369, %v2371
        %v2382 = vperm.slane %v2183, 0
        %v2384 = vadd.f32 %v2373, %v2382
        %v2385 = vadd.f32 %v2374, %v2382
        %v2386 = vadd.f32 %v2375, %v2382
        %v2387 = vadd.f32 %v2376, %v2382
        %v2388 = vadd.f32 %v2377, %v2382
        %v2389 = vadd.f32 %v2378, %v2382
        %v2390 = vadd.f32 %v2379, %v2382
        %v2391 = vadd.f32 %v2380, %v2382
        %v2392 = vxor.u32 %v2384, 2147483648
        %v2393 = vxor.u32 %v2385, 2147483648
        %v2394 = vxor.u32 %v2386, 2147483648
        %v2395 = vxor.u32 %v2387, 2147483648
        %v2396 = vxor.u32 %v2388, 2147483648
        %v2397 = vxor.u32 %v2389, 2147483648
        %v2398 = vxor.u32 %v2390, 2147483648
        %v2399 = vxor.u32 %v2391, 2147483648
        %v2400 = vmul.f32 %v2392, 1.442695
        %v2401 = vpow.pop %v2400
        %v2402 = vmul.f32 %v2393, 1.442695
        %v2403 = vpow.pop %v2402
        %v2404 = vmul.f32 %v2394, 1.442695
        %v2405 = vpow.pop %v2404
        %v2406 = vmul.f32 %v2395, 1.442695
        %v2407 = vpow.pop %v2406
        %v2408 = vmul.f32 %v2396, 1.442695
        %v2409 = vpow.pop %v2408
        %v2410 = vmul.f32 %v2397, 1.442695
        %v2411 = vpow.pop %v2410
        %v2412 = vmul.f32 %v2398, 1.442695
        %v2413 = vpow.pop %v2412
        %v2414 = vmul.f32 %v2399, 1.442695
        %v2415 = vpow.pop %v2414
        %v2416 = vadd.f32 %v2401, 1.0
        %v2417 = vadd.f32 %v2403, 1.0
        %v2418 = vadd.f32 %v2405, 1.0
        %v2419 = vadd.f32 %v2407, 1.0
        %v2420 = vadd.f32 %v2409, 1.0
        %v2421 = vadd.f32 %v2411, 1.0
        %v2422 = vadd.f32 %v2413, 1.0
        %v2423 = vadd.f32 %v2415, 1.0
        %v2424 = vrcp.pop %v2416
        %v2425 = vmul.f32 %v2416, %v2424
        %v2426 = vsub.f32 1.0, %v2425
        %v2427 = vmul.f32 %v2424, %v2426
        %v2428 = vadd.f32 %v2424, %v2427
        %vm2429 = vweird.f32 %v2416
        %vm2430 = vweird.f32 %v2424
        %vm2431 = vmor %vm2429, %vm2430
        %v2432 = vsel %vm2431, %v2424, %v2428
        %v2433 = vand.u32 2147483647, %v2416
        %vm2434 = vcmp.eq.f32.partialorder %v2433, 8.507059e+37
        %v2435 = vand.u32 %v2416, 2147483648
        %v2436 = vor.u32 1.1754944e-38, %v2435
        %v2437 = vsel %vm2434, %v2436, %v2432
        %v2438 = vmul.f32 1.0, %v2437
        %v2439 = vrcp.pop %v2417
        %v2440 = vmul.f32 %v2417, %v2439
        %v2441 = vsub.f32 1.0, %v2440
        %v2442 = vmul.f32 %v2439, %v2441
        %v2443 = vadd.f32 %v2439, %v2442
        %vm2444 = vweird.f32 %v2417
        %vm2445 = vweird.f32 %v2439
        %vm2446 = vmor %vm2444, %vm2445
        %v2447 = vsel %vm2446, %v2439, %v2443
        %v2448 = vand.u32 2147483647, %v2417
        %vm2449 = vcmp.eq.f32.partialorder %v2448, 8.507059e+37
        %v2450 = vand.u32 %v2417, 2147483648
        %v2451 = vor.u32 1.1754944e-38, %v2450
        %v2452 = vsel %vm2449, %v2451, %v2447
        %v2453 = vmul.f32 1.0, %v2452
        %v2454 = vrcp.pop %v2418
        %v2455 = vmul.f32 %v2418, %v2454
        %v2456 = vsub.f32 1.0, %v2455
        %v2457 = vmul.f32 %v2454, %v2456
        %v2458 = vadd.f32 %v2454, %v2457
        %vm2459 = vweird.f32 %v2418
        %vm2460 = vweird.f32 %v2454
        %vm2461 = vmor %vm2459, %vm2460
        %v2462 = vsel %vm2461, %v2454, %v2458
        %v2463 = vand.u32 2147483647, %v2418
        %vm2464 = vcmp.eq.f32.partialorder %v2463, 8.507059e+37
        %v2465 = vand.u32 %v2418, 2147483648
        %v2466 = vor.u32 1.1754944e-38, %v2465
        %v2467 = vsel %vm2464, %v2466, %v2462
        %v2468 = vmul.f32 1.0, %v2467
        %v2469 = vrcp.pop %v2419
        %v2470 = vmul.f32 %v2419, %v2469
        %v2471 = vsub.f32 1.0, %v2470
        %v2472 = vmul.f32 %v2469, %v2471
        %v2473 = vadd.f32 %v2469, %v2472
        %vm2474 = vweird.f32 %v2419
        %vm2475 = vweird.f32 %v2469
        %vm2476 = vmor %vm2474, %vm2475
        %v2477 = vsel %vm2476, %v2469, %v2473
        %v2478 = vand.u32 2147483647, %v2419
        %vm2479 = vcmp.eq.f32.partialorder %v2478, 8.507059e+37
        %v2480 = vand.u32 %v2419, 2147483648
        %v2481 = vor.u32 1.1754944e-38, %v2480
        %v2482 = vsel %vm2479, %v2481, %v2477
        %v2483 = vmul.f32 1.0, %v2482
        %v2484 = vrcp.pop %v2420
        %v2485 = vmul.f32 %v2420, %v2484
        %v2486 = vsub.f32 1.0, %v2485
        %v2487 = vmul.f32 %v2484, %v2486
        %v2488 = vadd.f32 %v2484, %v2487
        %vm2489 = vweird.f32 %v2420
        %vm2490 = vweird.f32 %v2484
        %vm2491 = vmor %vm2489, %vm2490
        %v2492 = vsel %vm2491, %v2484, %v2488
        %v2493 = vand.u32 2147483647, %v2420
        %vm2494 = vcmp.eq.f32.partialorder %v2493, 8.507059e+37
        %v2495 = vand.u32 %v2420, 2147483648
        %v2496 = vor.u32 1.1754944e-38, %v2495
        %v2497 = vsel %vm2494, %v2496, %v2492
        %v2498 = vmul.f32 1.0, %v2497
        %v2499 = vrcp.pop %v2421
        %v2500 = vmul.f32 %v2421, %v2499
        %v2501 = vsub.f32 1.0, %v2500
        %v2502 = vmul.f32 %v2499, %v2501
        %v2503 = vadd.f32 %v2499, %v2502
        %vm2504 = vweird.f32 %v2421
        %vm2505 = vweird.f32 %v2499
        %vm2506 = vmor %vm2504, %vm2505
        %v2507 = vsel %vm2506, %v2499, %v2503
        %v2508 = vand.u32 2147483647, %v2421
        %vm2509 = vcmp.eq.f32.partialorder %v2508, 8.507059e+37
        %v2510 = vand.u32 %v2421, 2147483648
        %v2511 = vor.u32 1.1754944e-38, %v2510
        %v2512 = vsel %vm2509, %v2511, %v2507
        %v2513 = vmul.f32 1.0, %v2512
        %v2514 = vrcp.pop %v2422
        %v2515 = vmul.f32 %v2422, %v2514
        %v2516 = vsub.f32 1.0, %v2515
        %v2517 = vmul.f32 %v2514, %v2516
        %v2518 = vadd.f32 %v2514, %v2517
        %vm2519 = vweird.f32 %v2422
        %vm2520 = vweird.f32 %v2514
        %vm2521 = vmor %vm2519, %vm2520
        %v2522 = vsel %vm2521, %v2514, %v2518
        %v2523 = vand.u32 2147483647, %v2422
        %vm2524 = vcmp.eq.f32.partialorder %v2523, 8.507059e+37
        %v2525 = vand.u32 %v2422, 2147483648
        %v2526 = vor.u32 1.1754944e-38, %v2525
        %v2527 = vsel %vm2524, %v2526, %v2522
        %v2528 = vmul.f32 1.0, %v2527
        %v2529 = vrcp.pop %v2423
        %v2530 = vmul.f32 %v2423, %v2529
        %v2531 = vsub.f32 1.0, %v2530
        %v2532 = vmul.f32 %v2529, %v2531
        %v2533 = vadd.f32 %v2529, %v2532
        %vm2534 = vweird.f32 %v2423
        %vm2535 = vweird.f32 %v2529
        %vm2536 = vmor %vm2534, %vm2535
        %v2537 = vsel %vm2536, %v2529, %v2533
        %v2538 = vand.u32 2147483647, %v2423
        %vm2539 = vcmp.eq.f32.partialorder %v2538, 8.507059e+37
        %v2540 = vand.u32 %v2423, 2147483648
        %v2541 = vor.u32 1.1754944e-38, %v2540
        %v2542 = vsel %vm2539, %v2541, %v2537
        %v2543 = vmul.f32 1.0, %v2542
        %v2544 = vmul.f32 %v2438, %v1185
        %v2545 = vmul.f32 %v2453, %v1187
        %v2546 = vmul.f32 %v2468, %v1189
        %v2547 = vmul.f32 %v2483, %v1191
        %v2548 = vmul.f32 %v2498, %v1193
        %v2549 = vmul.f32 %v2513, %v1195
        %v2550 = vmul.f32 %v2528, %v1194
        %v2551 = vpack.c.bf16 %v2545, %v2544
        %v2552 = vpack.c.bf16 %v2547, %v2546
        %v2553 = vpack.c.bf16 %v2549, %v2548
        %v2554 = vpack.c.bf16 %v2550, %v2550
        %v2555 = vld [vmem:[#allocation7] sm:$0xf]
        %v2556 = vld [vmem:[#allocation7 + $0x4] sm:$0xf]
        %v2557 = vld [vmem:[#allocation7 + $0x8] sm:$0xf]
        %v2558 = vld [vmem:[#allocation7 + $0xc] sm:$0xf]
        %v2559 = vld [vmem:[#allocation7 + $0x10] sm:$0xf]
        %v2560 = vld [vmem:[#allocation7 + $0x14] sm:$0xf]
        %v2561 = vld [vmem:[#allocation7 + $0x18] sm:$0xf]
        %v2562 = vld [vmem:[#allocation7 + $0x1c] sm:$0xf]
        %v2563 = vpack.c.bf16 %v2438, 0.0
        %v2564 = vpack.c.bf16 %v2468, %v2453
        %v2565 = vpack.c.bf16 %v2498, %v2483
        %v2566 = vpack.c.bf16 %v2528, %v2513
        %s2567 = scalar_lea.vmem [#allocation7], 32
        %v2568 = vld [vmem:[%s2567] sm:$0xf]
        %v2569 = vld [vmem:[%s2567 + $0x4] sm:$0xf]
        %v2570 = vld [vmem:[%s2567 + $0x8] sm:$0xf]
        %v2571 = vld [vmem:[%s2567 + $0xc] sm:$0xf]
        %v2572 = vld [vmem:[%s2567 + $0x10] sm:$0xf]
        %v2573 = vld [vmem:[%s2567 + $0x14] sm:$0xf]
        %v2574 = vld [vmem:[%s2567 + $0x18] sm:$0xf]
        %v2575 = vld [vmem:[%s2567 + $0x1c] sm:$0xf]
        %v2584 = vunpack.c.l.b16 %v2568
        %v2585 = vunpack.c.l.b16 %v2569
        %v2586 = vunpack.c.l.b16 %v2570
        %v2587 = vunpack.c.l.b16 %v2571
        %v2588 = vunpack.c.l.b16 %v2572
        %v2589 = vunpack.c.l.b16 %v2573
        %v2590 = vunpack.c.l.b16 %v2574
        %v2591 = vunpack.c.l.b16 %v2575
        %v2592 = vpack.c.b16 %v2585, %v2584
        %v2593 = vpack.c.b16 %v2587, %v2586
        %v2594 = vpack.c.b16 %v2589, %v2588
        %v2595 = vpack.c.b16 %v2591, %v2590
        %v2601 = vsel %vm2196, %v2563, 0
        %v2604 = vsel %vm2196, %v2564, 0
        %v2607 = vsel %vm2196, %v2565, 0
        %v2610 = vsel %vm2196, %v2566, 0
        %2612 = vmatpush.bf16.msra.mxu0 0
        %2613 = vmatpush.bf16.msra.mxu0 0
        %2614 = vmatpush.bf16.msra.mxu0 0
        %2615 = vmatpush.bf16.msra.mxu0 0
        %2616 = vmatpush.bf16.msra.mxu0 %v2595
        %2617 = vmatpush.bf16.msra.mxu0 %v2594
        %2618 = vmatpush.bf16.msra.mxu0 %v2593
        %2619 = vmatpush.bf16.msra.mxu0 %v2592
        %2620 = vmatmul.bf16.gmra.mxu0 %v2601
        %v2621 = vpop.f32.mrf.mxu0
        %v2622 = vadd.f32 0.0, %v2621
        %v2623 = vpop.f32.mrf.mxu0
        %v2624 = vadd.f32 0.0, %v2623
        %2625 = vmatmul.bf16.gmra.mxu0 %v2604
        %v2626 = vpop.f32.mrf.mxu0
        %v2627 = vadd.f32 0.0, %v2626
        %v2628 = vpop.f32.mrf.mxu0
        %v2629 = vadd.f32 0.0, %v2628
        %2630 = vmatmul.bf16.gmra.mxu0 %v2607
        %v2631 = vpop.f32.mrf.mxu0
        %v2632 = vadd.f32 0.0, %v2631
        %v2633 = vpop.f32.mrf.mxu0
        %v2634 = vadd.f32 0.0, %v2633
        %2635 = vmatmul.bf16.gmra.mxu0 %v2610
        %v2636 = vpop.f32.mrf.mxu0
        %v2637 = vadd.f32 0.0, %v2636
        %v2638 = vpop.f32.mrf.mxu0
        %v2639 = vadd.f32 0.0, %v2638
        %2640 = vdwg.mxu0
        %v2642 = vshrl.u32 %v2551, 16
        %v2644 = vrot.slane %v2642, 3
        %v2645 = vshll.u32 %v2551, 16
        %v2647 = vrot.slane %v2645, 4
        %v2648 = vor.u32 %v2644, %v2647
        %v2649 = vsel %vm1285, %v1293, %v2648
        %v2651 = vshrl.u32 %v2552, 16
        %v2653 = vrot.slane %v2651, 3
        %v2654 = vshll.u32 %v2552, 16
        %v2656 = vrot.slane %v2654, 4
        %v2657 = vor.u32 %v2653, %v2656
        %v2658 = vsel %vm1285, %v2648, %v2657
        %v2660 = vshrl.u32 %v2553, 16
        %v2662 = vrot.slane %v2660, 3
        %v2663 = vshll.u32 %v2553, 16
        %v2665 = vrot.slane %v2663, 4
        %v2666 = vor.u32 %v2662, %v2665
        %v2667 = vsel %vm1285, %v2657, %v2666
        %v2669 = vshrl.u32 %v2554, 16
        %v2671 = vrot.slane %v2669, 3
        %v2672 = vshll.u32 %v2554, 16
        %v2674 = vrot.slane %v2672, 4
        %v2675 = vor.u32 %v2671, %v2674
        %v2676 = vsel %vm1285, %v2666, %v2675
        %v2685 = vunpack.c.l.b16 %v2555
        %v2686 = vunpack.c.l.b16 %v2556
        %v2687 = vunpack.c.l.b16 %v2557
        %v2688 = vunpack.c.l.b16 %v2558
        %v2689 = vunpack.c.l.b16 %v2559
        %v2690 = vunpack.c.l.b16 %v2560
        %v2691 = vunpack.c.l.b16 %v2561
        %v2692 = vunpack.c.l.b16 %v2562
        %v2693 = vpack.c.b16 %v2686, %v2685
        %v2694 = vpack.c.b16 %v2688, %v2687
        %v2695 = vpack.c.b16 %v2690, %v2689
        %v2696 = vpack.c.b16 %v2692, %v2691
        %v2702 = vsel %vm2196, %v2649, 0
        %v2705 = vsel %vm2196, %v2658, 0
        %v2708 = vsel %vm2196, %v2667, 0
        %v2711 = vsel %vm2196, %v2676, 0
        %2713 = vmatpush.bf16.msra.mxu0 0
        %2714 = vmatpush.bf16.msra.mxu0 0
        %2715 = vmatpush.bf16.msra.mxu0 0
        %2716 = vmatpush.bf16.msra.mxu0 0
        %2717 = vmatpush.bf16.msra.mxu0 %v2696
        %2718 = vmatpush.bf16.msra.mxu0 %v2695
        %2719 = vmatpush.bf16.msra.mxu0 %v2694
        %2720 = vmatpush.bf16.msra.mxu0 %v2693
        %2721 = vmatmul.bf16.gmra.mxu0 %v2702
        %v2722 = vpop.f32.mrf.mxu0
        %v2723 = vadd.f32 %v2622, %v2722
        %v2724 = vpop.f32.mrf.mxu0
        %v2725 = vadd.f32 %v2624, %v2724
        %2726 = vmatmul.bf16.gmra.mxu0 %v2705
        %v2727 = vpop.f32.mrf.mxu0
        %v2728 = vadd.f32 %v2627, %v2727
        %v2729 = vpop.f32.mrf.mxu0
        %v2730 = vadd.f32 %v2629, %v2729
        %2731 = vmatmul.bf16.gmra.mxu0 %v2708
        %v2732 = vpop.f32.mrf.mxu0
        %v2733 = vadd.f32 %v2632, %v2732
        %v2734 = vpop.f32.mrf.mxu0
        %v2735 = vadd.f32 %v2634, %v2734
        %2736 = vmatmul.bf16.gmra.mxu0 %v2711
        %v2737 = vpop.f32.mrf.mxu0
        %v2738 = vadd.f32 %v2637, %v2737
        %v2739 = vpop.f32.mrf.mxu0
        %v2740 = vadd.f32 %v2639, %v2739
        %2741 = vdwg.mxu0
        %v2742 = vmul.f32 %v2438, %v1418
        %v2743 = vmul.f32 %v2453, %v1420
        %v2744 = vmul.f32 %v2468, %v1422
        %v2745 = vmul.f32 %v2483, %v1424
        %v2746 = vmul.f32 %v2498, %v1426
        %v2747 = vmul.f32 %v2513, %v1428
        %v2748 = vmul.f32 %v2528, %v1430
        %v2749 = vmul.f32 %v2543, %v1429
        %v2750 = vpack.c.bf16 %v2742, %v1440
        %v2751 = vpack.c.bf16 %v2744, %v2743
        %v2752 = vpack.c.bf16 %v2746, %v2745
        %v2753 = vpack.c.bf16 %v2748, %v2747
        %v2754 = vpack.c.bf16 %v2749, %v2749
        %s2755 = scalar_lea.vmem [#allocation7], 64
        %v2756 = vld [vmem:[%s2755] sm:$0xf]
        %v2757 = vld [vmem:[%s2755 + $0x4] sm:$0xf]
        %v2758 = vld [vmem:[%s2755 + $0x8] sm:$0xf]
        %v2759 = vld [vmem:[%s2755 + $0xc] sm:$0xf]
        %v2760 = vld [vmem:[%s2755 + $0x10] sm:$0xf]
        %v2761 = vld [vmem:[%s2755 + $0x14] sm:$0xf]
        %v2762 = vld [vmem:[%s2755 + $0x18] sm:$0xf]
        %v2763 = vld [vmem:[%s2755 + $0x1c] sm:$0xf]
        %v2765 = vshrl.u32 %v2750, 16
        %v2767 = vshll.u32 %v2750, 16
        %v2769 = vrot.slane %v2767, 1
        %v2770 = vor.u32 %v2765, %v2769
        %v2772 = vshll.u32 %v2751, 16
        %v2774 = vrot.slane %v2772, 1
        %v2775 = vsel %vm1459, %v2770, %v2774
        %v2776 = vshrl.u32 %v2751, 16
        %v2778 = vor.u32 %v2776, %v2774
        %v2780 = vshll.u32 %v2752, 16
        %v2782 = vrot.slane %v2780, 1
        %v2783 = vsel %vm1459, %v2778, %v2782
        %v2784 = vshrl.u32 %v2752, 16
        %v2786 = vor.u32 %v2784, %v2782
        %v2788 = vshll.u32 %v2753, 16
        %v2790 = vrot.slane %v2788, 1
        %v2791 = vsel %vm1459, %v2786, %v2790
        %v2792 = vshrl.u32 %v2753, 16
        %v2794 = vor.u32 %v2792, %v2790
        %v2796 = vshll.u32 %v2754, 16
        %v2798 = vrot.slane %v2796, 1
        %v2799 = vsel %vm1459, %v2794, %v2798
        %v2808 = vunpack.c.l.b16 %v2756
        %v2809 = vunpack.c.l.b16 %v2757
        %v2810 = vunpack.c.l.b16 %v2758
        %v2811 = vunpack.c.l.b16 %v2759
        %v2812 = vunpack.c.l.b16 %v2760
        %v2813 = vunpack.c.l.b16 %v2761
        %v2814 = vunpack.c.l.b16 %v2762
        %v2815 = vunpack.c.l.b16 %v2763
        %v2816 = vpack.c.b16 %v2809, %v2808
        %v2817 = vpack.c.b16 %v2811, %v2810
        %v2818 = vpack.c.b16 %v2813, %v2812
        %v2819 = vpack.c.b16 %v2815, %v2814
        %v2825 = vsel %vm2196, %v2775, 0
        %v2828 = vsel %vm2196, %v2783, 0
        %v2831 = vsel %vm2196, %v2791, 0
        %v2834 = vsel %vm2196, %v2799, 0
        %2836 = vmatpush.bf16.msra.mxu0 0
        %2837 = vmatpush.bf16.msra.mxu0 0
        %2838 = vmatpush.bf16.msra.mxu0 0
        %2839 = vmatpush.bf16.msra.mxu0 0
        %2840 = vmatpush.bf16.msra.mxu0 %v2819
        %2841 = vmatpush.bf16.msra.mxu0 %v2818
        %2842 = vmatpush.bf16.msra.mxu0 %v2817
        %2843 = vmatpush.bf16.msra.mxu0 %v2816
        %2844 = vmatmul.bf16.gmra.mxu0 %v2825
        %v2845 = vpop.f32.mrf.mxu0
        %v2846 = vadd.f32 0.0, %v2845
        %v2847 = vpop.f32.mrf.mxu0
        %v2848 = vadd.f32 0.0, %v2847
        %2849 = vmatmul.bf16.gmra.mxu0 %v2828
        %v2850 = vpop.f32.mrf.mxu0
        %v2851 = vadd.f32 0.0, %v2850
        %v2852 = vpop.f32.mrf.mxu0
        %v2853 = vadd.f32 0.0, %v2852
        %2854 = vmatmul.bf16.gmra.mxu0 %v2831
        %v2855 = vpop.f32.mrf.mxu0
        %v2856 = vadd.f32 0.0, %v2855
        %v2857 = vpop.f32.mrf.mxu0
        %v2858 = vadd.f32 0.0, %v2857
        %2859 = vmatmul.bf16.gmra.mxu0 %v2834
        %v2860 = vpop.f32.mrf.mxu0
        %v2861 = vadd.f32 0.0, %v2860
        %v2862 = vpop.f32.mrf.mxu0
        %v2863 = vadd.f32 0.0, %v2862
        %2864 = vdwg.mxu0
        %v2865 = vadd.f32 %v2723, %v2846
        %v2866 = vadd.f32 %v2725, %v2848
        %v2867 = vadd.f32 %v2728, %v2851
        %v2868 = vadd.f32 %v2730, %v2853
        %v2869 = vadd.f32 %v2733, %v2856
        %v2870 = vadd.f32 %v2735, %v2858
        %v2871 = vadd.f32 %v2738, %v2861
        %v2872 = vadd.f32 %v2740, %v2863
        %v2873 = vmul.f32 %v2438, %v1183
        %v2874 = vmul.f32 %v2453, %v1185
        %v2875 = vmul.f32 %v2468, %v1187
        %v2876 = vmul.f32 %v2483, %v1189
        %v2877 = vmul.f32 %v2498, %v1191
        %v2878 = vmul.f32 %v2513, %v1193
        %v2879 = vmul.f32 %v2528, %v1195
        %v2880 = vmul.f32 %v2543, %v1194
        %v2881 = vpack.c.bf16 %v2873, %v1205
        %v2882 = vpack.c.bf16 %v2875, %v2874
        %v2883 = vpack.c.bf16 %v2877, %v2876
        %v2884 = vpack.c.bf16 %v2879, %v2878
        %v2885 = vpack.c.bf16 %v2880, %v2880
        %s2886 = scalar_lea.vmem [#allocation7], 96
        %v2887 = vld [vmem:[%s2886] sm:$0xf]
        %v2888 = vld [vmem:[%s2886 + $0x4] sm:$0xf]
        %v2889 = vld [vmem:[%s2886 + $0x8] sm:$0xf]
        %v2890 = vld [vmem:[%s2886 + $0xc] sm:$0xf]
        %v2891 = vld [vmem:[%s2886 + $0x10] sm:$0xf]
        %v2892 = vld [vmem:[%s2886 + $0x14] sm:$0xf]
        %v2893 = vld [vmem:[%s2886 + $0x18] sm:$0xf]
        %v2894 = vld [vmem:[%s2886 + $0x1c] sm:$0xf]
        %v2896 = vshrl.u32 %v2881, 16
        %v2898 = vrot.slane %v2896, 3
        %v2899 = vshll.u32 %v2881, 16
        %v2901 = vrot.slane %v2899, 4
        %v2902 = vor.u32 %v2898, %v2901
        %v2904 = vshrl.u32 %v2882, 16
        %v2906 = vrot.slane %v2904, 3
        %v2907 = vshll.u32 %v2882, 16
        %v2909 = vrot.slane %v2907, 4
        %v2910 = vor.u32 %v2906, %v2909
        %v2911 = vsel %vm1285, %v2902, %v2910
        %v2913 = vshrl.u32 %v2883, 16
        %v2915 = vrot.slane %v2913, 3
        %v2916 = vshll.u32 %v2883, 16
        %v2918 = vrot.slane %v2916, 4
        %v2919 = vor.u32 %v2915, %v2918
        %v2920 = vsel %vm1285, %v2910, %v2919
        %v2922 = vshrl.u32 %v2884, 16
        %v2924 = vrot.slane %v2922, 3
        %v2925 = vshll.u32 %v2884, 16
        %v2927 = vrot.slane %v2925, 4
        %v2928 = vor.u32 %v2924, %v2927
        %v2929 = vsel %vm1285, %v2919, %v2928
        %v2931 = vshrl.u32 %v2885, 16
        %v2933 = vrot.slane %v2931, 3
        %v2934 = vshll.u32 %v2885, 16
        %v2936 = vrot.slane %v2934, 4
        %v2937 = vor.u32 %v2933, %v2936
        %v2938 = vsel %vm1285, %v2928, %v2937
        %v2947 = vunpack.c.l.b16 %v2887
        %v2948 = vunpack.c.l.b16 %v2888
        %v2949 = vunpack.c.l.b16 %v2889
        %v2950 = vunpack.c.l.b16 %v2890
        %v2951 = vunpack.c.l.b16 %v2891
        %v2952 = vunpack.c.l.b16 %v2892
        %v2953 = vunpack.c.l.b16 %v2893
        %v2954 = vunpack.c.l.b16 %v2894
        %v2955 = vpack.c.b16 %v2948, %v2947
        %v2956 = vpack.c.b16 %v2950, %v2949
        %v2957 = vpack.c.b16 %v2952, %v2951
        %v2958 = vpack.c.b16 %v2954, %v2953
        %v2964 = vsel %vm2196, %v2911, 0
        %v2967 = vsel %vm2196, %v2920, 0
        %v2970 = vsel %vm2196, %v2929, 0
        %v2973 = vsel %vm2196, %v2938, 0
        %2975 = vmatpush.bf16.msra.mxu0 0
        %2976 = vmatpush.bf16.msra.mxu0 0
        %2977 = vmatpush.bf16.msra.mxu0 0
        %2978 = vmatpush.bf16.msra.mxu0 0
        %2979 = vmatpush.bf16.msra.mxu0 %v2958
        %2980 = vmatpush.bf16.msra.mxu0 %v2957
        %2981 = vmatpush.bf16.msra.mxu0 %v2956
        %2982 = vmatpush.bf16.msra.mxu0 %v2955
        %2983 = vmatmul.bf16.gmra.mxu0 %v2964
        %v2984 = vpop.f32.mrf.mxu0
        %v2985 = vadd.f32 0.0, %v2984
        %v2986 = vpop.f32.mrf.mxu0
        %v2987 = vadd.f32 0.0, %v2986
        %2988 = vmatmul.bf16.gmra.mxu0 %v2967
        %v2989 = vpop.f32.mrf.mxu0
        %v2990 = vadd.f32 0.0, %v2989
        %v2991 = vpop.f32.mrf.mxu0
        %v2992 = vadd.f32 0.0, %v2991
        %2993 = vmatmul.bf16.gmra.mxu0 %v2970
        %v2994 = vpop.f32.mrf.mxu0
        %v2995 = vadd.f32 0.0, %v2994
        %v2996 = vpop.f32.mrf.mxu0
        %v2997 = vadd.f32 0.0, %v2996
        %2998 = vmatmul.bf16.gmra.mxu0 %v2973
        %v2999 = vpop.f32.mrf.mxu0
        %v3000 = vadd.f32 0.0, %v2999
        %v3001 = vpop.f32.mrf.mxu0
        %v3002 = vadd.f32 0.0, %v3001
        %3003 = vdwg.mxu0
        %v3004 = vadd.f32 %v2865, %v2985
        %v3005 = vadd.f32 %v2866, %v2987
        %v3006 = vadd.f32 %v2867, %v2990
        %v3007 = vadd.f32 %v2868, %v2992
        %v3008 = vadd.f32 %v2869, %v2995
        %v3009 = vadd.f32 %v2870, %v2997
        %v3010 = vadd.f32 %v2871, %v3000
        %v3011 = vadd.f32 %v2872, %v3002
        %v3012 = vpack.c.bf16 %v2453, %v2438
        %v3013 = vpack.c.bf16 %v2483, %v2468
        %v3014 = vpack.c.bf16 %v2513, %v2498
        %v3015 = vpack.c.bf16 %v2543, %v2528
        %s3016 = scalar_lea.vmem [#allocation7], 128
        %v3017 = vld [vmem:[%s3016] sm:$0xf]
        %v3018 = vld [vmem:[%s3016 + $0x4] sm:$0xf]
        %v3019 = vld [vmem:[%s3016 + $0x8] sm:$0xf]
        %v3020 = vld [vmem:[%s3016 + $0xc] sm:$0xf]
        %v3021 = vld [vmem:[%s3016 + $0x10] sm:$0xf]
        %v3022 = vld [vmem:[%s3016 + $0x14] sm:$0xf]
        %v3023 = vld [vmem:[%s3016 + $0x18] sm:$0xf]
        %v3024 = vld [vmem:[%s3016 + $0x1c] sm:$0xf]
        %v3033 = vunpack.c.l.b16 %v3017
        %v3034 = vunpack.c.l.b16 %v3018
        %v3035 = vunpack.c.l.b16 %v3019
        %v3036 = vunpack.c.l.b16 %v3020
        %v3037 = vunpack.c.l.b16 %v3021
        %v3038 = vunpack.c.l.b16 %v3022
        %v3039 = vunpack.c.l.b16 %v3023
        %v3040 = vunpack.c.l.b16 %v3024
        %v3041 = vpack.c.b16 %v3034, %v3033
        %v3042 = vpack.c.b16 %v3036, %v3035
        %v3043 = vpack.c.b16 %v3038, %v3037
        %v3044 = vpack.c.b16 %v3040, %v3039
        %v3050 = vsel %vm2196, %v3012, 0
        %v3053 = vsel %vm2196, %v3013, 0
        %v3056 = vsel %vm2196, %v3014, 0
        %v3059 = vsel %vm2196, %v3015, 0
        %3061 = vmatpush.bf16.msra.mxu0 0
        %3062 = vmatpush.bf16.msra.mxu0 0
        %3063 = vmatpush.bf16.msra.mxu0 0
        %3064 = vmatpush.bf16.msra.mxu0 0
        %3065 = vmatpush.bf16.msra.mxu0 %v3044
        %3066 = vmatpush.bf16.msra.mxu0 %v3043
        %3067 = vmatpush.bf16.msra.mxu0 %v3042
        %3068 = vmatpush.bf16.msra.mxu0 %v3041
        %3069 = vmatmul.bf16.gmra.mxu0 %v3050
        %v3070 = vpop.f32.mrf.mxu0
        %v3071 = vadd.f32 0.0, %v3070
        %v3072 = vpop.f32.mrf.mxu0
        %v3073 = vadd.f32 0.0, %v3072
        %3074 = vmatmul.bf16.gmra.mxu0 %v3053
        %v3075 = vpop.f32.mrf.mxu0
        %v3076 = vadd.f32 0.0, %v3075
        %v3077 = vpop.f32.mrf.mxu0
        %v3078 = vadd.f32 0.0, %v3077
        %3079 = vmatmul.bf16.gmra.mxu0 %v3056
        %v3080 = vpop.f32.mrf.mxu0
        %v3081 = vadd.f32 0.0, %v3080
        %v3082 = vpop.f32.mrf.mxu0
        %v3083 = vadd.f32 0.0, %v3082
        %3084 = vmatmul.bf16.gmra.mxu0 %v3059
        %v3085 = vpop.f32.mrf.mxu0
        %v3086 = vadd.f32 0.0, %v3085
        %v3087 = vpop.f32.mrf.mxu0
        %v3088 = vadd.f32 0.0, %v3087
        %3089 = vdwg.mxu0
        %v3090 = vadd.f32 %v3004, %v3071
        %v3091 = vadd.f32 %v3005, %v3073
        %v3092 = vadd.f32 %v3006, %v3076
        %v3093 = vadd.f32 %v3007, %v3078
        %v3094 = vadd.f32 %v3008, %v3081
        %v3095 = vadd.f32 %v3009, %v3083
        %v3096 = vadd.f32 %v3010, %v3086
        %v3097 = vadd.f32 %v3011, %v3088
        %v3098 = vmul.f32 %v2438, %v1416
        %v3099 = vmul.f32 %v2453, %v1418
        %v3100 = vmul.f32 %v2468, %v1420
        %v3101 = vmul.f32 %v2483, %v1422
        %v3102 = vmul.f32 %v2498, %v1424
        %v3103 = vmul.f32 %v2513, %v1426
        %v3104 = vmul.f32 %v2528, %v1428
        %v3105 = vmul.f32 %v2543, %v1430
        %v3106 = vpack.c.bf16 %v3099, %v3098
        %v3107 = vpack.c.bf16 %v3101, %v3100
        %v3108 = vpack.c.bf16 %v3103, %v3102
        %v3109 = vpack.c.bf16 %v3105, %v3104
        %s3110 = scalar_lea.vmem [#allocation7], 160
        %v3111 = vld [vmem:[%s3110] sm:$0xf]
        %v3112 = vld [vmem:[%s3110 + $0x4] sm:$0xf]
        %v3113 = vld [vmem:[%s3110 + $0x8] sm:$0xf]
        %v3114 = vld [vmem:[%s3110 + $0xc] sm:$0xf]
        %v3115 = vld [vmem:[%s3110 + $0x10] sm:$0xf]
        %v3116 = vld [vmem:[%s3110 + $0x14] sm:$0xf]
        %v3117 = vld [vmem:[%s3110 + $0x18] sm:$0xf]
        %v3118 = vld [vmem:[%s3110 + $0x1c] sm:$0xf]
        %v3120 = vshrl.u32 %v3106, 16
        %v3122 = vshll.u32 %v3106, 16
        %v3124 = vrot.slane %v3122, 1
        %v3125 = vor.u32 %v3120, %v3124
        %v3127 = vshll.u32 %v3107, 16
        %v3129 = vrot.slane %v3127, 1
        %v3130 = vsel %vm1459, %v3125, %v3129
        %v3131 = vshrl.u32 %v3107, 16
        %v3133 = vor.u32 %v3131, %v3129
        %v3135 = vshll.u32 %v3108, 16
        %v3137 = vrot.slane %v3135, 1
        %v3138 = vsel %vm1459, %v3133, %v3137
        %v3139 = vshrl.u32 %v3108, 16
        %v3141 = vor.u32 %v3139, %v3137
        %v3143 = vshll.u32 %v3109, 16
        %v3145 = vrot.slane %v3143, 1
        %v3146 = vsel %vm1459, %v3141, %v3145
        %v3147 = vshrl.u32 %v3109, 16
        %v3149 = vor.u32 %v3147, %v3145
        %v3150 = vsel %vm1459, %v3149, %v1803
        %v3159 = vunpack.c.l.b16 %v3111
        %v3160 = vunpack.c.l.b16 %v3112
        %v3161 = vunpack.c.l.b16 %v3113
        %v3162 = vunpack.c.l.b16 %v3114
        %v3163 = vunpack.c.l.b16 %v3115
        %v3164 = vunpack.c.l.b16 %v3116
        %v3165 = vunpack.c.l.b16 %v3117
        %v3166 = vunpack.c.l.b16 %v3118
        %v3167 = vpack.c.b16 %v3160, %v3159
        %v3168 = vpack.c.b16 %v3162, %v3161
        %v3169 = vpack.c.b16 %v3164, %v3163
        %v3170 = vpack.c.b16 %v3166, %v3165
        %v3176 = vsel %vm2196, %v3130, 0
        %v3179 = vsel %vm2196, %v3138, 0
        %v3182 = vsel %vm2196, %v3146, 0
        %v3185 = vsel %vm2196, %v3150, 0
        %3187 = vmatpush.bf16.msra.mxu0 0
        %3188 = vmatpush.bf16.msra.mxu0 0
        %3189 = vmatpush.bf16.msra.mxu0 0
        %3190 = vmatpush.bf16.msra.mxu0 0
        %3191 = vmatpush.bf16.msra.mxu0 %v3170
        %3192 = vmatpush.bf16.msra.mxu0 %v3169
        %3193 = vmatpush.bf16.msra.mxu0 %v3168
        %3194 = vmatpush.bf16.msra.mxu0 %v3167
        %3195 = vmatmul.bf16.gmra.mxu0 %v3176
        %v3196 = vpop.f32.mrf.mxu0
        %v3197 = vadd.f32 0.0, %v3196
        %v3198 = vpop.f32.mrf.mxu0
        %v3199 = vadd.f32 0.0, %v3198
        %3200 = vmatmul.bf16.gmra.mxu0 %v3179
        %v3201 = vpop.f32.mrf.mxu0
        %v3202 = vadd.f32 0.0, %v3201
        %v3203 = vpop.f32.mrf.mxu0
        %v3204 = vadd.f32 0.0, %v3203
        %3205 = vmatmul.bf16.gmra.mxu0 %v3182
        %v3206 = vpop.f32.mrf.mxu0
        %v3207 = vadd.f32 0.0, %v3206
        %v3208 = vpop.f32.mrf.mxu0
        %v3209 = vadd.f32 0.0, %v3208
        %3210 = vmatmul.bf16.gmra.mxu0 %v3185
        %v3211 = vpop.f32.mrf.mxu0
        %v3212 = vadd.f32 0.0, %v3211
        %v3213 = vpop.f32.mrf.mxu0
        %v3214 = vadd.f32 0.0, %v3213
        %3215 = vdwg.mxu0
        %v3216 = vadd.f32 %v3090, %v3197
        %v3217 = vadd.f32 %v3091, %v3199
        %v3218 = vadd.f32 %v3092, %v3202
        %v3219 = vadd.f32 %v3093, %v3204
        %v3220 = vadd.f32 %v3094, %v3207
        %v3221 = vadd.f32 %v3095, %v3209
        %v3222 = vadd.f32 %v3096, %v3212
        %v3223 = vadd.f32 %v3097, %v3214
        %v3224 = vmul.f32 %v2438, %v1181
        %v3225 = vmul.f32 %v2453, %v1183
        %v3226 = vmul.f32 %v2468, %v1185
        %v3227 = vmul.f32 %v2483, %v1187
        %v3228 = vmul.f32 %v2498, %v1189
        %v3229 = vmul.f32 %v2513, %v1191
        %v3230 = vmul.f32 %v2528, %v1193
        %v3231 = vmul.f32 %v2543, %v1195
        %v3232 = vpack.c.bf16 %v3225, %v3224
        %v3233 = vpack.c.bf16 %v3227, %v3226
        %v3234 = vpack.c.bf16 %v3229, %v3228
        %v3235 = vpack.c.bf16 %v3231, %v3230
        %s3236 = scalar_lea.vmem [#allocation7], 192
        %v3237 = vld [vmem:[%s3236] sm:$0xf]
        %v3238 = vld [vmem:[%s3236 + $0x4] sm:$0xf]
        %v3239 = vld [vmem:[%s3236 + $0x8] sm:$0xf]
        %v3240 = vld [vmem:[%s3236 + $0xc] sm:$0xf]
        %v3241 = vld [vmem:[%s3236 + $0x10] sm:$0xf]
        %v3242 = vld [vmem:[%s3236 + $0x14] sm:$0xf]
        %v3243 = vld [vmem:[%s3236 + $0x18] sm:$0xf]
        %v3244 = vld [vmem:[%s3236 + $0x1c] sm:$0xf]
        %v3246 = vshrl.u32 %v3232, 16
        %v3248 = vrot.slane %v3246, 3
        %v3249 = vshll.u32 %v3232, 16
        %v3251 = vrot.slane %v3249, 4
        %v3252 = vor.u32 %v3248, %v3251
        %v3254 = vshrl.u32 %v3233, 16
        %v3256 = vrot.slane %v3254, 3
        %v3257 = vshll.u32 %v3233, 16
        %v3259 = vrot.slane %v3257, 4
        %v3260 = vor.u32 %v3256, %v3259
        %v3261 = vsel %vm1285, %v3252, %v3260
        %v3263 = vshrl.u32 %v3234, 16
        %v3265 = vrot.slane %v3263, 3
        %v3266 = vshll.u32 %v3234, 16
        %v3268 = vrot.slane %v3266, 4
        %v3269 = vor.u32 %v3265, %v3268
        %v3270 = vsel %vm1285, %v3260, %v3269
        %v3272 = vshrl.u32 %v3235, 16
        %v3274 = vrot.slane %v3272, 3
        %v3275 = vshll.u32 %v3235, 16
        %v3277 = vrot.slane %v3275, 4
        %v3278 = vor.u32 %v3274, %v3277
        %v3279 = vsel %vm1285, %v3269, %v3278
        %v3280 = vsel %vm1285, %v3278, %v1927
        %v3289 = vunpack.c.l.b16 %v3237
        %v3290 = vunpack.c.l.b16 %v3238
        %v3291 = vunpack.c.l.b16 %v3239
        %v3292 = vunpack.c.l.b16 %v3240
        %v3293 = vunpack.c.l.b16 %v3241
        %v3294 = vunpack.c.l.b16 %v3242
        %v3295 = vunpack.c.l.b16 %v3243
        %v3296 = vunpack.c.l.b16 %v3244
        %v3297 = vpack.c.b16 %v3290, %v3289
        %v3298 = vpack.c.b16 %v3292, %v3291
        %v3299 = vpack.c.b16 %v3294, %v3293
        %v3300 = vpack.c.b16 %v3296, %v3295
        %v3306 = vsel %vm2196, %v3261, 0
        %v3309 = vsel %vm2196, %v3270, 0
        %v3312 = vsel %vm2196, %v3279, 0
        %v3315 = vsel %vm2196, %v3280, 0
        %3317 = vmatpush.bf16.msra.mxu0 0
        %3318 = vmatpush.bf16.msra.mxu0 0
        %3319 = vmatpush.bf16.msra.mxu0 0
        %3320 = vmatpush.bf16.msra.mxu0 0
        %3321 = vmatpush.bf16.msra.mxu0 %v3300
        %3322 = vmatpush.bf16.msra.mxu0 %v3299
        %3323 = vmatpush.bf16.msra.mxu0 %v3298
        %3324 = vmatpush.bf16.msra.mxu0 %v3297
        %3325 = vmatmul.bf16.gmra.mxu0 %v3306
        %v3326 = vpop.f32.mrf.mxu0
        %v3327 = vadd.f32 0.0, %v3326
        %v3328 = vpop.f32.mrf.mxu0
        %v3329 = vadd.f32 0.0, %v3328
        %3330 = vmatmul.bf16.gmra.mxu0 %v3309
        %v3331 = vpop.f32.mrf.mxu0
        %v3332 = vadd.f32 0.0, %v3331
        %v3333 = vpop.f32.mrf.mxu0
        %v3334 = vadd.f32 0.0, %v3333
        %3335 = vmatmul.bf16.gmra.mxu0 %v3312
        %v3336 = vpop.f32.mrf.mxu0
        %v3337 = vadd.f32 0.0, %v3336
        %v3338 = vpop.f32.mrf.mxu0
        %v3339 = vadd.f32 0.0, %v3338
        %3340 = vmatmul.bf16.gmra.mxu0 %v3315
        %v3341 = vpop.f32.mrf.mxu0
        %v3342 = vadd.f32 0.0, %v3341
        %v3343 = vpop.f32.mrf.mxu0
        %v3344 = vadd.f32 0.0, %v3343
        %3345 = vdwg.mxu0
        %v3346 = vadd.f32 %v3216, %v3327
        %v3347 = vadd.f32 %v3217, %v3329
        %v3348 = vadd.f32 %v3218, %v3332
        %v3349 = vadd.f32 %v3219, %v3334
        %v3350 = vadd.f32 %v3220, %v3337
        %v3351 = vadd.f32 %v3221, %v3339
        %v3352 = vadd.f32 %v3222, %v3342
        %v3353 = vadd.f32 %v3223, %v3344
        %v3354 = vpack.c.bf16 0.0, %v2543
        %s3355 = scalar_lea.vmem [#allocation7], 224
        %v3356 = vld [vmem:[%s3355] sm:$0xf]
        %v3357 = vld [vmem:[%s3355 + $0x4] sm:$0xf]
        %v3358 = vld [vmem:[%s3355 + $0x8] sm:$0xf]
        %v3359 = vld [vmem:[%s3355 + $0xc] sm:$0xf]
        %v3360 = vld [vmem:[%s3355 + $0x10] sm:$0xf]
        %v3361 = vld [vmem:[%s3355 + $0x14] sm:$0xf]
        %v3362 = vld [vmem:[%s3355 + $0x18] sm:$0xf]
        %v3363 = vld [vmem:[%s3355 + $0x1c] sm:$0xf]
        %v3372 = vunpack.c.l.b16 %v3356
        %v3373 = vunpack.c.l.b16 %v3357
        %v3374 = vunpack.c.l.b16 %v3358
        %v3375 = vunpack.c.l.b16 %v3359
        %v3376 = vunpack.c.l.b16 %v3360
        %v3377 = vunpack.c.l.b16 %v3361
        %v3378 = vunpack.c.l.b16 %v3362
        %v3379 = vunpack.c.l.b16 %v3363
        %v3380 = vpack.c.b16 %v3373, %v3372
        %v3381 = vpack.c.b16 %v3375, %v3374
        %v3382 = vpack.c.b16 %v3377, %v3376
        %v3383 = vpack.c.b16 %v3379, %v3378
        %v3389 = vsel %vm2196, %v3354, 0
        %3391 = vmatpush.bf16.msra.mxu0 0
        %3392 = vmatpush.bf16.msra.mxu0 0
        %3393 = vmatpush.bf16.msra.mxu0 0
        %3394 = vmatpush.bf16.msra.mxu0 0
        %3395 = vmatpush.bf16.msra.mxu0 %v3383
        %3396 = vmatpush.bf16.msra.mxu0 %v3382
        %3397 = vmatpush.bf16.msra.mxu0 %v3381
        %3398 = vmatpush.bf16.msra.mxu0 %v3380
        %3399 = vmatmul.bf16.gmra.mxu0 %v2604
        %v3400 = vpop.f32.mrf.mxu0
        %v3401 = vadd.f32 0.0, %v3400
        %v3402 = vpop.f32.mrf.mxu0
        %v3403 = vadd.f32 0.0, %v3402
        %3404 = vmatmul.bf16.gmra.mxu0 %v2607
        %v3405 = vpop.f32.mrf.mxu0
        %v3406 = vadd.f32 0.0, %v3405
        %v3407 = vpop.f32.mrf.mxu0
        %v3408 = vadd.f32 0.0, %v3407
        %3409 = vmatmul.bf16.gmra.mxu0 %v2610
        %v3410 = vpop.f32.mrf.mxu0
        %v3411 = vadd.f32 0.0, %v3410
        %v3412 = vpop.f32.mrf.mxu0
        %v3413 = vadd.f32 0.0, %v3412
        %3414 = vmatmul.bf16.gmra.mxu0 %v3389
        %v3415 = vpop.f32.mrf.mxu0
        %v3416 = vadd.f32 0.0, %v3415
        %v3417 = vpop.f32.mrf.mxu0
        %v3418 = vadd.f32 0.0, %v3417
        %3419 = vdwg.mxu0
        %v3420 = vadd.f32 %v3346, %v3401
        %v3421 = vadd.f32 %v3347, %v3403
        %v3422 = vadd.f32 %v3348, %v3406
        %v3423 = vadd.f32 %v3349, %v3408
        %v3424 = vadd.f32 %v3350, %v3411
        %v3425 = vadd.f32 %v3351, %v3413
        %v3426 = vadd.f32 %v3352, %v3416
        %v3427 = vadd.f32 %v3353, %v3418
        %v3428 = vmul.f32 %v2453, %v1416
        %v3429 = vmul.f32 %v2468, %v1418
        %v3430 = vmul.f32 %v2483, %v1420
        %v3431 = vmul.f32 %v2498, %v1422
        %v3432 = vmul.f32 %v2513, %v1424
        %v3433 = vmul.f32 %v2528, %v1426
        %v3434 = vmul.f32 %v2543, %v1428
        %v3435 = vpack.c.bf16 %v3429, %v3428
        %v3436 = vpack.c.bf16 %v3431, %v3430
        %v3437 = vpack.c.bf16 %v3433, %v3432
        %v3438 = vpack.c.bf16 %v2055, %v3434
        %s3439 = scalar_lea.vmem [#allocation7], 256
        %v3440 = vld [vmem:[%s3439] sm:$0xf]
        %v3441 = vld [vmem:[%s3439 + $0x4] sm:$0xf]
        %v3442 = vld [vmem:[%s3439 + $0x8] sm:$0xf]
        %v3443 = vld [vmem:[%s3439 + $0xc] sm:$0xf]
        %v3444 = vld [vmem:[%s3439 + $0x10] sm:$0xf]
        %v3445 = vld [vmem:[%s3439 + $0x14] sm:$0xf]
        %v3446 = vld [vmem:[%s3439 + $0x18] sm:$0xf]
        %v3447 = vld [vmem:[%s3439 + $0x1c] sm:$0xf]
        %v3449 = vshrl.u32 %v3435, 16
        %v3451 = vshll.u32 %v3435, 16
        %v3453 = vrot.slane %v3451, 1
        %v3454 = vor.u32 %v3449, %v3453
        %v3456 = vshll.u32 %v3436, 16
        %v3458 = vrot.slane %v3456, 1
        %v3459 = vsel %vm1459, %v3454, %v3458
        %v3460 = vshrl.u32 %v3436, 16
        %v3462 = vor.u32 %v3460, %v3458
        %v3464 = vshll.u32 %v3437, 16
        %v3466 = vrot.slane %v3464, 1
        %v3467 = vsel %vm1459, %v3462, %v3466
        %v3468 = vshrl.u32 %v3437, 16
        %v3470 = vor.u32 %v3468, %v3466
        %v3472 = vshll.u32 %v3438, 16
        %v3474 = vrot.slane %v3472, 1
        %v3475 = vsel %vm1459, %v3470, %v3474
        %v3476 = vshrl.u32 %v3438, 16
        %v3478 = vor.u32 %v3476, %v3474
        %v3479 = vsel %vm1459, %v3478, %v1803
        %v3488 = vunpack.c.l.b16 %v3440
        %v3489 = vunpack.c.l.b16 %v3441
        %v3490 = vunpack.c.l.b16 %v3442
        %v3491 = vunpack.c.l.b16 %v3443
        %v3492 = vunpack.c.l.b16 %v3444
        %v3493 = vunpack.c.l.b16 %v3445
        %v3494 = vunpack.c.l.b16 %v3446
        %v3495 = vunpack.c.l.b16 %v3447
        %v3496 = vpack.c.b16 %v3489, %v3488
        %v3497 = vpack.c.b16 %v3491, %v3490
        %v3498 = vpack.c.b16 %v3493, %v3492
        %v3499 = vpack.c.b16 %v3495, %v3494
        %v3505 = vsel %vm2196, %v3459, 0
        %v3508 = vsel %vm2196, %v3467, 0
        %v3511 = vsel %vm2196, %v3475, 0
        %v3514 = vsel %vm2196, %v3479, 0
        %3516 = vmatpush.bf16.msra.mxu0 0
        %3517 = vmatpush.bf16.msra.mxu0 0
        %3518 = vmatpush.bf16.msra.mxu0 0
        %3519 = vmatpush.bf16.msra.mxu0 0
        %3520 = vmatpush.bf16.msra.mxu0 %v3499
        %3521 = vmatpush.bf16.msra.mxu0 %v3498
        %3522 = vmatpush.bf16.msra.mxu0 %v3497
        %3523 = vmatpush.bf16.msra.mxu0 %v3496
        %3524 = vmatmul.bf16.gmra.mxu0 %v3505
        %v3525 = vpop.f32.mrf.mxu0
        %v3526 = vadd.f32 0.0, %v3525
        %v3527 = vpop.f32.mrf.mxu0
        %v3528 = vadd.f32 0.0, %v3527
        %3529 = vmatmul.bf16.gmra.mxu0 %v3508
        %v3530 = vpop.f32.mrf.mxu0
        %v3531 = vadd.f32 0.0, %v3530
        %v3532 = vpop.f32.mrf.mxu0
        %v3533 = vadd.f32 0.0, %v3532
        %3534 = vmatmul.bf16.gmra.mxu0 %v3511
        %v3535 = vpop.f32.mrf.mxu0
        %v3536 = vadd.f32 0.0, %v3535
        %v3537 = vpop.f32.mrf.mxu0
        %v3538 = vadd.f32 0.0, %v3537
        %3539 = vmatmul.bf16.gmra.mxu0 %v3514
        %v3540 = vpop.f32.mrf.mxu0
        %v3541 = vadd.f32 0.0, %v3540
        %v3542 = vpop.f32.mrf.mxu0
        %v3543 = vadd.f32 0.0, %v3542
        %3544 = vdwg.mxu0
        %v3545 = vadd.f32 %v3420, %v3526
        %v3546 = vadd.f32 %v3421, %v3528
        %v3547 = vadd.f32 %v3422, %v3531
        %v3548 = vadd.f32 %v3423, %v3533
        %v3549 = vadd.f32 %v3424, %v3536
        %v3550 = vadd.f32 %v3425, %v3538
        %v3551 = vadd.f32 %v3426, %v3541
        %v3552 = vadd.f32 %v3427, %v3543
        %v3553 = vld [vmem:[%s15] sm:$0x1]
        %v3555 = vperm.slane %v3553, 0
        %v3557 = vadd.f32 %v3545, %v3555
        %v3558 = vadd.f32 %v3546, %v3555
        %v3559 = vadd.f32 %v3547, %v3555
        %v3560 = vadd.f32 %v3548, %v3555
        %v3561 = vadd.f32 %v3549, %v3555
        %v3562 = vadd.f32 %v3550, %v3555
        %v3563 = vadd.f32 %v3551, %v3555
        %v3564 = vadd.f32 %v3552, %v3555
        %v3565 = vpack.c.bf16 %v767, %v766
        %v3566 = vpack.c.bf16 %v769, %v768
        %v3567 = vpack.c.bf16 %v771, %v770
        %v3568 = vpack.c.bf16 %v773, %v772
        %v3569 = vld [vmem:[%s16] sm:$0xf]
        %v3570 = vld [vmem:[%s16 + $0x4] sm:$0xf]
        %v3571 = vld [vmem:[%s16 + $0x8] sm:$0xf]
        %v3572 = vld [vmem:[%s16 + $0xc] sm:$0xf]
        %v3573 = vld [vmem:[%s17] sm:$0x1]
        %v3575 = vperm.slane %v3573, 0
        %v3581 = vunpack.c.l.b16 %v3569
        %v3582 = vunpack.c.l.b16 %v3570
        %v3583 = vunpack.c.l.b16 %v3571
        %v3584 = vunpack.c.l.b16 %v3572
        %v3585 = vpack.c.b16 %v3582, %v3581
        %v3586 = vpack.c.b16 %v3584, %v3583
        %v3590 = vsel %vm800, %v3565, 0
        %v3593 = vsel %vm800, %v3566, 0
        %v3596 = vsel %vm800, %v3567, 0
        %v3599 = vsel %vm800, %v3568, 0
        %3601 = vmatpush.bf16.msra.mxu0 0
        %3602 = vmatpush.bf16.msra.mxu0 0
        %3603 = vmatpush.bf16.msra.mxu0 0
        %3604 = vmatpush.bf16.msra.mxu0 0
        %3605 = vmatpush.bf16.msra.mxu0 0
        %3606 = vmatpush.bf16.msra.mxu0 0
        %3607 = vmatpush.bf16.msra.mxu0 %v3586
        %3608 = vmatpush.bf16.msra.mxu0 %v3585
        %3609 = vmatmul.bf16.gmra.mxu0 %v3590
        %v3610 = vpop.f32.mrf.mxu0
        %v3611 = vadd.f32 %v3575, %v3610
        %v3612 = vpop.f32.mrf.mxu0
        %v3613 = vadd.f32 %v3575, %v3612
        %3614 = vmatmul.bf16.gmra.mxu0 %v3593
        %v3615 = vpop.f32.mrf.mxu0
        %v3616 = vadd.f32 %v3575, %v3615
        %v3617 = vpop.f32.mrf.mxu0
        %v3618 = vadd.f32 %v3575, %v3617
        %3619 = vmatmul.bf16.gmra.mxu0 %v3596
        %v3620 = vpop.f32.mrf.mxu0
        %v3621 = vadd.f32 %v3575, %v3620
        %v3622 = vpop.f32.mrf.mxu0
        %v3623 = vadd.f32 %v3575, %v3622
        %3624 = vmatmul.bf16.gmra.mxu0 %v3599
        %v3625 = vpop.f32.mrf.mxu0
        %v3626 = vadd.f32 %v3575, %v3625
        %v3627 = vpop.f32.mrf.mxu0
        %v3628 = vadd.f32 %v3575, %v3627
        %3629 = vdwg.mxu0
        %v3630 = vadd.f32 %v3611, %v3557
        %v3631 = vadd.f32 %v3613, %v3558
        %v3632 = vadd.f32 %v3616, %v3559
        %v3633 = vadd.f32 %v3618, %v3560
        %v3634 = vadd.f32 %v3621, %v3561
        %v3635 = vadd.f32 %v3623, %v3562
        %v3636 = vadd.f32 %v3626, %v3563
        %v3637 = vadd.f32 %v3628, %v3564
        %v3638 = vpack.c.bf16 %v3631, %v3630
        %v3639 = vpack.c.bf16 %v3633, %v3632
        %v3640 = vpack.c.bf16 %v3635, %v3634
        %v3641 = vpack.c.bf16 %v3637, %v3636
        %v3642 = vld [vmem:[%s18] sm:$0xff]
        %v3643 = vld [vmem:[%s18 + $0x8] sm:$0xff]
        %v3644 = vld [vmem:[%s18 + $0x10] sm:$0xff]
        %v3645 = vld [vmem:[%s18 + $0x18] sm:$0xff]
        %v3646 = vld [vmem:[%s18 + $0x20] sm:$0xff]
        %v3647 = vld [vmem:[%s18 + $0x28] sm:$0xff]
        %v3648 = vld [vmem:[%s18 + $0x30] sm:$0xff]
        %v3649 = vld [vmem:[%s18 + $0x38] sm:$0xff]
        %v3650 = vld [vmem:[%s19] sm:$0x3]
        %v3652 = vperm.slane %v3650, 0
        %v3653 = vperm.slane %v3650, 1
        %v3664 = vunpack.c.l.b16 %v3642
        %v3665 = vunpack.c.h.b16 %v3642
        %v3666 = vunpack.c.l.b16 %v3643
        %v3667 = vunpack.c.h.b16 %v3643
        %v3668 = vunpack.c.l.b16 %v3644
        %v3669 = vunpack.c.h.b16 %v3644
        %v3670 = vunpack.c.l.b16 %v3645
        %v3671 = vunpack.c.h.b16 %v3645
        %v3672 = vunpack.c.l.b16 %v3646
        %v3673 = vunpack.c.h.b16 %v3646
        %v3674 = vunpack.c.l.b16 %v3647
        %v3675 = vunpack.c.h.b16 %v3647
        %v3676 = vunpack.c.l.b16 %v3648
        %v3677 = vunpack.c.h.b16 %v3648
        %v3678 = vunpack.c.l.b16 %v3649
        %v3679 = vunpack.c.h.b16 %v3649
        %v3680 = vpack.c.b16 %v3666, %v3664
        %v3681 = vpack.c.b16 %v3667, %v3665
        %v3682 = vpack.c.b16 %v3670, %v3668
        %v3683 = vpack.c.b16 %v3671, %v3669
        %v3684 = vpack.c.b16 %v3674, %v3672
        %v3685 = vpack.c.b16 %v3675, %v3673
        %v3686 = vpack.c.b16 %v3678, %v3676
        %v3687 = vpack.c.b16 %v3679, %v3677
        %v3697 = vsel %vm2196, %v3638, 0
        %v3700 = vsel %vm2196, %v3639, 0
        %v3703 = vsel %vm2196, %v3640, 0
        %v3706 = vsel %vm2196, %v3641, 0
        %3708 = vmatpush.bf16.msra.mxu0 0
        %3709 = vmatpush.bf16.msra.mxu0 0
        %3710 = vmatpush.bf16.msra.mxu0 0
        %3711 = vmatpush.bf16.msra.mxu0 0
        %3712 = vmatpush.bf16.msra.mxu0 %v3686
        %3713 = vmatpush.bf16.msra.mxu0 %v3684
        %3714 = vmatpush.bf16.msra.mxu0 %v3682
        %3715 = vmatpush.bf16.msra.mxu0 %v3680
        %3716 = vmatmul.bf16.gmra.mxu0 %v3697
        %v3717 = vpop.f32.mrf.mxu0
        %v3718 = vadd.f32 %v3652, %v3717
        %v3719 = vpop.f32.mrf.mxu0
        %v3720 = vadd.f32 %v3652, %v3719
        %3721 = vmatmul.bf16.gmra.mxu0 %v3700
        %v3722 = vpop.f32.mrf.mxu0
        %v3723 = vadd.f32 %v3652, %v3722
        %v3724 = vpop.f32.mrf.mxu0
        %v3725 = vadd.f32 %v3652, %v3724
        %3726 = vmatmul.bf16.gmra.mxu0 %v3703
        %v3727 = vpop.f32.mrf.mxu0
        %v3728 = vadd.f32 %v3652, %v3727
        %v3729 = vpop.f32.mrf.mxu0
        %v3730 = vadd.f32 %v3652, %v3729
        %3731 = vmatmul.bf16.gmra.mxu0 %v3706
        %v3732 = vpop.f32.mrf.mxu0
        %v3733 = vadd.f32 %v3652, %v3732
        %v3734 = vpop.f32.mrf.mxu0
        %v3735 = vadd.f32 %v3652, %v3734
        %3736 = vdwg.mxu0
        %3737 = vmatpush.bf16.msra.mxu0 0
        %3738 = vmatpush.bf16.msra.mxu0 0
        %3739 = vmatpush.bf16.msra.mxu0 0
        %3740 = vmatpush.bf16.msra.mxu0 0
        %3741 = vmatpush.bf16.msra.mxu0 %v3687
        %3742 = vmatpush.bf16.msra.mxu0 %v3685
        %3743 = vmatpush.bf16.msra.mxu0 %v3683
        %3744 = vmatpush.bf16.msra.mxu0 %v3681
        %3745 = vmatmul.bf16.gmra.mxu0 %v3697
        %v3746 = vpop.f32.mrf.mxu0
        %v3747 = vadd.f32 %v3653, %v3746
        %v3748 = vpop.f32.mrf.mxu0
        %v3749 = vadd.f32 %v3653, %v3748
        %3750 = vmatmul.bf16.gmra.mxu0 %v3700
        %v3751 = vpop.f32.mrf.mxu0
        %v3752 = vadd.f32 %v3653, %v3751
        %v3753 = vpop.f32.mrf.mxu0
        %v3754 = vadd.f32 %v3653, %v3753
        %3755 = vmatmul.bf16.gmra.mxu0 %v3703
        %v3756 = vpop.f32.mrf.mxu0
        %v3757 = vadd.f32 %v3653, %v3756
        %v3758 = vpop.f32.mrf.mxu0
        %v3759 = vadd.f32 %v3653, %v3758
        %3760 = vmatmul.bf16.gmra.mxu0 %v3706
        %v3761 = vpop.f32.mrf.mxu0
        %v3762 = vadd.f32 %v3653, %v3761
        %v3763 = vpop.f32.mrf.mxu0
        %v3764 = vadd.f32 %v3653, %v3763
        %3765 = vdwg.mxu0
        %v3766 = vpack.c.bf16 %v3720, %v3718
        %v3767 = vpack.c.bf16 %v3725, %v3723
        %v3768 = vpack.c.bf16 %v3730, %v3728
        %v3769 = vpack.c.bf16 %v3735, %v3733
        %v3770 = vpack.c.bf16 %v3749, %v3747
        %v3771 = vpack.c.bf16 %v3754, %v3752
        %v3772 = vpack.c.bf16 %v3759, %v3757
        %v3773 = vpack.c.bf16 %v3764, %v3762
        %3778 = vrot.lane.b32.xlu0 %v3766, 64
        %v3779 = vpop.permute.xlu0 %3778
        %3780 = vrot.lane.b32.xlu0 %v3767, 64
        %v3781 = vpop.permute.xlu0 %3780
        %3782 = vrot.lane.b32.xlu0 %v3768, 64
        %v3783 = vpop.permute.xlu0 %3782
        %3784 = vrot.lane.b32.xlu0 %v3769, 64
        %v3785 = vpop.permute.xlu0 %3784
        %v3787 = vsel %vm2196, %v3766, 0
        %v3790 = vsel %vm2196, %v3767, 0
        %v3793 = vsel %vm2196, %v3768, 0
        %v3796 = vsel %vm2196, %v3769, 0
        %v3799 = vsel %vm2196, %v3779, 0
        %v3802 = vsel %vm2196, %v3781, 0
        %v3805 = vsel %vm2196, %v3783, 0
        %v3808 = vsel %vm2196, %v3785, 0
        %3810 = vmatpush.bf16.xpose.msra.mxu0 0
        %3811 = vmatpush.bf16.xpose.msra.mxu0 0
        %3812 = vmatpush.bf16.xpose.msra.mxu0 0
        %3813 = vmatpush.bf16.xpose.msra.mxu0 0
        %3814 = vmatpush.bf16.xpose.msra.mxu0 %v3808
        %3815 = vmatpush.bf16.xpose.msra.mxu0 %v3805
        %3816 = vmatpush.bf16.xpose.msra.mxu0 %v3802
        %3817 = vmatpush.bf16.xpose.msra.mxu0 %v3799
        %3818 = vmatmul.bf16.gmra.mxu0 %v3787
        %v3819 = vpop.f32.mrf.mxu0
        %v3820 = vadd.f32 0.0, %v3819
        %v3821 = vpop.f32.mrf.mxu0
        %v3822 = vadd.f32 0.0, %v3821
        %3823 = vmatmul.bf16.gmra.mxu0 %v3790
        %v3824 = vpop.f32.mrf.mxu0
        %v3825 = vadd.f32 0.0, %v3824
        %v3826 = vpop.f32.mrf.mxu0
        %v3827 = vadd.f32 0.0, %v3826
        %3828 = vmatmul.bf16.gmra.mxu0 %v3793
        %v3829 = vpop.f32.mrf.mxu0
        %v3830 = vadd.f32 0.0, %v3829
        %v3831 = vpop.f32.mrf.mxu0
        %v3832 = vadd.f32 0.0, %v3831
        %3833 = vmatmul.bf16.gmra.mxu0 %v3796
        %v3834 = vpop.f32.mrf.mxu0
        %v3835 = vadd.f32 0.0, %v3834
        %v3836 = vpop.f32.mrf.mxu0
        %v3837 = vadd.f32 0.0, %v3836
        %3838 = vdwg.mxu0
        %v3839 = vmul.f32 %v3820, 0.125
        %v3840 = vmul.f32 %v3822, 0.125
        %v3841 = vmul.f32 %v3825, 0.125
        %v3842 = vmul.f32 %v3827, 0.125
        %v3843 = vmul.f32 %v3830, 0.125
        %v3844 = vmul.f32 %v3832, 0.125
        %v3845 = vmul.f32 %v3835, 0.125
        %v3846 = vmul.f32 %v3837, 0.125
        %v3847 = vsel %vm2196, %v3839, -inf
        %3848 = vmax.xlane.f32.xlu0 %v3847
        %v3849 = vpop.xlane.xlu0 %3848
        %v3850 = vsel %vm2196, %v3840, -inf
        %3851 = vmax.xlane.f32.xlu0 %v3850
        %v3852 = vpop.xlane.xlu0 %3851
        %v3853 = vsel %vm2196, %v3841, -inf
        %3854 = vmax.xlane.f32.xlu0 %v3853
        %v3855 = vpop.xlane.xlu0 %3854
        %v3856 = vsel %vm2196, %v3842, -inf
        %3857 = vmax.xlane.f32.xlu0 %v3856
        %v3858 = vpop.xlane.xlu0 %3857
        %v3859 = vsel %vm2196, %v3843, -inf
        %3860 = vmax.xlane.f32.xlu0 %v3859
        %v3861 = vpop.xlane.xlu0 %3860
        %v3862 = vsel %vm2196, %v3844, -inf
        %3863 = vmax.xlane.f32.xlu0 %v3862
        %v3864 = vpop.xlane.xlu0 %3863
        %v3865 = vsel %vm2196, %v3845, -inf
        %3866 = vmax.xlane.f32.xlu0 %v3865
        %v3867 = vpop.xlane.xlu0 %3866
        %v3868 = vsel %vm2196, %v3846, -inf
        %3869 = vmax.xlane.f32.xlu0 %v3868
        %v3870 = vpop.xlane.xlu0 %3869
        %v3871 = vsub.f32 %v3839, %v3849
        %v3872 = vsub.f32 %v3840, %v3852
        %v3873 = vsub.f32 %v3841, %v3855
        %v3874 = vsub.f32 %v3842, %v3858
        %v3875 = vsub.f32 %v3843, %v3861
        %v3876 = vsub.f32 %v3844, %v3864
        %v3877 = vsub.f32 %v3845, %v3867
        %v3878 = vsub.f32 %v3846, %v3870
        %v3879 = vmul.f32 %v3871, 1.442695
        %v3880 = vpow.pop %v3879
        %v3881 = vmul.f32 %v3872, 1.442695
        %v3882 = vpow.pop %v3881
        %v3883 = vmul.f32 %v3873, 1.442695
        %v3884 = vpow.pop %v3883
        %v3885 = vmul.f32 %v3874, 1.442695
        %v3886 = vpow.pop %v3885
        %v3887 = vmul.f32 %v3875, 1.442695
        %v3888 = vpow.pop %v3887
        %v3889 = vmul.f32 %v3876, 1.442695
        %v3890 = vpow.pop %v3889
        %v3891 = vmul.f32 %v3877, 1.442695
        %v3892 = vpow.pop %v3891
        %v3893 = vmul.f32 %v3878, 1.442695
        %v3894 = vpow.pop %v3893
        %v3895 = vsel %vm2196, %v3880, 0.0
        %3896 = vadd.xlane.f32.xlu0 %v3895
        %v3897 = vpop.xlane.xlu0 %3896
        %v3898 = vsel %vm2196, %v3882, 0.0
        %3899 = vadd.xlane.f32.xlu0 %v3898
        %v3900 = vpop.xlane.xlu0 %3899
        %v3901 = vsel %vm2196, %v3884, 0.0
        %3902 = vadd.xlane.f32.xlu0 %v3901
        %v3903 = vpop.xlane.xlu0 %3902
        %v3904 = vsel %vm2196, %v3886, 0.0
        %3905 = vadd.xlane.f32.xlu0 %v3904
        %v3906 = vpop.xlane.xlu0 %3905
        %v3907 = vsel %vm2196, %v3888, 0.0
        %3908 = vadd.xlane.f32.xlu0 %v3907
        %v3909 = vpop.xlane.xlu0 %3908
        %v3910 = vsel %vm2196, %v3890, 0.0
        %3911 = vadd.xlane.f32.xlu0 %v3910
        %v3912 = vpop.xlane.xlu0 %3911
        %v3913 = vsel %vm2196, %v3892, 0.0
        %3914 = vadd.xlane.f32.xlu0 %v3913
        %v3915 = vpop.xlane.xlu0 %3914
        %v3916 = vsel %vm2196, %v3894, 0.0
        %3917 = vadd.xlane.f32.xlu0 %v3916
        %v3918 = vpop.xlane.xlu0 %3917
        %v3919 = vrcp.pop %v3897
        %v3920 = vrcp.pop %v3900
        %v3921 = vrcp.pop %v3903
        %v3922 = vrcp.pop %v3906
        %v3923 = vrcp.pop %v3909
        %v3924 = vrcp.pop %v3912
        %v3925 = vrcp.pop %v3915
        %v3926 = vrcp.pop %v3918
        %v3927 = vmul.f32 %v3880, %v3919
        %v3928 = vmul.f32 %v3882, %v3920
        %v3929 = vmul.f32 %v3884, %v3921
        %v3930 = vmul.f32 %v3886, %v3922
        %v3931 = vmul.f32 %v3888, %v3923
        %v3932 = vmul.f32 %v3890, %v3924
        %v3933 = vmul.f32 %v3892, %v3925
        %v3934 = vmul.f32 %v3894, %v3926
        %v3935 = vpack.c.bf16 %v3928, %v3927
        %v3936 = vpack.c.bf16 %v3930, %v3929
        %v3937 = vpack.c.bf16 %v3932, %v3931
        %v3938 = vpack.c.bf16 %v3934, %v3933
        %v3940 = vsel %vm2196, %v3935, 0
        %v3943 = vsel %vm2196, %v3936, 0
        %v3946 = vsel %vm2196, %v3937, 0
        %v3949 = vsel %vm2196, %v3938, 0
        %3951 = vmatpush.bf16.msra.mxu0 0
        %3952 = vmatpush.bf16.msra.mxu0 0
        %3953 = vmatpush.bf16.msra.mxu0 0
        %3954 = vmatpush.bf16.msra.mxu0 0
        %3955 = vmatpush.bf16.msra.mxu0 %v3773
        %3956 = vmatpush.bf16.msra.mxu0 %v3772
        %3957 = vmatpush.bf16.msra.mxu0 %v3771
        %3958 = vmatpush.bf16.msra.mxu0 %v3770
        %3959 = vmatmul.bf16.gmra.mxu0 %v3940
        %v3960 = vpop.f32.mrf.mxu0
        %v3961 = vadd.f32 0.0, %v3960
        %v3962 = vpop.f32.mrf.mxu0
        %v3963 = vadd.f32 0.0, %v3962
        %3964 = vmatmul.bf16.gmra.mxu0 %v3943
        %v3965 = vpop.f32.mrf.mxu0
        %v3966 = vadd.f32 0.0, %v3965
        %v3967 = vpop.f32.mrf.mxu0
        %v3968 = vadd.f32 0.0, %v3967
        %3969 = vmatmul.bf16.gmra.mxu0 %v3946
        %v3970 = vpop.f32.mrf.mxu0
        %v3971 = vadd.f32 0.0, %v3970
        %v3972 = vpop.f32.mrf.mxu0
        %v3973 = vadd.f32 0.0, %v3972
        %3974 = vmatmul.bf16.gmra.mxu0 %v3949
        %v3975 = vpop.f32.mrf.mxu0
        %v3976 = vadd.f32 0.0, %v3975
        %v3977 = vpop.f32.mrf.mxu0
        %v3978 = vadd.f32 0.0, %v3977
        %3979 = vdwg.mxu0
        %v3980 = vpack.c.bf16 %v3963, %v3961
        %v3981 = vpack.c.bf16 %v3968, %v3966
        %v3982 = vpack.c.bf16 %v3973, %v3971
        %v3983 = vpack.c.bf16 %v3978, %v3976
        %v3984 = vld [vmem:[#allocation8] sm:$0xf]
        %v3985 = vld [vmem:[#allocation8 + $0x4] sm:$0xf]
        %v3986 = vld [vmem:[#allocation8 + $0x8] sm:$0xf]
        %v3987 = vld [vmem:[#allocation8 + $0xc] sm:$0xf]
        %v3988 = vld [vmem:[#allocation8 + $0x10] sm:$0xf]
        %v3989 = vld [vmem:[#allocation8 + $0x14] sm:$0xf]
        %v3990 = vld [vmem:[#allocation8 + $0x18] sm:$0xf]
        %v3991 = vld [vmem:[#allocation8 + $0x1c] sm:$0xf]
        %v3992 = vld [vmem:[%s21] sm:$0x1]
        %v3994 = vperm.slane %v3992, 0
        %v4004 = vunpack.c.l.b16 %v3984
        %v4005 = vunpack.c.l.b16 %v3985
        %v4006 = vunpack.c.l.b16 %v3986
        %v4007 = vunpack.c.l.b16 %v3987
        %v4008 = vunpack.c.l.b16 %v3988
        %v4009 = vunpack.c.l.b16 %v3989
        %v4010 = vunpack.c.l.b16 %v3990
        %v4011 = vunpack.c.l.b16 %v3991
        %v4012 = vpack.c.b16 %v4005, %v4004
        %v4013 = vpack.c.b16 %v4007, %v4006
        %v4014 = vpack.c.b16 %v4009, %v4008
        %v4015 = vpack.c.b16 %v4011, %v4010
        %v4021 = vsel %vm2196, %v3980, 0
        %v4024 = vsel %vm2196, %v3981, 0
        %v4027 = vsel %vm2196, %v3982, 0
        %v4030 = vsel %vm2196, %v3983, 0
        %4032 = vmatpush.bf16.msra.mxu0 0
        %4033 = vmatpush.bf16.msra.mxu0 0
        %4034 = vmatpush.bf16.msra.mxu0 0
        %4035 = vmatpush.bf16.msra.mxu0 0
        %4036 = vmatpush.bf16.msra.mxu0 %v4015
        %4037 = vmatpush.bf16.msra.mxu0 %v4014
        %4038 = vmatpush.bf16.msra.mxu0 %v4013
        %4039 = vmatpush.bf16.msra.mxu0 %v4012
        %4040 = vmatmul.bf16.gmra.mxu0 %v4021
        %v4041 = vpop.f32.mrf.mxu0
        %v4042 = vadd.f32 %v3994, %v4041
        %v4043 = vpop.f32.mrf.mxu0
        %v4044 = vadd.f32 %v3994, %v4043
        %4045 = vmatmul.bf16.gmra.mxu0 %v4024
        %v4046 = vpop.f32.mrf.mxu0
        %v4047 = vadd.f32 %v3994, %v4046
        %v4048 = vpop.f32.mrf.mxu0
        %v4049 = vadd.f32 %v3994, %v4048
        %4050 = vmatmul.bf16.gmra.mxu0 %v4027
        %v4051 = vpop.f32.mrf.mxu0
        %v4052 = vadd.f32 %v3994, %v4051
        %v4053 = vpop.f32.mrf.mxu0
        %v4054 = vadd.f32 %v3994, %v4053
        %4055 = vmatmul.bf16.gmra.mxu0 %v4030
        %v4056 = vpop.f32.mrf.mxu0
        %v4057 = vadd.f32 %v3994, %v4056
        %v4058 = vpop.f32.mrf.mxu0
        %v4059 = vadd.f32 %v3994, %v4058
        %4060 = vdwg.mxu0
        %v4061 = vadd.f32 %v4042, %v3630
        %v4062 = vadd.f32 %v4044, %v3631
        %v4063 = vadd.f32 %v4047, %v3632
        %v4064 = vadd.f32 %v4049, %v3633
        %v4065 = vadd.f32 %v4052, %v3634
        %v4066 = vadd.f32 %v4054, %v3635
        %v4067 = vadd.f32 %v4057, %v3636
        %v4068 = vadd.f32 %v4059, %v3637
        %4069 = vst.msk [vmem:[%s759] sm:$0xff] %vm2196, %v4061
        %4070 = vst.msk [vmem:[%s759 + $0x8] sm:$0xff] %vm2196, %v4062
        %4071 = vst.msk [vmem:[%s759 + $0x10] sm:$0xff] %vm2196, %v4063
        %4072 = vst.msk [vmem:[%s759 + $0x18] sm:$0xff] %vm2196, %v4064
        %4073 = vst.msk [vmem:[%s759 + $0x20] sm:$0xff] %vm2196, %v4065
        %4074 = vst.msk [vmem:[%s759 + $0x28] sm:$0xff] %vm2196, %v4066
        %4075 = vst.msk [vmem:[%s759 + $0x30] sm:$0xff] %vm2196, %v4067
        %4076 = vst.msk [vmem:[%s759 + $0x38] sm:$0xff] %vm2196, %v4068
        %s4077 = sand.u32 %s521, 1
        %s4078 = scalar_lea.sflag [#allocation4], %s4077
        %s4079 = sand.u32 %s521, 1
        %s4080 = smul.addr %s4079, 64
        %s4081 = scalar_lea.vmem [#allocation10], %s4080
        // Predicated region
        $region125: #{tpu_custom_call.1} parent=107 // pred_check
          %p4082 = pneg %p531
        $region126: #{tpu_custom_call.1} parent=107 // pred_check_branch
          %4084 = sbr.rel (%p4082) target = $region128
        $region127: #{tpu_custom_call.1} parent=107 // pred_region
          %4086 = vsyncadd %s4078, 0
          %s4087 = smul.addr %s41, 8
          %s4088 = smul.addr %s4087, 8
          %s4089 = scalar_lea.hbm %s22, %s4088
          %s4090 = sshll.u32 %s4081, 4
          %s4091 = int_to_ptr.vmem [resolvable:$true] %s4090
          %s4092 = sshll.u32 %s4089, 4
          %s4093 = int_to_ptr.hbm [resolvable:$true] %s4092
          %4098 = dma.vmem_to_hbm [thread:$0]  %s4091, 1024, %s4093, %s4078, 128, 128, 8
        $region128: #{tpu_custom_call.1} parent=107 // pred_fallthru
          _
      $region108: #{tpu_custom_call.1} parent=5 // pred_fallthru
        _
      %p4099 = scmp.le.s32.totalorder 2, %s36
      // Predicated region
      $region129: #{tpu_custom_call.1} parent=5 // pred_check
        %p4100 = pneg %p4099
      $region130: #{tpu_custom_call.1} parent=5 // pred_check_branch
        %4102 = sbr.rel (%p4100) target = $region132
      $region131: #{tpu_custom_call.1} parent=5 // pred_region
        %s4103 = ssub.s32 %s36, 2
        // Predicated region
        $region133: #{tpu_custom_call.1} parent=131 // pred_check
          %p4104 = pneg %p537
        $region134: #{tpu_custom_call.1} parent=131 // pred_check_branch
          %4106 = sbr.rel (%p4104) target = $region136
        $region135: #{tpu_custom_call.1} parent=131 // pred_region
          %s4107 = sand.u32 %s522, 1
          %s4108 = scalar_lea.sflag [#allocation4], %s4107
          %s4109 = sand.u32 %s522, 1
          %s4110 = smul.addr %s4109, 64
          %s4111 = scalar_lea.vmem [#allocation10], %s4110
          %4113 = dma.done %s4108, 1024
        $region136: #{tpu_custom_call.1} parent=131 // pred_fallthru
          _
      $region132: #{tpu_custom_call.1} parent=5 // pred_fallthru
        _
    $region6: #{tpu_custom_call.1} parent=1 // loop_footer
      %s40 = sadd.s32 1, %s36
    $region7: #{tpu_custom_call.1} parent=1 // loop_footer_branch
      %35 = sbr.rel target = $region3
    $region8: #{tpu_custom_call.1} parent=1 // loop_exit
      _
    %4114 = vsyncpa [#allocation3], 1
    %s4115 = scalar_lea.sflag [#allocation3], 1
    %4116 = vsyncpa %s4115, 1
    %4117 = vsyncpa [#allocation6], 1
    %4118 = vsyncpa [#allocation9], 1
    %4119 = vsyncpa [#allocation4], 1
    %s4120 = scalar_lea.sflag [#allocation4], 1
    %4121 = vsyncpa %s4120, 1

</llo_original>
